<compile_context>
chip_gen: v7x
topology: tpu7x:2x2x1
jax: 0.10.0
libtpu: 0.0.40
codegen_flags: <defaults>
</compile_context>

<pallas_src>
import functools

import jax
import jax.numpy as jnp
from jax.experimental import pallas as pl
from jax.experimental.pallas import tpu as pltpu


def _round_up(x, m):
    return ((x + m - 1) // m) * m


# ---------------------------------------------------------------------------
# Kernel 1: conv1 (3x3, pad 1) + ReLU + conv2 (3x3, pad 1) + ReLU
#
# Per grid step, B_blk images.  The padded activation of each conv lives in a
# bf16 VMEM scratch of shape (B_blk, H+2, (W+2)*C); lanes [0 : W*C] hold the
# interior (w = 0..W-1), the last 2*C lanes are the permanent zero pad columns
# and rows hp=0 / hp=H+1 are the zero pad rows.  A 3x3 conv is then
#   out[b, h, :] = sum_{ky=0..2} A[b, h+ky, :] @ band[ky]
# with band[ky] a block-banded ((W+2)*C, W*Cout) matrix built at prep time.
# The output is produced directly in unpadded (h, w, c) order, lane-dense.
# ---------------------------------------------------------------------------
def _conv_fused_kernel(x_ref, w1_ref, b1_ref, w2_ref, b2_ref, o_ref,
                       a0_ref, a1_ref, *, H):
    B = x_ref.shape[0]
    Kin = x_ref.shape[2]          # W * Cin
    K1 = b1_ref.shape[1]          # W * C1
    K2 = b2_ref.shape[1]          # W * C2

    # ---- stage zero-padded conv1 input (interior at lane offset 0) ---------
    a0_ref[...] = jnp.zeros_like(a0_ref)
    a0_ref[:, 1:H + 1, :Kin] = x_ref[...]

    # ---- conv1: one banded matmul per kernel row ky (K = (W+2)*Cin) --------
    acc1 = None
    for ky in range(3):
        lhs = a0_ref[:, ky:ky + H, :].reshape(B * H, a0_ref.shape[2])
        part = jnp.dot(lhs, w1_ref[ky], preferred_element_type=jnp.float32)
        acc1 = part if acc1 is None else acc1 + part
    y1 = jnp.maximum(acc1 + b1_ref[...], 0.0).astype(jnp.bfloat16)

    # ---- stage zero-padded conv2 input --------------------------------------
    a1_ref[...] = jnp.zeros_like(a1_ref)
    a1_ref[:, 1:H + 1, :K1] = y1.reshape(B, H, K1)

    # ---- conv2: one banded matmul per kernel row ky (K = (W+2)*C1) ----------
    acc2 = None
    for ky in range(3):
        lhs = a1_ref[:, ky:ky + H, :].reshape(B * H, a1_ref.shape[2])
        part = jnp.dot(lhs, w2_ref[ky], preferred_element_type=jnp.float32)
        acc2 = part if acc2 is None else acc2 + part
    y2 = jnp.maximum(acc2 + b2_ref[...], 0.0)

    # Lane-dense (W*C2 = 512) store, already unpadded (h, w, c) order.
    o_ref[...] = y2.reshape(B, H, K2).astype(o_ref.dtype)


def conv_forward(x, w1, b1, w2, b2, *, H, B_blk):
    """x: (N_pad, H, W*Cin) bf16 -> (N_pad, H, W*C2) bf16."""
    N_pad, _, Kin = x.shape
    K1 = w1.shape[2]
    K2 = w2.shape[2]
    grid = N_pad // B_blk
    kernel = functools.partial(_conv_fused_kernel, H=H)
    return pl.pallas_call(
        kernel,
        out_shape=jax.ShapeDtypeStruct((N_pad, H, K2), jnp.bfloat16),
        grid=(grid,),
        in_specs=[
            pl.BlockSpec((B_blk, H, Kin), lambda b: (b, 0, 0)),   # images
            pl.BlockSpec(w1.shape, lambda b: (0, 0, 0)),          # conv1 bands
            pl.BlockSpec((1, K1), lambda b: (0, 0)),              # conv1 bias
            pl.BlockSpec(w2.shape, lambda b: (0, 0, 0)),          # conv2 bands
            pl.BlockSpec((1, K2), lambda b: (0, 0)),              # conv2 bias
        ],
        out_specs=pl.BlockSpec((B_blk, H, K2), lambda b: (b, 0, 0)),
        scratch_shapes=[
            pltpu.VMEM((B_blk, H + 2, w1.shape[1]), jnp.bfloat16),  # conv1 in
            pltpu.VMEM((B_blk, H + 2, w2.shape[1]), jnp.bfloat16),  # conv2 in
        ],
        compiler_params=pltpu.CompilerParams(
            dimension_semantics=("parallel",)),
    )(x, w1, b1, w2, b2)


# ---------------------------------------------------------------------------
# Kernel 2: fc1 + ReLU + fc2 (lane-padded to 128) + softmax, fused epilogue.
# ---------------------------------------------------------------------------
def _fc_fused_kernel(x_ref, w1_ref, b1_ref, w2_ref, b2_ref, o_ref):
    h = jnp.dot(x_ref[...], w1_ref[...], preferred_element_type=jnp.float32)
    h = jnp.maximum(h + b1_ref[...], 0.0)
    y = jnp.dot(h.astype(jnp.bfloat16), w2_ref[...],
                preferred_element_type=jnp.float32)
    y = y + b2_ref[...]                       # padded cols carry -1e30 bias
    m = jnp.max(y, axis=-1, keepdims=True)
    e = jnp.exp(y - m)
    inv = pl.reciprocal(jnp.sum(e, axis=-1, keepdims=True), approx=False)
    o_ref[...] = (e * inv).astype(o_ref.dtype)   # full lane-dense (BM, 128)


def fc_forward(flat, w1, b1, w2, b2):
    n, k1 = flat.shape
    h1 = w1.shape[1]
    ap = w2.shape[1]
    if n <= 8:
        bm = n                                  # single tiny block
    elif n <= 256:
        bm = _round_up(pl.cdiv(n, 2), 8)        # 2 blocks -> both v7x cores
    else:
        bm = 128
    grid_m = pl.cdiv(n, bm)
    return pl.pallas_call(
        _fc_fused_kernel,
        out_shape=jax.ShapeDtypeStruct((n, ap), jnp.float32),
        grid=(grid_m,),
        in_specs=[
            pl.BlockSpec((bm, k1), lambda i: (i, 0)),
            pl.BlockSpec((k1, h1), lambda i: (0, 0)),
            pl.BlockSpec((1, h1), lambda i: (0, 0)),
            pl.BlockSpec((h1, ap), lambda i: (0, 0)),
            pl.BlockSpec((1, ap), lambda i: (0, 0)),
        ],
        out_specs=pl.BlockSpec((bm, ap), lambda i: (i, 0)),
        compiler_params=pltpu.CompilerParams(
            dimension_semantics=("parallel",)),
    )(flat, w1, b1, w2, b2)


# ---------------------------------------------------------------------------
# One-time parameter preprocessing (all relayouts off the hot path).
# ---------------------------------------------------------------------------
def prepare_params(params, input_shape, num_actions, lane_pad=128):
    H, W, _ = input_shape
    C2 = params["conv2_w"].shape[0]

    def conv_band(wt_oihw):
        """(O, I, 3, 3) -> (3, (W+2)*I, W*O) block-banded bf16 matrices (one
        per kernel row ky).  Rows use the kernel's permuted pad layout:
        interior w positions first, the two zero-pad columns last."""
        cout, cin, kh, kw = wt_oihw.shape
        wp = W + 2
        wt = jnp.transpose(wt_oihw.astype(jnp.float32), (2, 3, 1, 0))  # ky,kx,ci,co
        kx = jnp.arange(wp)[:, None] - jnp.arange(W)[None, :]          # (wp, W)
        valid = ((kx >= 0) & (kx < kw)).astype(jnp.float32)
        band = wt[:, jnp.clip(kx, 0, kw - 1), :, :]                    # ky,wp,W,ci,co
        band = band * valid[None, :, :, None, None]
        band = jnp.transpose(band, (0, 1, 3, 2, 4))                    # ky,wp,ci,W,co
        perm = jnp.array(list(range(1, W + 1)) + [0, W + 1])           # pads last
        band = band[:, perm]
        return band.reshape(kh, wp * cin, W * cout).astype(jnp.bfloat16)

    def conv_bias(b):          # per-cout bias tiled across w -> (1, W*O)
        return jnp.tile(b.astype(jnp.float32), W).reshape(1, -1)

    # fc1: (256, 64*H*W) acting on PyTorch's (c, h, w) flatten order ->
    # (H*W*64, 256) with rows permuted to the kernel's (h, w, c) order.
    w1 = params["fc1_w"].T.reshape(C2, H, W, -1)
    w1 = jnp.transpose(w1, (1, 2, 0, 3)).reshape(H * W * C2, -1).astype(jnp.bfloat16)

    # fc2: transpose + pad columns to lane-dense 128; padded columns get
    # -1e30 bias so the softmax normalization is unaffected.
    a = num_actions
    ap = _round_up(a, lane_pad)
    w2 = jnp.pad(params["fc2_w"].T, ((0, 0), (0, ap - a))).astype(jnp.bfloat16)
    b2 = jnp.concatenate(
        [params["fc2_b"].astype(jnp.float32),
         jnp.full((ap - a,), -1e30, jnp.float32)]).reshape(1, ap)

    return {
        "conv1_w": conv_band(params["conv1_w"]),
        "conv1_b": conv_bias(params["conv1_b"]),
        "conv2_w": conv_band(params["conv2_w"]),
        "conv2_b": conv_bias(params["conv2_b"]),
        "fc1_w": w1,
        "fc1_b": params["fc1_b"].reshape(1, -1).astype(jnp.float32),
        "fc2_w": w2,
        "fc2_b": b2,
    }


# ---------------------------------------------------------------------------
# Batch blocking: <=32 images per conv grid step, >=2 steps when possible so
# both v7x TensorCores get work (no-op on single-TC v5e/v6e).
# ---------------------------------------------------------------------------
def _conv_batch_blocking(n):
    if n <= 1:
        return max(n, 1), max(n, 1)
    n_blocks = max(2, pl.cdiv(n, 32))
    b_blk = pl.cdiv(n, n_blocks)
    return n_blocks * b_blk, b_blk


# ---------------------------------------------------------------------------
# Actor forward (hot path)
# ---------------------------------------------------------------------------
def actor_forward(prep, state_nchw, *, num_actions):
    n, cin, hh, ww = state_nchw.shape
    n_pad, b_blk = _conv_batch_blocking(n)

    # Single materializing relayout (NCHW -> NHWC fused with the bf16 cast);
    # the reshape to (N, H, W*Cin) is free and zero padding happens in-kernel.
    # TODO(synk): fold this transpose into kernel 1 to drop the last host op.
    x = jnp.transpose(state_nchw, (0, 2, 3, 1)).astype(jnp.bfloat16)
    x = x.reshape(n, hh, ww * cin)
    if n_pad > n:
        x = jnp.pad(x, ((0, n_pad - n), (0, 0), (0, 0)))

    y2 = conv_forward(x, prep["conv1_w"], prep["conv1_b"],
                      prep["conv2_w"], prep["conv2_b"], H=hh, B_blk=b_blk)

    flat = y2.reshape(n_pad, -1)              # contiguous (h, w, c) -> free
    probs_padded = fc_forward(flat, prep["fc1_w"], prep["fc1_b"],
                              prep["fc2_w"], prep["fc2_b"])
    return probs_padded[:n, :num_actions]


# ---------------------------------------------------------------------------
# Pure-JAX reference (mirrors the PyTorch module exactly, f32)
# ---------------------------------------------------------------------------
def actor_forward_ref(params, state_nchw):
    x = jnp.transpose(state_nchw, (0, 2, 3, 1)).astype(jnp.float32)

    def conv(x, w, b):
        y = jax.lax.conv_general_dilated(
            x, jnp.transpose(w, (2, 3, 1, 0)), (1, 1), "SAME",
            dimension_numbers=("NHWC", "HWIO", "NHWC"))
        return jax.nn.relu(y + b)

    y1 = conv(x, params["conv1_w"], params["conv1_b"])
    y2 = conv(y1, params["conv2_w"], params["conv2_b"])
    flat = jnp.transpose(y2, (0, 3, 1, 2)).reshape(x.shape[0], -1)
    h = jax.nn.relu(flat @ params["fc1_w"].T + params["fc1_b"])
    return jax.nn.softmax(h @ params["fc2_w"].T + params["fc2_b"], axis=-1)


# ---------------------------------------------------------------------------
# Deterministic parameter init (synthetic; shapes from Actor.__init__)
# ---------------------------------------------------------------------------
def init_params(key, input_shape, num_actions):
    H, W, Cin = input_shape
    ks = jax.random.split(key, 8)
    scale = 0.05
    return {
        "conv1_w": scale * jax.random.normal(ks[0], (32, Cin, 3, 3), jnp.float32),
        "conv1_b": scale * jax.random.normal(ks[1], (32,), jnp.float32),
        "conv2_w": scale * jax.random.normal(ks[2], (64, 32, 3, 3), jnp.float32),
        "conv2_b": scale * jax.random.normal(ks[3], (64,), jnp.float32),
        "fc1_w": scale * jax.random.normal(ks[4], (256, 64 * H * W), jnp.float32),
        "fc1_b": scale * jax.random.normal(ks[5], (256,), jnp.float32),
        "fc2_w": scale * jax.random.normal(ks[6], (num_actions, 256), jnp.float32),
        "fc2_b": scale * jax.random.normal(ks[7], (num_actions,), jnp.float32),
    }


if __name__ == "__main__":
    # Small shapes consistent with the module: input_shape = (H, W, C) = (8, 8, 4)
    input_shape = (8, 8, 4)
    num_actions = 6
    batch = 2

    key = jax.random.PRNGKey(0)
    pkey, xkey = jax.random.split(key)
    params = init_params(pkey, input_shape, num_actions)
    prep = prepare_params(params, input_shape, num_actions)   # one-time prep

    # PyTorch conv input is NCHW: (N, C, H, W)
    state = jax.random.normal(
        xkey, (batch, input_shape[2], input_shape[0], input_shape[1]),
        jnp.float32)

    fwd = jax.jit(functools.partial(actor_forward, num_actions=num_actions))
    probs = jax.block_until_ready(fwd(prep, state))

    assert probs.shape == (batch, num_actions), probs.shape
    row_sums = jnp.sum(probs, axis=-1)
    assert jnp.allclose(row_sums, jnp.ones_like(row_sums), atol=1e-3), row_sums
    assert bool(jnp.all(probs >= 0.0))

    ref = actor_forward_ref(params, state)
    max_err = float(jnp.max(jnp.abs(probs - ref)))
    assert max_err < 3e-2, max_err   # bf16 matmul path vs f32 reference

    print("KERNEL_OK")
</pallas_src>

<mosaic_0001>
module attributes {stable_mosaic.version = 11 : i64} {
  func.func @_conv_fused_kernel(%arg0: i32, %arg1: memref<1x8x32xbf16, #tpu.memory_space<vmem>>, %arg2: memref<3x40x256xbf16, #tpu.memory_space<vmem>>, %arg3: memref<1x256xf32, #tpu.memory_space<vmem>>, %arg4: memref<3x320x512xbf16, #tpu.memory_space<vmem>>, %arg5: memref<1x512xf32, #tpu.memory_space<vmem>>, %arg6: memref<1x8x512xbf16, #tpu.memory_space<vmem>>, %arg7: memref<1x10x40xbf16, #tpu.memory_space<vmem>>, %arg8: memref<1x10x320xbf16, #tpu.memory_space<vmem>>) attributes {dimension_semantics = [#tpu.dimension_semantics<parallel>], iteration_bounds = array<i64: 2>, scalar_prefetch = 0 : i64, scratch_operands = 2 : i64, tpu.core_type = #tpu.core_type<tc>, window_params = [{transform_indices = @transform_0, window_bounds = array<i64: 1, 8, 32>}, {pipeline_mode = #tpu.pipeline_mode<synchronous>, transform_indices = @transform_1, window_bounds = array<i64: 3, 40, 256>}, {pipeline_mode = #tpu.pipeline_mode<synchronous>, transform_indices = @transform_2, window_bounds = array<i64: 1, 256>}, {pipeline_mode = #tpu.pipeline_mode<synchronous>, transform_indices = @transform_3, window_bounds = array<i64: 3, 320, 512>}, {pipeline_mode = #tpu.pipeline_mode<synchronous>, transform_indices = @transform_4, window_bounds = array<i64: 1, 512>}, {transform_indices = @transform_5, window_bounds = array<i64: 1, 8, 512>}]} {
    %cst = arith.constant 0.000000e+00 : bf16
    %0 = vector.broadcast %cst : bf16 to vector<1x10x40xbf16>
    %c0 = arith.constant 0 : index
    %c0_0 = arith.constant 0 : index
    %c0_1 = arith.constant 0 : index
    %1 = vector.load %arg7[%c0, %c0_0, %c0_1] : memref<1x10x40xbf16, #tpu.memory_space<vmem>>, vector<1x10x40xbf16>
    tpu.vector_store %arg7[%c0, %c0_0, %c0_1], %0 {strides = array<i32>} : memref<1x10x40xbf16, #tpu.memory_space<vmem>>, vector<1x10x40xbf16>,
    %c0_2 = arith.constant 0 : index
    %c0_3 = arith.constant 0 : index
    %c0_4 = arith.constant 0 : index
    %2 = vector.load %arg1[%c0_2, %c0_3, %c0_4] : memref<1x8x32xbf16, #tpu.memory_space<vmem>>, vector<1x8x32xbf16>
    %c0_5 = arith.constant 0 : index
    %c1 = arith.constant 1 : index
    %c0_6 = arith.constant 0 : index
    %3 = vector.load %arg7[%c0_5, %c1, %c0_6] : memref<1x10x40xbf16, #tpu.memory_space<vmem>>, vector<1x8x32xbf16>
    tpu.vector_store %arg7[%c0_5, %c1, %c0_6], %2 {strides = array<i32>} : memref<1x10x40xbf16, #tpu.memory_space<vmem>>, vector<1x8x32xbf16>,
    %c0_7 = arith.constant 0 : index
    %c0_8 = arith.constant 0 : index
    %c0_9 = arith.constant 0 : index
    %4 = vector.load %arg7[%c0_7, %c0_8, %c0_9] : memref<1x10x40xbf16, #tpu.memory_space<vmem>>, vector<1x8x40xbf16>
    %5 = vector.shape_cast %4 : vector<1x8x40xbf16> to vector<8x40xbf16>
    %c0_10 = arith.constant 0 : index
    %c0_11 = arith.constant 0 : index
    %c0_12 = arith.constant 0 : index
    %6 = vector.load %arg2[%c0_10, %c0_11, %c0_12] : memref<3x40x256xbf16, #tpu.memory_space<vmem>>, vector<1x40x256xbf16>
    %7 = vector.shape_cast %6 : vector<1x40x256xbf16> to vector<40x256xbf16>
    %cst_13 = arith.constant dense<0.000000e+00> : vector<8x256xf32>
    %8 = tpu.matmul %5, %7, %cst_13 {dimension_numbers = #tpu.dot_dimension_numbers<[1], [0], [0], [1], [0, 0, 1, 1], [], []>} : vector<8x40xbf16>, vector<40x256xbf16>, vector<8x256xf32> -> vector<8x256xf32>
    %c0_14 = arith.constant 0 : index
    %c1_15 = arith.constant 1 : index
    %c0_16 = arith.constant 0 : index
    %9 = vector.load %arg7[%c0_14, %c1_15, %c0_16] : memref<1x10x40xbf16, #tpu.memory_space<vmem>>, vector<1x8x40xbf16>
    %10 = vector.shape_cast %9 : vector<1x8x40xbf16> to vector<8x40xbf16>
    %c1_17 = arith.constant 1 : index
    %c0_18 = arith.constant 0 : index
    %c0_19 = arith.constant 0 : index
    %11 = vector.load %arg2[%c1_17, %c0_18, %c0_19] : memref<3x40x256xbf16, #tpu.memory_space<vmem>>, vector<1x40x256xbf16>
    %12 = vector.shape_cast %11 : vector<1x40x256xbf16> to vector<40x256xbf16>
    %cst_20 = arith.constant dense<0.000000e+00> : vector<8x256xf32>
    %13 = tpu.matmul %10, %12, %cst_20 {dimension_numbers = #tpu.dot_dimension_numbers<[1], [0], [0], [1], [0, 0, 1, 1], [], []>} : vector<8x40xbf16>, vector<40x256xbf16>, vector<8x256xf32> -> vector<8x256xf32>
    %14 = arith.addf %8, %13 : vector<8x256xf32>
    %c0_21 = arith.constant 0 : index
    %c2 = arith.constant 2 : index
    %c0_22 = arith.constant 0 : index
    %15 = vector.load %arg7[%c0_21, %c2, %c0_22] : memref<1x10x40xbf16, #tpu.memory_space<vmem>>, vector<1x8x40xbf16>
    %16 = vector.shape_cast %15 : vector<1x8x40xbf16> to vector<8x40xbf16>
    %c2_23 = arith.constant 2 : index
    %c0_24 = arith.constant 0 : index
    %c0_25 = arith.constant 0 : index
    %17 = vector.load %arg2[%c2_23, %c0_24, %c0_25] : memref<3x40x256xbf16, #tpu.memory_space<vmem>>, vector<1x40x256xbf16>
    %18 = vector.shape_cast %17 : vector<1x40x256xbf16> to vector<40x256xbf16>
    %cst_26 = arith.constant dense<0.000000e+00> : vector<8x256xf32>
    %19 = tpu.matmul %16, %18, %cst_26 {dimension_numbers = #tpu.dot_dimension_numbers<[1], [0], [0], [1], [0, 0, 1, 1], [], []>} : vector<8x40xbf16>, vector<40x256xbf16>, vector<8x256xf32> -> vector<8x256xf32>
    %20 = arith.addf %14, %19 : vector<8x256xf32>
    %c0_27 = arith.constant 0 : index
    %c0_28 = arith.constant 0 : index
    %21 = vector.load %arg3[%c0_27, %c0_28] : memref<1x256xf32, #tpu.memory_space<vmem>>, vector<1x256xf32>
    %22 = vector.broadcast %21 : vector<1x256xf32> to vector<8x256xf32>
    %23 = arith.addf %20, %22 : vector<8x256xf32>
    %cst_29 = arith.constant 0.000000e+00 : f32
    %24 = vector.broadcast %cst_29 : f32 to vector<8x256xf32>
    %25 = arith.maximumf %23, %24 : vector<8x256xf32>
    %26 = arith.truncf %25 : vector<8x256xf32> to vector<8x256xbf16>
    %cst_30 = arith.constant 0.000000e+00 : bf16
    %27 = vector.broadcast %cst_30 : bf16 to vector<1x10x320xbf16>
    %c0_31 = arith.constant 0 : index
    %c0_32 = arith.constant 0 : index
    %c0_33 = arith.constant 0 : index
    %28 = vector.load %arg8[%c0_31, %c0_32, %c0_33] : memref<1x10x320xbf16, #tpu.memory_space<vmem>>, vector<1x10x320xbf16>
    tpu.vector_store %arg8[%c0_31, %c0_32, %c0_33], %27 {strides = array<i32>} : memref<1x10x320xbf16, #tpu.memory_space<vmem>>, vector<1x10x320xbf16>,
    %29 = vector.shape_cast %26 : vector<8x256xbf16> to vector<1x8x256xbf16>
    %c0_34 = arith.constant 0 : index
    %c1_35 = arith.constant 1 : index
    %c0_36 = arith.constant 0 : index
    %30 = vector.load %arg8[%c0_34, %c1_35, %c0_36] : memref<1x10x320xbf16, #tpu.memory_space<vmem>>, vector<1x8x256xbf16>
    tpu.vector_store %arg8[%c0_34, %c1_35, %c0_36], %29 {strides = array<i32>} : memref<1x10x320xbf16, #tpu.memory_space<vmem>>, vector<1x8x256xbf16>,
    %c0_37 = arith.constant 0 : index
    %c0_38 = arith.constant 0 : index
    %c0_39 = arith.constant 0 : index
    %31 = vector.load %arg8[%c0_37, %c0_38, %c0_39] : memref<1x10x320xbf16, #tpu.memory_space<vmem>>, vector<1x8x320xbf16>
    %32 = vector.shape_cast %31 : vector<1x8x320xbf16> to vector<8x320xbf16>
    %c0_40 = arith.constant 0 : index
    %c0_41 = arith.constant 0 : index
    %c0_42 = arith.constant 0 : index
    %33 = vector.load %arg4[%c0_40, %c0_41, %c0_42] : memref<3x320x512xbf16, #tpu.memory_space<vmem>>, vector<1x320x512xbf16>
    %34 = vector.shape_cast %33 : vector<1x320x512xbf16> to vector<320x512xbf16>
    %cst_43 = arith.constant dense<0.000000e+00> : vector<8x512xf32>
    %35 = tpu.matmul %32, %34, %cst_43 {dimension_numbers = #tpu.dot_dimension_numbers<[1], [0], [0], [1], [0, 0, 1, 1], [], []>} : vector<8x320xbf16>, vector<320x512xbf16>, vector<8x512xf32> -> vector<8x512xf32>
    %c0_44 = arith.constant 0 : index
    %c1_45 = arith.constant 1 : index
    %c0_46 = arith.constant 0 : index
    %36 = vector.load %arg8[%c0_44, %c1_45, %c0_46] : memref<1x10x320xbf16, #tpu.memory_space<vmem>>, vector<1x8x320xbf16>
    %37 = vector.shape_cast %36 : vector<1x8x320xbf16> to vector<8x320xbf16>
    %c1_47 = arith.constant 1 : index
    %c0_48 = arith.constant 0 : index
    %c0_49 = arith.constant 0 : index
    %38 = vector.load %arg4[%c1_47, %c0_48, %c0_49] : memref<3x320x512xbf16, #tpu.memory_space<vmem>>, vector<1x320x512xbf16>
    %39 = vector.shape_cast %38 : vector<1x320x512xbf16> to vector<320x512xbf16>
    %cst_50 = arith.constant dense<0.000000e+00> : vector<8x512xf32>
    %40 = tpu.matmul %37, %39, %cst_50 {dimension_numbers = #tpu.dot_dimension_numbers<[1], [0], [0], [1], [0, 0, 1, 1], [], []>} : vector<8x320xbf16>, vector<320x512xbf16>, vector<8x512xf32> -> vector<8x512xf32>
    %41 = arith.addf %35, %40 : vector<8x512xf32>
    %c0_51 = arith.constant 0 : index
    %c2_52 = arith.constant 2 : index
    %c0_53 = arith.constant 0 : index
    %42 = vector.load %arg8[%c0_51, %c2_52, %c0_53] : memref<1x10x320xbf16, #tpu.memory_space<vmem>>, vector<1x8x320xbf16>
    %43 = vector.shape_cast %42 : vector<1x8x320xbf16> to vector<8x320xbf16>
    %c2_54 = arith.constant 2 : index
    %c0_55 = arith.constant 0 : index
    %c0_56 = arith.constant 0 : index
    %44 = vector.load %arg4[%c2_54, %c0_55, %c0_56] : memref<3x320x512xbf16, #tpu.memory_space<vmem>>, vector<1x320x512xbf16>
    %45 = vector.shape_cast %44 : vector<1x320x512xbf16> to vector<320x512xbf16>
    %cst_57 = arith.constant dense<0.000000e+00> : vector<8x512xf32>
    %46 = tpu.matmul %43, %45, %cst_57 {dimension_numbers = #tpu.dot_dimension_numbers<[1], [0], [0], [1], [0, 0, 1, 1], [], []>} : vector<8x320xbf16>, vector<320x512xbf16>, vector<8x512xf32> -> vector<8x512xf32>
    %47 = arith.addf %41, %46 : vector<8x512xf32>
    %c0_58 = arith.constant 0 : index
    %c0_59 = arith.constant 0 : index
    %48 = vector.load %arg5[%c0_58, %c0_59] : memref<1x512xf32, #tpu.memory_space<vmem>>, vector<1x512xf32>
    %49 = vector.broadcast %48 : vector<1x512xf32> to vector<8x512xf32>
    %50 = arith.addf %47, %49 : vector<8x512xf32>
    %cst_60 = arith.constant 0.000000e+00 : f32
    %51 = vector.broadcast %cst_60 : f32 to vector<8x512xf32>
    %52 = arith.maximumf %50, %51 : vector<8x512xf32>
    %53 = vector.shape_cast %52 : vector<8x512xf32> to vector<1x8x512xf32>
    %54 = arith.truncf %53 : vector<1x8x512xf32> to vector<1x8x512xbf16>
    %c0_61 = arith.constant 0 : index
    %c0_62 = arith.constant 0 : index
    %c0_63 = arith.constant 0 : index
    %55 = vector.load %arg6[%c0_61, %c0_62, %c0_63] : memref<1x8x512xbf16, #tpu.memory_space<vmem>>, vector<1x8x512xbf16>
    tpu.vector_store %arg6[%c0_61, %c0_62, %c0_63], %54 {strides = array<i32>} : memref<1x8x512xbf16, #tpu.memory_space<vmem>>, vector<1x8x512xbf16>,
    return
  }
  func.func @transform_0(%arg0: i32) -> (i32, i32, i32) {
    %c0_i32 = arith.constant 0 : i32
    %c0_i32_0 = arith.constant 0 : i32
    %c0_i32_1 = arith.constant 0 : i32
    return %arg0, %c0_i32, %c0_i32_0 : i32, i32, i32
  }
  func.func @transform_1(%arg0: i32) -> (i32, i32, i32) {
    %c0_i32 = arith.constant 0 : i32
    %c0_i32_0 = arith.constant 0 : i32
    %c0_i32_1 = arith.constant 0 : i32
    %c0_i32_2 = arith.constant 0 : i32
    return %c0_i32, %c0_i32_0, %c0_i32_1 : i32, i32, i32
  }
  func.func @transform_2(%arg0: i32) -> (i32, i32) {
    %c0_i32 = arith.constant 0 : i32
    %c0_i32_0 = arith.constant 0 : i32
    %c0_i32_1 = arith.constant 0 : i32
    return %c0_i32, %c0_i32_0 : i32, i32
  }
  func.func @transform_3(%arg0: i32) -> (i32, i32, i32) {
    %c0_i32 = arith.constant 0 : i32
    %c0_i32_0 = arith.constant 0 : i32
    %c0_i32_1 = arith.constant 0 : i32
    %c0_i32_2 = arith.constant 0 : i32
    return %c0_i32, %c0_i32_0, %c0_i32_1 : i32, i32, i32
  }
  func.func @transform_4(%arg0: i32) -> (i32, i32) {
    %c0_i32 = arith.constant 0 : i32
    %c0_i32_0 = arith.constant 0 : i32
    %c0_i32_1 = arith.constant 0 : i32
    return %c0_i32, %c0_i32_0 : i32, i32
  }
  func.func @transform_5(%arg0: i32) -> (i32, i32, i32) {
    %c0_i32 = arith.constant 0 : i32
    %c0_i32_0 = arith.constant 0 : i32
    %c0_i32_1 = arith.constant 0 : i32
    return %arg0, %c0_i32, %c0_i32_0 : i32, i32, i32
  }
}

module attributes {stable_mosaic.version = 11 : i64} {
  func.func @_fc_fused_kernel(%arg0: i32, %arg1: memref<2x4096xbf16, #tpu.memory_space<vmem>>, %arg2: memref<4096x256xbf16, #tpu.memory_space<vmem>>, %arg3: memref<1x256xf32, #tpu.memory_space<vmem>>, %arg4: memref<256x128xbf16, #tpu.memory_space<vmem>>, %arg5: memref<1x128xf32, #tpu.memory_space<vmem>>, %arg6: memref<2x128xf32, #tpu.memory_space<vmem>>) attributes {dimension_semantics = [#tpu.dimension_semantics<parallel>], iteration_bounds = array<i64: 1>, scalar_prefetch = 0 : i64, scratch_operands = 0 : i64, tpu.core_type = #tpu.core_type<tc>, window_params = [{transform_indices = @transform_0, window_bounds = array<i64: 2, 4096>}, {pipeline_mode = #tpu.pipeline_mode<synchronous>, transform_indices = @transform_1, window_bounds = array<i64: 4096, 256>}, {pipeline_mode = #tpu.pipeline_mode<synchronous>, transform_indices = @transform_2, window_bounds = array<i64: 1, 256>}, {pipeline_mode = #tpu.pipeline_mode<synchronous>, transform_indices = @transform_3, window_bounds = array<i64: 256, 128>}, {pipeline_mode = #tpu.pipeline_mode<synchronous>, transform_indices = @transform_4, window_bounds = array<i64: 1, 128>}, {transform_indices = @transform_5, window_bounds = array<i64: 2, 128>}]} {
    %c0 = arith.constant 0 : index
    %c0_0 = arith.constant 0 : index
    %0 = vector.load %arg1[%c0, %c0_0] : memref<2x4096xbf16, #tpu.memory_space<vmem>>, vector<2x4096xbf16>
    %c0_1 = arith.constant 0 : index
    %c0_2 = arith.constant 0 : index
    %1 = vector.load %arg2[%c0_1, %c0_2] : memref<4096x256xbf16, #tpu.memory_space<vmem>>, vector<4096x256xbf16>
    %cst = arith.constant dense<0.000000e+00> : vector<2x256xf32>
    %2 = tpu.matmul %0, %1, %cst {dimension_numbers = #tpu.dot_dimension_numbers<[1], [0], [0], [1], [0, 0, 1, 1], [], []>} : vector<2x4096xbf16>, vector<4096x256xbf16>, vector<2x256xf32> -> vector<2x256xf32>
    %c0_3 = arith.constant 0 : index
    %c0_4 = arith.constant 0 : index
    %3 = vector.load %arg3[%c0_3, %c0_4] : memref<1x256xf32, #tpu.memory_space<vmem>>, vector<1x256xf32>
    %4 = vector.broadcast %3 : vector<1x256xf32> to vector<2x256xf32>
    %5 = arith.addf %2, %4 : vector<2x256xf32>
    %cst_5 = arith.constant 0.000000e+00 : f32
    %6 = vector.broadcast %cst_5 : f32 to vector<2x256xf32>
    %7 = arith.maximumf %5, %6 : vector<2x256xf32>
    %8 = arith.truncf %7 : vector<2x256xf32> to vector<2x256xbf16>
    %c0_6 = arith.constant 0 : index
    %c0_7 = arith.constant 0 : index
    %9 = vector.load %arg4[%c0_6, %c0_7] : memref<256x128xbf16, #tpu.memory_space<vmem>>, vector<256x128xbf16>
    %cst_8 = arith.constant dense<0.000000e+00> : vector<2x128xf32>
    %10 = tpu.matmul %8, %9, %cst_8 {dimension_numbers = #tpu.dot_dimension_numbers<[1], [0], [0], [1], [0, 0, 1, 1], [], []>} : vector<2x256xbf16>, vector<256x128xbf16>, vector<2x128xf32> -> vector<2x128xf32>
    %c0_9 = arith.constant 0 : index
    %c0_10 = arith.constant 0 : index
    %11 = vector.load %arg5[%c0_9, %c0_10] : memref<1x128xf32, #tpu.memory_space<vmem>>, vector<1x128xf32>
    %12 = vector.broadcast %11 : vector<1x128xf32> to vector<2x128xf32>
    %13 = arith.addf %10, %12 : vector<2x128xf32>
    %cst_11 = arith.constant dense<0xFF800000> : vector<2xf32>
    %14 = vector.multi_reduction <maximumf>, %13, %cst_11 [1] : vector<2x128xf32> to vector<2xf32>
    %15 = vector.shape_cast %14 : vector<2xf32> to vector<2x1xf32>
    %16 = vector.broadcast %15 : vector<2x1xf32> to vector<2x128xf32>
    %17 = arith.subf %13, %16 : vector<2x128xf32>
    %18 = math.exp %17 : vector<2x128xf32>
    %cst_12 = arith.constant dense<0.000000e+00> : vector<2xf32>
    %19 = vector.multi_reduction <add>, %18, %cst_12 [1] : vector<2x128xf32> to vector<2xf32>
    %20 = vector.shape_cast %19 : vector<2xf32> to vector<2x1xf32>
    %21 = tpu.reciprocal %20 : vector<2x1xf32> -> vector<2x1xf32>
    %22 = vector.broadcast %21 : vector<2x1xf32> to vector<2x128xf32>
    %23 = arith.mulf %18, %22 : vector<2x128xf32>
    %c0_13 = arith.constant 0 : index
    %c0_14 = arith.constant 0 : index
    %24 = vector.load %arg6[%c0_13, %c0_14] : memref<2x128xf32, #tpu.memory_space<vmem>>, vector<2x128xf32>
    tpu.vector_store %arg6[%c0_13, %c0_14], %23 {strides = array<i32>} : memref<2x128xf32, #tpu.memory_space<vmem>>, vector<2x128xf32>,
    return
  }
  func.func @transform_0(%arg0: i32) -> (i32, i32) {
    %c0_i32 = arith.constant 0 : i32
    %c0_i32_0 = arith.constant 0 : i32
    return %arg0, %c0_i32 : i32, i32
  }
  func.func @transform_1(%arg0: i32) -> (i32, i32) {
    %c0_i32 = arith.constant 0 : i32
    %c0_i32_0 = arith.constant 0 : i32
    %c0_i32_1 = arith.constant 0 : i32
    return %c0_i32, %c0_i32_0 : i32, i32
  }
  func.func @transform_2(%arg0: i32) -> (i32, i32) {
    %c0_i32 = arith.constant 0 : i32
    %c0_i32_0 = arith.constant 0 : i32
    %c0_i32_1 = arith.constant 0 : i32
    return %c0_i32, %c0_i32_0 : i32, i32
  }
  func.func @transform_3(%arg0: i32) -> (i32, i32) {
    %c0_i32 = arith.constant 0 : i32
    %c0_i32_0 = arith.constant 0 : i32
    %c0_i32_1 = arith.constant 0 : i32
    return %c0_i32, %c0_i32_0 : i32, i32
  }
  func.func @transform_4(%arg0: i32) -> (i32, i32) {
    %c0_i32 = arith.constant 0 : i32
    %c0_i32_0 = arith.constant 0 : i32
    %c0_i32_1 = arith.constant 0 : i32
    return %c0_i32, %c0_i32_0 : i32, i32
  }
  func.func @transform_5(%arg0: i32) -> (i32, i32) {
    %c0_i32 = arith.constant 0 : i32
    %c0_i32_0 = arith.constant 0 : i32
    return %arg0, %c0_i32 : i32, i32
  }
}

</mosaic_0001>

<llo_original>
// kernel: actor_forward.2
$region0: #{actor_forward.2}
  #allocation0 [shape = 'u32[]', space=smem, size = 0x4, offset = 0x4, fixed_abs, tag = 'smem constant byte address 0x4 - core index']
  #allocation1 [shape = 'u32[144,128]{1,0:T(1,128)}', space=vmem, size = 0x12000, scoped, tag = 'internal scratch']
  #allocation2 [shape = 'bf16[1,10,40]{2,1,0:T(8,128)(2,1)}', space=vmem, size = 0x1000, scoped, tag = 'scratch operand']
  #allocation3 [shape = 'bf16[1,10,320]{2,1,0:T(8,128)(2,1)}', space=vmem, size = 0x3000, scoped, tag = 'scratch operand']
  %s0 = inlined_call_operand.vmem [shape: bf16[2,8,32], index: 0, kind: input, shape index: {}]
  %s1 = inlined_call_operand.hbm [shape: bf16[3,40,256], index: 1, kind: input, shape index: {}]
  %s2 = inlined_call_operand.hbm [shape: f32[1,256], index: 2, kind: input, shape index: {}]
  %s3 = inlined_call_operand.hbm [shape: bf16[3,320,512], index: 3, kind: input, shape index: {}]
  %s4 = inlined_call_operand.hbm [shape: f32[1,512], index: 4, kind: input, shape index: {}]
  %s5 = inlined_call_operand.vmem [shape: bf16[2,8,512], index: 5, kind: output, shape index: {}]
  %s6 = sld [smem:[#allocation0]]
  $region69: #{actor_forward.2} parent=0
    _
  %s8 = ssub.s32 1, %s6
  %s9 = scalar_select 0, %s8, %s6
  $region1: #{actor_forward.2} parent=0
    #allocation4 [shape = 'u8[61440]{0}', space=vmem, size = 0xf000, scoped, tag = 'input window, operand 1, single buffered']
    #allocation5 [shape = 's32[2]{0}', space=sflag, size = 0x8, scoped, tag = 'scoped memory for actor_forward.2']
    #allocation6 [shape = 'u8[1024]{0}', space=vmem, size = 0x400, scoped, tag = 'input window, operand 2, single buffered']
    #allocation7 [shape = 's32[1]{0}', space=sflag, size = 0x4, scoped, tag = 'scoped memory for actor_forward.2']
    #allocation8 [shape = 'u8[983040]{0}', space=vmem, size = 0xf0000, scoped, tag = 'input window, operand 3, single buffered']
    #allocation9 [shape = 'u8[2048]{0}', space=vmem, size = 0x800, scoped, tag = 'input window, operand 4, single buffered']
    #allocation10 [shape = 's32[1]{0}', space=sflag, size = 0x4, scoped, tag = 'scoped memory for actor_forward.2']
    %10 = vsyncpa [#allocation5], 0
    %11 = vsyncpa [#allocation7], 0
    %12 = vsyncpa [#allocation10], 0
    loop: start=0, step=1, limit=4
    $region2: #{actor_forward.2} parent=1 // loop_pre_header
      _
    $region3: #{actor_forward.2} parent=1 // loop_header
      %s14 = sphi 0, %s18
      %p15 = scmp.ge.s32.totalorder %s14, 4
      %s24 = sphi 0, %s26
      %s27 = sphi 0, %s24
      %s28 = sphi 0, %s27
      %s44 = sphi 0, %s28
      %s48 = sphi 0, %s48
      %s50 = sphi 0, %s48
      %s51 = sphi 0, %s50
      %s65 = sphi 0, %s51
      %s69 = sphi 0, %s69
      %s71 = sphi 0, %s69
      %s72 = sphi 0, %s71
      %s86 = sphi 0, %s72
      %s90 = sphi 0, %s90
      %s92 = sphi 0, %s90
      %s93 = sphi 0, %s92
      %s107 = sphi 0, %s93
      %s111 = sphi 0, %s111
      %s113 = sphi 0, %s111
      %s114 = sphi 0, %s113
      %s128 = sphi 0, %s114
      %s134 = sphi 0, %s136
      %s137 = sphi 0, %s134
      %s138 = sphi 0, %s137
      %s154 = sphi 0, %s138
    $region4: #{actor_forward.2} parent=1 // loop_header_branch
      %17 = sbr.rel (%p15) target = $region8
    $region5: #{actor_forward.2} parent=1 // loop_body
      %s19 = ssub.s32 %s14, 1
      %s20 = ssub.s32 %s14, 2
      %s21 = sadd.s32 %s14, 1
      %s22 = ssub.s32 %s14, %s21
      %p23 = scmp.eq.s32.totalorder %s22, 0
      %s25 = sadd.s32 %s24, 1
      %s26 = scalar_select %p23, %s24, %s25
      %p29 = pneg %p23
      %p30 = scmp.eq.s32.totalorder %s14, 1
      %p31 = por %p29, %p30
      %p32 = scmp.ne.s32.totalorder %s24, %s27
      %p33 = scmp.eq.s32.totalorder %s14, 0
      %p34 = por %p32, %p33
      %p35 = scmp.ne.s32.totalorder %s24, %s27
      %p36 = scmp.eq.s32.totalorder %s19, 1
      %p37 = por %p35, %p36
      %p38 = scmp.ne.s32.totalorder %s27, %s28
      %p39 = scmp.eq.s32.totalorder %s19, 0
      %p40 = por %p38, %p39
      %p41 = scmp.ne.s32.totalorder %s27, %s28
      %p42 = scmp.eq.s32.totalorder %s20, 1
      %p43 = por %p41, %p42
      %p45 = scmp.ne.s32.totalorder %s28, %s44
      %p46 = scmp.eq.s32.totalorder %s20, 0
      %p47 = por %p45, %p46
      %s49 = sadd.s32 %s48, 1
      %p52 = scmp.eq.s32.totalorder %s14, 1
      %p53 = scmp.ne.s32.totalorder %s48, %s50
      %p54 = scmp.eq.s32.totalorder %s14, 0
      %p55 = por %p53, %p54
      %p56 = scmp.ne.s32.totalorder %s48, %s50
      %p57 = scmp.eq.s32.totalorder %s19, 1
      %p58 = por %p56, %p57
      %p59 = scmp.ne.s32.totalorder %s50, %s51
      %p60 = scmp.eq.s32.totalorder %s19, 0
      %p61 = por %p59, %p60
      %p62 = scmp.ne.s32.totalorder %s50, %s51
      %p63 = scmp.eq.s32.totalorder %s20, 1
      %p64 = por %p62, %p63
      %p66 = scmp.ne.s32.totalorder %s51, %s65
      %p67 = scmp.eq.s32.totalorder %s20, 0
      %p68 = por %p66, %p67
      %s70 = sadd.s32 %s69, 1
      %p73 = scmp.eq.s32.totalorder %s14, 1
      %p74 = scmp.ne.s32.totalorder %s69, %s71
      %p75 = scmp.eq.s32.totalorder %s14, 0
      %p76 = por %p74, %p75
      %p77 = scmp.ne.s32.totalorder %s69, %s71
      %p78 = scmp.eq.s32.totalorder %s19, 1
      %p79 = por %p77, %p78
      %p80 = scmp.ne.s32.totalorder %s71, %s72
      %p81 = scmp.eq.s32.totalorder %s19, 0
      %p82 = por %p80, %p81
      %p83 = scmp.ne.s32.totalorder %s71, %s72
      %p84 = scmp.eq.s32.totalorder %s20, 1
      %p85 = por %p83, %p84
      %p87 = scmp.ne.s32.totalorder %s72, %s86
      %p88 = scmp.eq.s32.totalorder %s20, 0
      %p89 = por %p87, %p88
      %s91 = sadd.s32 %s90, 1
      %p94 = scmp.eq.s32.totalorder %s14, 1
      %p95 = scmp.ne.s32.totalorder %s90, %s92
      %p96 = scmp.eq.s32.totalorder %s14, 0
      %p97 = por %p95, %p96
      %p98 = scmp.ne.s32.totalorder %s90, %s92
      %p99 = scmp.eq.s32.totalorder %s19, 1
      %p100 = por %p98, %p99
      %p101 = scmp.ne.s32.totalorder %s92, %s93
      %p102 = scmp.eq.s32.totalorder %s19, 0
      %p103 = por %p101, %p102
      %p104 = scmp.ne.s32.totalorder %s92, %s93
      %p105 = scmp.eq.s32.totalorder %s20, 1
      %p106 = por %p104, %p105
      %p108 = scmp.ne.s32.totalorder %s93, %s107
      %p109 = scmp.eq.s32.totalorder %s20, 0
      %p110 = por %p108, %p109
      %s112 = sadd.s32 %s111, 1
      %p115 = scmp.eq.s32.totalorder %s14, 1
      %p116 = scmp.ne.s32.totalorder %s111, %s113
      %p117 = scmp.eq.s32.totalorder %s14, 0
      %p118 = por %p116, %p117
      %p119 = scmp.ne.s32.totalorder %s111, %s113
      %p120 = scmp.eq.s32.totalorder %s19, 1
      %p121 = por %p119, %p120
      %p122 = scmp.ne.s32.totalorder %s113, %s114
      %p123 = scmp.eq.s32.totalorder %s19, 0
      %p124 = por %p122, %p123
      %p125 = scmp.ne.s32.totalorder %s113, %s114
      %p126 = scmp.eq.s32.totalorder %s20, 1
      %p127 = por %p125, %p126
      %p129 = scmp.ne.s32.totalorder %s114, %s128
      %p130 = scmp.eq.s32.totalorder %s20, 0
      %p131 = por %p129, %p130
      %s132 = ssub.s32 %s14, %s21
      %p133 = scmp.eq.s32.totalorder %s132, 0
      %s135 = sadd.s32 %s134, 1
      %s136 = scalar_select %p133, %s134, %s135
      %p139 = pneg %p133
      %p140 = scmp.eq.s32.totalorder %s14, 1
      %p141 = por %p139, %p140
      %p142 = scmp.ne.s32.totalorder %s134, %s137
      %p143 = scmp.eq.s32.totalorder %s14, 0
      %p144 = por %p142, %p143
      %p145 = scmp.ne.s32.totalorder %s134, %s137
      %p146 = scmp.eq.s32.totalorder %s19, 1
      %p147 = por %p145, %p146
      %p148 = scmp.ne.s32.totalorder %s137, %s138
      %p149 = scmp.eq.s32.totalorder %s19, 0
      %p150 = por %p148, %p149
      %p151 = scmp.ne.s32.totalorder %s137, %s138
      %p152 = scmp.eq.s32.totalorder %s20, 1
      %p153 = por %p151, %p152
      %p155 = scmp.ne.s32.totalorder %s138, %s154
      %p156 = scmp.eq.s32.totalorder %s20, 0
      %p157 = por %p155, %p156
      %p158 = scmp.le.s32.totalorder 1, %s14
      %p159 = scmp.lt.s32.totalorder %s14, 3
      %p160 = pnand %p158, %p159
      %p161 = pneg %p160
      // Predicated region
      $region9: #{actor_forward.2} parent=5 // pred_check
        _
      $region10: #{actor_forward.2} parent=5 // pred_check_branch
        %163 = sbr.rel (%p160) target = $region12
      $region11: #{actor_forward.2} parent=5 // pred_region
        %s164 = ssub.s32 %s14, 1
        // Predicated region
        $region13: #{actor_forward.2} parent=11 // pred_check
          %p165 = pneg %p61
        $region14: #{actor_forward.2} parent=11 // pred_check_branch
          %167 = sbr.rel (%p165) target = $region16
        $region15: #{actor_forward.2} parent=11 // pred_region
          %s169 = ssub.s32 1920, 1920
          %170 = vsyncadd [#allocation5], %s169
          %s171 = sshll.u32 [#allocation4], 4
          %s172 = int_to_ptr.vmem [resolvable:$true] %s171
          %177 = dma.hbm_to_vmem [thread:$0]  %s1, 1920, %s172, [#allocation5], 128, 128, 8
        $region16: #{actor_forward.2} parent=11 // pred_fallthru
          _
        // Predicated region
        $region17: #{actor_forward.2} parent=11 // pred_check
          %p178 = pneg %p82
        $region18: #{actor_forward.2} parent=11 // pred_check_branch
          %180 = sbr.rel (%p178) target = $region20
        $region19: #{actor_forward.2} parent=11 // pred_region
          %s182 = ssub.s32 32, 32
          %183 = vsyncadd [#allocation7], %s182
          %s185 = sshll.u32 [#allocation6], 4
          %s186 = int_to_ptr.vmem [resolvable:$true] %s185
          %188 = dma.hbm_to_vmem [thread:$0]  %s2, 32, %s186, [#allocation7]
        $region20: #{actor_forward.2} parent=11 // pred_fallthru
          _
        // Predicated region
        $region21: #{actor_forward.2} parent=11 // pred_check
          %p189 = pneg %p103
        $region22: #{actor_forward.2} parent=11 // pred_check_branch
          %191 = sbr.rel (%p189) target = $region24
        $region23: #{actor_forward.2} parent=11 // pred_region
          %s193 = ssub.s32 30720, 30720
          %194 = vsyncadd [#allocation7], %s193
          %s195 = sshll.u32 [#allocation8], 4
          %s196 = int_to_ptr.vmem [resolvable:$true] %s195
          %201 = dma.hbm_to_vmem [thread:$0]  %s3, 30720, %s196, [#allocation7], 256, 256, 16
        $region24: #{actor_forward.2} parent=11 // pred_fallthru
          _
        // Predicated region
        $region25: #{actor_forward.2} parent=11 // pred_check
          %p202 = pneg %p124
        $region26: #{actor_forward.2} parent=11 // pred_check_branch
          %204 = sbr.rel (%p202) target = $region28
        $region27: #{actor_forward.2} parent=11 // pred_region
          %s206 = ssub.s32 64, 64
          %207 = vsyncadd [#allocation10], %s206
          %s209 = sshll.u32 [#allocation9], 4
          %s210 = int_to_ptr.vmem [resolvable:$true] %s209
          %212 = dma.hbm_to_vmem [thread:$0]  %s4, 64, %s210, [#allocation10]
        $region28: #{actor_forward.2} parent=11 // pred_fallthru
          _
      $region12: #{actor_forward.2} parent=5 // pred_fallthru
        _
      %p213 = scmp.lt.s32.totalorder %s14, 2
      // Predicated region
      $region29: #{actor_forward.2} parent=5 // pred_check
        %p214 = pneg %p213
      $region30: #{actor_forward.2} parent=5 // pred_check_branch
        %216 = sbr.rel (%p214) target = $region32
      $region31: #{actor_forward.2} parent=5 // pred_region
        // Predicated region
        $region33: #{actor_forward.2} parent=31 // pred_check
          %p217 = pneg %p34
        $region34: #{actor_forward.2} parent=31 // pred_check_branch
          %219 = sbr.rel (%p217) target = $region36
        $region35: #{actor_forward.2} parent=31 // pred_region
          %p220 = scmp.lt.s32.totalorder %s14, 1
          %s221 = scalar_select %p220, %s14, 1
          %s222 = smul.addr %s221, 4
          %s223 = scalar_lea.vmem %s0, %s222
        $region36: #{actor_forward.2} parent=31 // pred_fallthru
          _
      $region32: #{actor_forward.2} parent=5 // pred_fallthru
        _
      %p224 = scmp.le.s32.totalorder 1, %s14
      %p225 = scmp.lt.s32.totalorder %s14, 3
      %p226 = pnand %p224, %p225
      %p227 = pneg %p226
      // Predicated region
      $region37: #{actor_forward.2} parent=5 // pred_check
        _
      $region38: #{actor_forward.2} parent=5 // pred_check_branch
        %229 = sbr.rel (%p226) target = $region40
      $region39: #{actor_forward.2} parent=5 // pred_region
        %s230 = ssub.s32 %s14, 1
        // Predicated region
        $region41: #{actor_forward.2} parent=39 // pred_check
          %p231 = pneg %p61
        $region42: #{actor_forward.2} parent=39 // pred_check_branch
          %233 = sbr.rel (%p231) target = $region44
        $region43: #{actor_forward.2} parent=39 // pred_region
          %234 = dma.done [#allocation5], 1920
        $region44: #{actor_forward.2} parent=39 // pred_fallthru
          _
        // Predicated region
        $region45: #{actor_forward.2} parent=39 // pred_check
          %p235 = pneg %p82
        $region46: #{actor_forward.2} parent=39 // pred_check_branch
          %237 = sbr.rel (%p235) target = $region48
        $region47: #{actor_forward.2} parent=39 // pred_region
          %238 = dma.done [#allocation7], 32
        $region48: #{actor_forward.2} parent=39 // pred_fallthru
          _
        // Predicated region
        $region49: #{actor_forward.2} parent=39 // pred_check
          %p239 = pneg %p103
        $region50: #{actor_forward.2} parent=39 // pred_check_branch
          %241 = sbr.rel (%p239) target = $region52
        $region51: #{actor_forward.2} parent=39 // pred_region
          %242 = dma.done [#allocation7], 30720
        $region52: #{actor_forward.2} parent=39 // pred_fallthru
          _
        // Predicated region
        $region53: #{actor_forward.2} parent=39 // pred_check
          %p243 = pneg %p124
        $region54: #{actor_forward.2} parent=39 // pred_check_branch
          %245 = sbr.rel (%p243) target = $region56
        $region55: #{actor_forward.2} parent=39 // pred_region
          %246 = dma.done [#allocation10], 64
        $region56: #{actor_forward.2} parent=39 // pred_fallthru
          _
        %p247 = scmp.lt.s32.totalorder %s19, 1
        %s248 = scalar_select %p247, %s19, 1
        %s249 = smul.addr %s248, 4
        %s250 = scalar_lea.vmem %s0, %s249
        %p251 = pneg %p40
        %p252 = pneg %p37
        %p253 = pneg %p61
        %p254 = pneg %p58
        %p255 = pneg %p82
        %p256 = pneg %p79
        %p257 = pneg %p103
        %p258 = pneg %p100
        %p259 = pneg %p124
        %p260 = pneg %p121
        %p261 = pneg %p150
        %p262 = pneg %p147
        %p263 = scmp.lt.s32.totalorder %s19, 1
        %s264 = scalar_select %p263, %s19, 1
        %s265 = smul.addr %s264, 4
        %s266 = smul.addr %s265, 4
        %s267 = scalar_lea.vmem %s5, %s266
        %p268 = scmp.lt.s32.totalorder %s19, 1
        %s269 = scalar_select %p268, %s19, 1
        %s270 = smul.addr %s269, 4
        %s271 = scalar_lea.vmem %s0, %s270
        %p272 = scmp.lt.s32.totalorder %s19, 1
        %s273 = scalar_select %p272, %s19, 1
        %s274 = smul.addr %s273, 4
        %s275 = smul.addr %s274, 4
        %s276 = scalar_lea.vmem %s5, %s275
        %vm278 = vcmask 322560
        %279 = vst.msk [vmem:[#allocation2] sm:$0xf] %vm278, 0
        %vm280 = vcmask 319488
        %281 = vst.msk [vmem:[#allocation2 + $0x4] sm:$0x1] %vm280, 0
        %v282 = vld [vmem:[%s271] sm:$0xf]
        %v284 = vshrl.u32 %v282, 16
        %v286 = vrot.slane %v284, 7
        %v287 = vshll.u32 %v282, 16
        %v289 = vor.u32 %v286, %v287
        %v290 = vrot.slane %v286, 4
        %vm293 = vcmask 257024
        %vm294 = vsmask.f32 7938
        %vm295 = vmand %vm293, %vm294
        %v296 = vld [vmem:[#allocation2] sm:$0xf]
        %v297 = vsel %vm295, %v289, %v296
        %298 = vst [vmem:[#allocation2] sm:$0xf] %v297
        %vm299 = vcmask 253952
        %vm300 = vsmask.f32 256
        %vm301 = vmand %vm299, %vm300
        %v302 = vld [vmem:[#allocation2 + $0x4] sm:$0x1]
        %v303 = vsel %vm301, %v290, %v302
        %304 = vst [vmem:[#allocation2 + $0x4] sm:$0x1] %v303
        %v305 = vld [vmem:[#allocation2] sm:$0xf]
        %v306 = vld [vmem:[#allocation4] sm:$0xff]
        %v307 = vld [vmem:[#allocation4 + $0x8] sm:$0xff]
        %v308 = vld [vmem:[#allocation4 + $0x10] sm:$0xff]
        %v309 = vld [vmem:[#allocation4 + $0x18] sm:$0xff]
        %v310 = vld [vmem:[#allocation4 + $0x20] sm:$0xff]
        %v311 = vld [vmem:[#allocation2 + $0x4] sm:$0x1]
        %s312 = scalar_lea.vmem [#allocation4], 40
        %v313 = vld [vmem:[%s312] sm:$0xff]
        %v314 = vld [vmem:[%s312 + $0x8] sm:$0xff]
        %v315 = vld [vmem:[%s312 + $0x10] sm:$0xff]
        %v316 = vld [vmem:[%s312 + $0x18] sm:$0xff]
        %v317 = vld [vmem:[%s312 + $0x20] sm:$0xff]
        %v320 = vunpack.c.l.b16 %v305
        %v321 = vunpack.c.l.b16 %v311
        %v322 = vpack.c.b16 %v321, %v320
        %v324 = vshrl.u32 %v322, 16
        %v326 = vshll.u32 %v322, 16
        %v328 = vrot.slane %v326, 1
        %v329 = vor.u32 %v324, %v328
        %v335 = vunpack.c.l.b16 %v313
        %v336 = vunpack.c.h.b16 %v313
        %v337 = vunpack.c.l.b16 %v314
        %v338 = vunpack.c.h.b16 %v314
        %v339 = vunpack.c.l.b16 %v315
        %v340 = vunpack.c.h.b16 %v315
        %v341 = vunpack.c.l.b16 %v316
        %v342 = vunpack.c.h.b16 %v316
        %v343 = vunpack.c.l.b16 %v317
        %v344 = vunpack.c.h.b16 %v317
        %v345 = vpack.c.b16 %v337, %v335
        %v346 = vpack.c.b16 %v338, %v336
        %v347 = vpack.c.b16 %v341, %v339
        %v348 = vpack.c.b16 %v342, %v340
        %v349 = vpack.c.b16 %v343, %v343
        %v350 = vpack.c.b16 %v344, %v344
        %vm355 = vcmask 326656
        %v357 = vsel %vm355, %v329, 0
        %vm359 = vcmask 1043456
        %v361 = vsel %vm359, %v349, 0
        %v364 = vsel %vm359, %v350, 0
        %366 = vmatprep.subr.bf16.mxu0 %v346
        %367 = vmatpush1.bf16.msra.mxu0 %v345
        %368 = vmatprep.subr.bf16.mxu0 %v348
        %369 = vmatpush1.bf16.msra.mxu0 %v347
        %370 = vmatprep.subr.bf16.mxu0 %v364
        %371 = vmatpush1.bf16.msra.mxu0 %v361
        %372 = vmatprep.subr.bf16.mxu0 0
        %373 = vmatpush1.bf16.msra.mxu0 0
        %374 = vmatprep.subr.bf16.mxu0 0
        %375 = vmatpush1.bf16.msra.mxu0 0
        %376 = vmatprep.subr.bf16.mxu0 0
        %377 = vmatpush1.bf16.msra.mxu0 0
        %378 = vmatprep.subr.bf16.mxu0 0
        %379 = vmatpush1.bf16.msra.mxu0 0
        %380 = vmatprep.subr.bf16.mxu0 0
        %381 = vmatpush1.bf16.msra.mxu0 0
        %382 = vmatprep.subr.bf16.mxu0 0
        %383 = vmatpush1.bf16.msra.mxu0 0
        %384 = vmatprep.subr.bf16.mxu0 0
        %385 = vmatpush1.bf16.msra.mxu0 0
        %386 = vmatprep.subr.bf16.mxu0 0
        %387 = vmatpush1.bf16.msra.mxu0 0
        %388 = vmatprep.subr.bf16.mxu0 0
        %389 = vmatpush1.bf16.msra.mxu0 0
        %390 = vmatprep.subr.bf16.mxu0 0
        %391 = vmatpush1.bf16.msra.mxu0 0
        %392 = vmatprep.subr.bf16.mxu0 0
        %393 = vmatpush1.bf16.msra.mxu0 0
        %394 = vmatprep.subr.bf16.mxu0 0
        %395 = vmatpush1.bf16.msra.mxu0 0
        %396 = vmatprep.subr.bf16.mxu0 0
        %397 = vmatpush1.bf16.msra.mxu0 0
        %398 = vmatprep.mubr.bf16.mxu0 0
        %399 = vmatmul.mubr.bf16.gmra.mrb[0].mxu0 %v357
        %v400 = vpop.f32.mrb[0].mxu0
        %v401 = vadd.f32 0.0, %v400
        %v402 = vpop.f32.mrb[0].mxu0
        %v403 = vadd.f32 0.0, %v402
        %v404 = vpop.f32.mrb[0].mxu0
        %v405 = vpop.f32.mrb[0].mxu0
        %406 = vdwg.mxu0
        %v412 = vunpack.c.l.b16 %v306
        %v413 = vunpack.c.h.b16 %v306
        %v414 = vunpack.c.l.b16 %v307
        %v415 = vunpack.c.h.b16 %v307
        %v416 = vunpack.c.l.b16 %v308
        %v417 = vunpack.c.h.b16 %v308
        %v418 = vunpack.c.l.b16 %v309
        %v419 = vunpack.c.h.b16 %v309
        %v420 = vunpack.c.l.b16 %v310
        %v421 = vunpack.c.h.b16 %v310
        %v422 = vpack.c.b16 %v414, %v412
        %v423 = vpack.c.b16 %v415, %v413
        %v424 = vpack.c.b16 %v418, %v416
        %v425 = vpack.c.b16 %v419, %v417
        %v426 = vpack.c.b16 %v420, %v420
        %v427 = vpack.c.b16 %v421, %v421
        %v433 = vsel %vm355, %v305, 0
        %v436 = vsel %vm359, %v426, 0
        %v439 = vsel %vm359, %v427, 0
        %441 = vmatprep.subr.bf16.mxu0 %v423
        %442 = vmatpush1.bf16.msra.mxu0 %v422
        %443 = vmatprep.subr.bf16.mxu0 %v425
        %444 = vmatpush1.bf16.msra.mxu0 %v424
        %445 = vmatprep.subr.bf16.mxu0 %v439
        %446 = vmatpush1.bf16.msra.mxu0 %v436
        %447 = vmatprep.subr.bf16.mxu0 0
        %448 = vmatpush1.bf16.msra.mxu0 0
        %449 = vmatprep.subr.bf16.mxu0 0
        %450 = vmatpush1.bf16.msra.mxu0 0
        %451 = vmatprep.subr.bf16.mxu0 0
        %452 = vmatpush1.bf16.msra.mxu0 0
        %453 = vmatprep.subr.bf16.mxu0 0
        %454 = vmatpush1.bf16.msra.mxu0 0
        %455 = vmatprep.subr.bf16.mxu0 0
        %456 = vmatpush1.bf16.msra.mxu0 0
        %457 = vmatprep.subr.bf16.mxu0 0
        %458 = vmatpush1.bf16.msra.mxu0 0
        %459 = vmatprep.subr.bf16.mxu0 0
        %460 = vmatpush1.bf16.msra.mxu0 0
        %461 = vmatprep.subr.bf16.mxu0 0
        %462 = vmatpush1.bf16.msra.mxu0 0
        %463 = vmatprep.subr.bf16.mxu0 0
        %464 = vmatpush1.bf16.msra.mxu0 0
        %465 = vmatprep.subr.bf16.mxu0 0
        %466 = vmatpush1.bf16.msra.mxu0 0
        %467 = vmatprep.subr.bf16.mxu0 0
        %468 = vmatpush1.bf16.msra.mxu0 0
        %469 = vmatprep.subr.bf16.mxu0 0
        %470 = vmatpush1.bf16.msra.mxu0 0
        %471 = vmatprep.subr.bf16.mxu0 0
        %472 = vmatpush1.bf16.msra.mxu0 0
        %473 = vmatprep.mubr.bf16.mxu0 0
        %474 = vmatmul.mubr.bf16.gmra.mrb[0].mxu0 %v433
        %v475 = vpop.f32.mrb[0].mxu0
        %v476 = vadd.f32 %v401, %v475
        %v477 = vpop.f32.mrb[0].mxu0
        %v478 = vadd.f32 %v403, %v477
        %v479 = vpop.f32.mrb[0].mxu0
        %v480 = vpop.f32.mrb[0].mxu0
        %481 = vdwg.mxu0
        %v482 = vld [vmem:[#allocation2] sm:$0xe]
        %s483 = scalar_lea.vmem [#allocation4], 80
        %v484 = vld [vmem:[%s483] sm:$0xff]
        %v485 = vld [vmem:[%s483 + $0x8] sm:$0xff]
        %v486 = vld [vmem:[%s483 + $0x10] sm:$0xff]
        %v487 = vld [vmem:[%s483 + $0x18] sm:$0xff]
        %v488 = vld [vmem:[%s483 + $0x20] sm:$0xff]
        %v490 = vunpack.c.l.b16 %v482
        %v491 = vpack.c.b16 %v321, %v490
        %v492 = vrot.slane %v491, 1
        %v498 = vunpack.c.l.b16 %v484
        %v499 = vunpack.c.h.b16 %v484
        %v500 = vunpack.c.l.b16 %v485
        %v501 = vunpack.c.h.b16 %v485
        %v502 = vunpack.c.l.b16 %v486
        %v503 = vunpack.c.h.b16 %v486
        %v504 = vunpack.c.l.b16 %v487
        %v505 = vunpack.c.h.b16 %v487
        %v506 = vunpack.c.l.b16 %v488
        %v507 = vunpack.c.h.b16 %v488
        %v508 = vpack.c.b16 %v500, %v498
        %v509 = vpack.c.b16 %v501, %v499
        %v510 = vpack.c.b16 %v504, %v502
        %v511 = vpack.c.b16 %v505, %v503
        %v512 = vpack.c.b16 %v506, %v506
        %v513 = vpack.c.b16 %v507, %v507
        %v519 = vsel %vm355, %v492, 0
        %v522 = vsel %vm359, %v512, 0
        %v525 = vsel %vm359, %v513, 0
        %527 = vmatprep.subr.bf16.mxu0 %v509
        %528 = vmatpush1.bf16.msra.mxu0 %v508
        %529 = vmatprep.subr.bf16.mxu0 %v511
        %530 = vmatpush1.bf16.msra.mxu0 %v510
        %531 = vmatprep.subr.bf16.mxu0 %v525
        %532 = vmatpush1.bf16.msra.mxu0 %v522
        %533 = vmatprep.subr.bf16.mxu0 0
        %534 = vmatpush1.bf16.msra.mxu0 0
        %535 = vmatprep.subr.bf16.mxu0 0
        %536 = vmatpush1.bf16.msra.mxu0 0
        %537 = vmatprep.subr.bf16.mxu0 0
        %538 = vmatpush1.bf16.msra.mxu0 0
        %539 = vmatprep.subr.bf16.mxu0 0
        %540 = vmatpush1.bf16.msra.mxu0 0
        %541 = vmatprep.subr.bf16.mxu0 0
        %542 = vmatpush1.bf16.msra.mxu0 0
        %543 = vmatprep.subr.bf16.mxu0 0
        %544 = vmatpush1.bf16.msra.mxu0 0
        %545 = vmatprep.subr.bf16.mxu0 0
        %546 = vmatpush1.bf16.msra.mxu0 0
        %547 = vmatprep.subr.bf16.mxu0 0
        %548 = vmatpush1.bf16.msra.mxu0 0
        %549 = vmatprep.subr.bf16.mxu0 0
        %550 = vmatpush1.bf16.msra.mxu0 0
        %551 = vmatprep.subr.bf16.mxu0 0
        %552 = vmatpush1.bf16.msra.mxu0 0
        %553 = vmatprep.subr.bf16.mxu0 0
        %554 = vmatpush1.bf16.msra.mxu0 0
        %555 = vmatprep.subr.bf16.mxu0 0
        %556 = vmatpush1.bf16.msra.mxu0 0
        %557 = vmatprep.subr.bf16.mxu0 0
        %558 = vmatpush1.bf16.msra.mxu0 0
        %559 = vmatprep.mubr.bf16.mxu0 0
        %560 = vmatmul.mubr.bf16.gmra.mrb[0].mxu0 %v519
        %v561 = vpop.f32.mrb[0].mxu0
        %v562 = vadd.f32 0.0, %v561
        %v563 = vpop.f32.mrb[0].mxu0
        %v564 = vadd.f32 0.0, %v563
        %v565 = vpop.f32.mrb[0].mxu0
        %v566 = vpop.f32.mrb[0].mxu0
        %567 = vdwg.mxu0
        %v568 = vadd.f32 %v476, %v562
        %v569 = vadd.f32 %v478, %v564
        %v570 = vld [vmem:[#allocation6] sm:$0x3]
        %v572 = vlaneseq
        %v573 = vshrl.u32 %v572, 7
        %v574 = vsub.s32 0, %v573
        %v575 = vrot.slane %v570, %v574
        %v576 = vlaneseq
        %v577 = vshrl.u32 %v576, 7
        %v578 = vsub.s32 1, %v577
        %v579 = vrot.slane %v570, %v578
        %v582 = vadd.f32 %v568, %v575
        %v583 = vadd.f32 %v569, %v579
        %v584 = vmax.f32 %v582, 0.0
        %v585 = vmax.f32 %v583, 0.0
        %v586 = vpack.c.bf16 %v584, %v584
        %v587 = vpack.c.bf16 %v585, %v585
        %588 = vst [vmem:[#allocation3] sm:$0xff] 0
        %vm589 = vcmask 519168
        %590 = vst.msk [vmem:[#allocation3 + $0x8] sm:$0xf] %vm589, 0
        %591 = vst [vmem:[#allocation3 + $0xc] sm:$0x11] 0
        %vm592 = vcmask 516096
        %593 = vst.msk [vmem:[#allocation3 + $0x14] sm:$0x1] %vm592, 0
        %v596 = vunpack.c.l.b16 %v586
        %v597 = vunpack.c.l.b16 %v587
        %v598 = vpack.c.b16 %v597, %v596
        %v600 = vshrl.u32 %v598, 16
        %v602 = vrot.slane %v600, 7
        %v603 = vshll.u32 %v598, 16
        %v605 = vor.u32 %v602, %v603
        %v606 = vrot.slane %v602, 4
        %vm609 = vcmask 1043456
        %vm610 = vmand %vm609, %vm294
        %vm611 = vcmask 1047556
        %vm612 = vsmask.f32 7954
        %vm613 = vmand %vm611, %vm612
        %vm614 = vmor %vm613, %vm610
        %v615 = vld [vmem:[#allocation3] sm:$0xff]
        %v616 = vsel %vm614, %v605, %v615
        %617 = vst [vmem:[#allocation3] sm:$0xff] %v616
        %vm618 = vcmask 1040384
        %vm619 = vmand %vm618, %vm300
        %vm620 = vcmask 1044484
        %vm621 = vsmask.f32 4352
        %vm622 = vmand %vm620, %vm621
        %vm623 = vmor %vm622, %vm619
        %v624 = vld [vmem:[#allocation3 + $0xc] sm:$0x11]
        %v625 = vsel %vm623, %v606, %v624
        %626 = vst [vmem:[#allocation3 + $0xc] sm:$0x11] %v625
        %v627 = vld [vmem:[#allocation3] sm:$0xff]
        %v628 = vld [vmem:[#allocation3 + $0x8] sm:$0xf]
        %v629 = vld [vmem:[#allocation8] sm:$0xff]
        %v630 = vld [vmem:[#allocation8 + $0x8] sm:$0xff]
        %v631 = vld [vmem:[#allocation8 + $0x10] sm:$0xff]
        %v632 = vld [vmem:[#allocation8 + $0x18] sm:$0xff]
        %v633 = vld [vmem:[#allocation8 + $0x20] sm:$0xff]
        %v634 = vld [vmem:[#allocation8 + $0x28] sm:$0xff]
        %v635 = vld [vmem:[#allocation8 + $0x30] sm:$0xff]
        %v636 = vld [vmem:[#allocation8 + $0x38] sm:$0xff]
        %v637 = vld [vmem:[#allocation8 + $0x40] sm:$0xff]
        %v638 = vld [vmem:[#allocation8 + $0x48] sm:$0xff]
        %v639 = vld [vmem:[#allocation8 + $0x50] sm:$0xff]
        %v640 = vld [vmem:[#allocation8 + $0x58] sm:$0xff]
        %v641 = vld [vmem:[#allocation8 + $0x60] sm:$0xff]
        %v642 = vld [vmem:[#allocation8 + $0x68] sm:$0xff]
        %v643 = vld [vmem:[#allocation8 + $0x70] sm:$0xff]
        %v644 = vld [vmem:[#allocation8 + $0x78] sm:$0xff]
        %v645 = vld [vmem:[#allocation8 + $0x80] sm:$0xff]
        %v646 = vld [vmem:[#allocation8 + $0x88] sm:$0xff]
        %v647 = vld [vmem:[#allocation8 + $0x90] sm:$0xff]
        %v648 = vld [vmem:[#allocation8 + $0x98] sm:$0xff]
        %v649 = vld [vmem:[#allocation8 + $0xa0] sm:$0xff]
        %v650 = vld [vmem:[#allocation8 + $0xa8] sm:$0xff]
        %v651 = vld [vmem:[#allocation8 + $0xb0] sm:$0xff]
        %v652 = vld [vmem:[#allocation8 + $0xb8] sm:$0xff]
        %v653 = vld [vmem:[#allocation8 + $0xc0] sm:$0xff]
        %v654 = vld [vmem:[#allocation8 + $0xc8] sm:$0xff]
        %v655 = vld [vmem:[#allocation8 + $0xd0] sm:$0xff]
        %v656 = vld [vmem:[#allocation8 + $0xd8] sm:$0xff]
        %v657 = vld [vmem:[#allocation8 + $0xe0] sm:$0xff]
        %v658 = vld [vmem:[#allocation8 + $0xe8] sm:$0xff]
        %v659 = vld [vmem:[#allocation8 + $0xf0] sm:$0xff]
        %v660 = vld [vmem:[#allocation8 + $0xf8] sm:$0xff]
        %v661 = vld [vmem:[#allocation8 + $0x100] sm:$0xff]
        %v662 = vld [vmem:[#allocation8 + $0x108] sm:$0xff]
        %v663 = vld [vmem:[#allocation8 + $0x110] sm:$0xff]
        %v664 = vld [vmem:[#allocation8 + $0x118] sm:$0xff]
        %v665 = vld [vmem:[#allocation8 + $0x120] sm:$0xff]
        %v666 = vld [vmem:[#allocation8 + $0x128] sm:$0xff]
        %v667 = vld [vmem:[#allocation8 + $0x130] sm:$0xff]
        %v668 = vld [vmem:[#allocation8 + $0x138] sm:$0xff]
        %v669 = vld [vmem:[#allocation8 + $0x140] sm:$0xff]
        %v670 = vld [vmem:[#allocation8 + $0x148] sm:$0xff]
        %v671 = vld [vmem:[#allocation8 + $0x150] sm:$0xff]
        %v672 = vld [vmem:[#allocation8 + $0x158] sm:$0xff]
        %v673 = vld [vmem:[#allocation8 + $0x160] sm:$0xff]
        %v674 = vld [vmem:[#allocation8 + $0x168] sm:$0xff]
        %v675 = vld [vmem:[#allocation8 + $0x170] sm:$0xff]
        %v676 = vld [vmem:[#allocation8 + $0x178] sm:$0xff]
        %v677 = vld [vmem:[#allocation8 + $0x180] sm:$0xff]
        %v678 = vld [vmem:[#allocation8 + $0x188] sm:$0xff]
        %v679 = vld [vmem:[#allocation8 + $0x190] sm:$0xff]
        %v680 = vld [vmem:[#allocation8 + $0x198] sm:$0xff]
        %v681 = vld [vmem:[#allocation8 + $0x1a0] sm:$0xff]
        %v682 = vld [vmem:[#allocation8 + $0x1a8] sm:$0xff]
        %v683 = vld [vmem:[#allocation8 + $0x1b0] sm:$0xff]
        %v684 = vld [vmem:[#allocation8 + $0x1b8] sm:$0xff]
        %v685 = vld [vmem:[#allocation8 + $0x1c0] sm:$0xff]
        %v686 = vld [vmem:[#allocation8 + $0x1c8] sm:$0xff]
        %v687 = vld [vmem:[#allocation8 + $0x1d0] sm:$0xff]
        %v688 = vld [vmem:[#allocation8 + $0x1d8] sm:$0xff]
        %v689 = vld [vmem:[#allocation8 + $0x1e0] sm:$0xff]
        %v690 = vld [vmem:[#allocation8 + $0x1e8] sm:$0xff]
        %v691 = vld [vmem:[#allocation8 + $0x1f0] sm:$0xff]
        %v692 = vld [vmem:[#allocation8 + $0x1f8] sm:$0xff]
        %v693 = vld [vmem:[#allocation8 + $0x200] sm:$0xff]
        %v694 = vld [vmem:[#allocation8 + $0x208] sm:$0xff]
        %v695 = vld [vmem:[#allocation8 + $0x210] sm:$0xff]
        %v696 = vld [vmem:[#allocation8 + $0x218] sm:$0xff]
        %v697 = vld [vmem:[#allocation8 + $0x220] sm:$0xff]
        %v698 = vld [vmem:[#allocation8 + $0x228] sm:$0xff]
        %v699 = vld [vmem:[#allocation8 + $0x230] sm:$0xff]
        %v700 = vld [vmem:[#allocation8 + $0x238] sm:$0xff]
        %v701 = vld [vmem:[#allocation8 + $0x240] sm:$0xff]
        %v702 = vld [vmem:[#allocation8 + $0x248] sm:$0xff]
        %v703 = vld [vmem:[#allocation8 + $0x250] sm:$0xff]
        %v704 = vld [vmem:[#allocation8 + $0x258] sm:$0xff]
        %v705 = vld [vmem:[#allocation8 + $0x260] sm:$0xff]
        %v706 = vld [vmem:[#allocation8 + $0x268] sm:$0xff]
        %v707 = vld [vmem:[#allocation8 + $0x270] sm:$0xff]
        %v708 = vld [vmem:[#allocation8 + $0x278] sm:$0xff]
        %v709 = vld [vmem:[#allocation3 + $0xc] sm:$0x11]
        %v710 = vld [vmem:[#allocation3 + $0x14] sm:$0x1]
        %s711 = scalar_lea.vmem [#allocation8], 640
        %v712 = vld [vmem:[%s711] sm:$0xff]
        %v713 = vld [vmem:[%s711 + $0x8] sm:$0xff]
        %v714 = vld [vmem:[%s711 + $0x10] sm:$0xff]
        %v715 = vld [vmem:[%s711 + $0x18] sm:$0xff]
        %v716 = vld [vmem:[%s711 + $0x20] sm:$0xff]
        %v717 = vld [vmem:[%s711 + $0x28] sm:$0xff]
        %v718 = vld [vmem:[%s711 + $0x30] sm:$0xff]
        %v719 = vld [vmem:[%s711 + $0x38] sm:$0xff]
        %v720 = vld [vmem:[%s711 + $0x40] sm:$0xff]
        %v721 = vld [vmem:[%s711 + $0x48] sm:$0xff]
        %v722 = vld [vmem:[%s711 + $0x50] sm:$0xff]
        %v723 = vld [vmem:[%s711 + $0x58] sm:$0xff]
        %v724 = vld [vmem:[%s711 + $0x60] sm:$0xff]
        %v725 = vld [vmem:[%s711 + $0x68] sm:$0xff]
        %v726 = vld [vmem:[%s711 + $0x70] sm:$0xff]
        %v727 = vld [vmem:[%s711 + $0x78] sm:$0xff]
        %v728 = vld [vmem:[%s711 + $0x80] sm:$0xff]
        %v729 = vld [vmem:[%s711 + $0x88] sm:$0xff]
        %v730 = vld [vmem:[%s711 + $0x90] sm:$0xff]
        %v731 = vld [vmem:[%s711 + $0x98] sm:$0xff]
        %v732 = vld [vmem:[%s711 + $0xa0] sm:$0xff]
        %v733 = vld [vmem:[%s711 + $0xa8] sm:$0xff]
        %v734 = vld [vmem:[%s711 + $0xb0] sm:$0xff]
        %v735 = vld [vmem:[%s711 + $0xb8] sm:$0xff]
        %v736 = vld [vmem:[%s711 + $0xc0] sm:$0xff]
        %v737 = vld [vmem:[%s711 + $0xc8] sm:$0xff]
        %v738 = vld [vmem:[%s711 + $0xd0] sm:$0xff]
        %v739 = vld [vmem:[%s711 + $0xd8] sm:$0xff]
        %v740 = vld [vmem:[%s711 + $0xe0] sm:$0xff]
        %v741 = vld [vmem:[%s711 + $0xe8] sm:$0xff]
        %v742 = vld [vmem:[%s711 + $0xf0] sm:$0xff]
        %v743 = vld [vmem:[%s711 + $0xf8] sm:$0xff]
        %v744 = vld [vmem:[%s711 + $0x100] sm:$0xff]
        %v745 = vld [vmem:[%s711 + $0x108] sm:$0xff]
        %v746 = vld [vmem:[%s711 + $0x110] sm:$0xff]
        %v747 = vld [vmem:[%s711 + $0x118] sm:$0xff]
        %v748 = vld [vmem:[%s711 + $0x120] sm:$0xff]
        %v749 = vld [vmem:[%s711 + $0x128] sm:$0xff]
        %v750 = vld [vmem:[%s711 + $0x130] sm:$0xff]
        %v751 = vld [vmem:[%s711 + $0x138] sm:$0xff]
        %v752 = vld [vmem:[%s711 + $0x140] sm:$0xff]
        %v753 = vld [vmem:[%s711 + $0x148] sm:$0xff]
        %v754 = vld [vmem:[%s711 + $0x150] sm:$0xff]
        %v755 = vld [vmem:[%s711 + $0x158] sm:$0xff]
        %v756 = vld [vmem:[%s711 + $0x160] sm:$0xff]
        %v757 = vld [vmem:[%s711 + $0x168] sm:$0xff]
        %v758 = vld [vmem:[%s711 + $0x170] sm:$0xff]
        %v759 = vld [vmem:[%s711 + $0x178] sm:$0xff]
        %v760 = vld [vmem:[%s711 + $0x180] sm:$0xff]
        %v761 = vld [vmem:[%s711 + $0x188] sm:$0xff]
        %v762 = vld [vmem:[%s711 + $0x190] sm:$0xff]
        %v763 = vld [vmem:[%s711 + $0x198] sm:$0xff]
        %v764 = vld [vmem:[%s711 + $0x1a0] sm:$0xff]
        %v765 = vld [vmem:[%s711 + $0x1a8] sm:$0xff]
        %v766 = vld [vmem:[%s711 + $0x1b0] sm:$0xff]
        %v767 = vld [vmem:[%s711 + $0x1b8] sm:$0xff]
        %v768 = vld [vmem:[%s711 + $0x1c0] sm:$0xff]
        %v769 = vld [vmem:[%s711 + $0x1c8] sm:$0xff]
        %v770 = vld [vmem:[%s711 + $0x1d0] sm:$0xff]
        %v771 = vld [vmem:[%s711 + $0x1d8] sm:$0xff]
        %v772 = vld [vmem:[%s711 + $0x1e0] sm:$0xff]
        %v773 = vld [vmem:[%s711 + $0x1e8] sm:$0xff]
        %v774 = vld [vmem:[%s711 + $0x1f0] sm:$0xff]
        %v775 = vld [vmem:[%s711 + $0x1f8] sm:$0xff]
        %v776 = vld [vmem:[%s711 + $0x200] sm:$0xff]
        %v777 = vld [vmem:[%s711 + $0x208] sm:$0xff]
        %v778 = vld [vmem:[%s711 + $0x210] sm:$0xff]
        %v779 = vld [vmem:[%s711 + $0x218] sm:$0xff]
        %v780 = vld [vmem:[%s711 + $0x220] sm:$0xff]
        %v781 = vld [vmem:[%s711 + $0x228] sm:$0xff]
        %v782 = vld [vmem:[%s711 + $0x230] sm:$0xff]
        %v783 = vld [vmem:[%s711 + $0x238] sm:$0xff]
        %v784 = vld [vmem:[%s711 + $0x240] sm:$0xff]
        %v785 = vld [vmem:[%s711 + $0x248] sm:$0xff]
        %v786 = vld [vmem:[%s711 + $0x250] sm:$0xff]
        %v787 = vld [vmem:[%s711 + $0x258] sm:$0xff]
        %v788 = vld [vmem:[%s711 + $0x260] sm:$0xff]
        %v789 = vld [vmem:[%s711 + $0x268] sm:$0xff]
        %v790 = vld [vmem:[%s711 + $0x270] sm:$0xff]
        %v791 = vld [vmem:[%s711 + $0x278] sm:$0xff]
        %v796 = vunpack.c.l.b16 %v627
        %v797 = vunpack.c.h.b16 %v627
        %v798 = vunpack.c.l.b16 %v628
        %v799 = vunpack.c.l.b16 %v709
        %v800 = vunpack.c.h.b16 %v709
        %v801 = vunpack.c.l.b16 %v710
        %v802 = vpack.c.b16 %v799, %v796
        %v803 = vpack.c.b16 %v800, %v797
        %v804 = vpack.c.b16 %v801, %v798
        %v806 = vshrl.u32 %v802, 16
        %v808 = vshll.u32 %v802, 16
        %v810 = vrot.slane %v808, 1
        %v811 = vor.u32 %v806, %v810
        %v813 = vshrl.u32 %v803, 16
        %v815 = vshll.u32 %v803, 16
        %v817 = vrot.slane %v815, 1
        %v818 = vor.u32 %v813, %v817
        %v820 = vshrl.u32 %v804, 16
        %v822 = vshll.u32 %v804, 16
        %v824 = vrot.slane %v822, 1
        %v825 = vor.u32 %v820, %v824
        %v908 = vunpack.c.l.b16 %v712
        %v909 = vunpack.c.h.b16 %v712
        %v910 = vunpack.c.l.b16 %v713
        %v911 = vunpack.c.h.b16 %v713
        %v912 = vunpack.c.l.b16 %v714
        %v913 = vunpack.c.h.b16 %v714
        %v914 = vunpack.c.l.b16 %v715
        %v915 = vunpack.c.h.b16 %v715
        %v916 = vunpack.c.l.b16 %v716
        %v917 = vunpack.c.h.b16 %v716
        %v918 = vunpack.c.l.b16 %v717
        %v919 = vunpack.c.h.b16 %v717
        %v920 = vunpack.c.l.b16 %v718
        %v921 = vunpack.c.h.b16 %v718
        %v922 = vunpack.c.l.b16 %v719
        %v923 = vunpack.c.h.b16 %v719
        %v924 = vunpack.c.l.b16 %v720
        %v925 = vunpack.c.h.b16 %v720
        %v926 = vunpack.c.l.b16 %v721
        %v927 = vunpack.c.h.b16 %v721
        %v928 = vunpack.c.l.b16 %v722
        %v929 = vunpack.c.h.b16 %v722
        %v930 = vunpack.c.l.b16 %v723
        %v931 = vunpack.c.h.b16 %v723
        %v932 = vunpack.c.l.b16 %v724
        %v933 = vunpack.c.h.b16 %v724
        %v934 = vunpack.c.l.b16 %v725
        %v935 = vunpack.c.h.b16 %v725
        %v936 = vunpack.c.l.b16 %v726
        %v937 = vunpack.c.h.b16 %v726
        %v938 = vunpack.c.l.b16 %v727
        %v939 = vunpack.c.h.b16 %v727
        %v940 = vunpack.c.l.b16 %v728
        %v941 = vunpack.c.h.b16 %v728
        %v942 = vunpack.c.l.b16 %v729
        %v943 = vunpack.c.h.b16 %v729
        %v944 = vunpack.c.l.b16 %v730
        %v945 = vunpack.c.h.b16 %v730
        %v946 = vunpack.c.l.b16 %v731
        %v947 = vunpack.c.h.b16 %v731
        %v948 = vunpack.c.l.b16 %v732
        %v949 = vunpack.c.h.b16 %v732
        %v950 = vunpack.c.l.b16 %v733
        %v951 = vunpack.c.h.b16 %v733
        %v952 = vunpack.c.l.b16 %v734
        %v953 = vunpack.c.h.b16 %v734
        %v954 = vunpack.c.l.b16 %v735
        %v955 = vunpack.c.h.b16 %v735
        %v956 = vunpack.c.l.b16 %v736
        %v957 = vunpack.c.h.b16 %v736
        %v958 = vunpack.c.l.b16 %v737
        %v959 = vunpack.c.h.b16 %v737
        %v960 = vunpack.c.l.b16 %v738
        %v961 = vunpack.c.h.b16 %v738
        %v962 = vunpack.c.l.b16 %v739
        %v963 = vunpack.c.h.b16 %v739
        %v964 = vunpack.c.l.b16 %v740
        %v965 = vunpack.c.h.b16 %v740
        %v966 = vunpack.c.l.b16 %v741
        %v967 = vunpack.c.h.b16 %v741
        %v968 = vunpack.c.l.b16 %v742
        %v969 = vunpack.c.h.b16 %v742
        %v970 = vunpack.c.l.b16 %v743
        %v971 = vunpack.c.h.b16 %v743
        %v972 = vunpack.c.l.b16 %v744
        %v973 = vunpack.c.h.b16 %v744
        %v974 = vunpack.c.l.b16 %v745
        %v975 = vunpack.c.h.b16 %v745
        %v976 = vunpack.c.l.b16 %v746
        %v977 = vunpack.c.h.b16 %v746
        %v978 = vunpack.c.l.b16 %v747
        %v979 = vunpack.c.h.b16 %v747
        %v980 = vunpack.c.l.b16 %v748
        %v981 = vunpack.c.h.b16 %v748
        %v982 = vunpack.c.l.b16 %v749
        %v983 = vunpack.c.h.b16 %v749
        %v984 = vunpack.c.l.b16 %v750
        %v985 = vunpack.c.h.b16 %v750
        %v986 = vunpack.c.l.b16 %v751
        %v987 = vunpack.c.h.b16 %v751
        %v988 = vunpack.c.l.b16 %v752
        %v989 = vunpack.c.h.b16 %v752
        %v990 = vunpack.c.l.b16 %v753
        %v991 = vunpack.c.h.b16 %v753
        %v992 = vunpack.c.l.b16 %v754
        %v993 = vunpack.c.h.b16 %v754
        %v994 = vunpack.c.l.b16 %v755
        %v995 = vunpack.c.h.b16 %v755
        %v996 = vunpack.c.l.b16 %v756
        %v997 = vunpack.c.h.b16 %v756
        %v998 = vunpack.c.l.b16 %v757
        %v999 = vunpack.c.h.b16 %v757
        %v1000 = vunpack.c.l.b16 %v758
        %v1001 = vunpack.c.h.b16 %v758
        %v1002 = vunpack.c.l.b16 %v759
        %v1003 = vunpack.c.h.b16 %v759
        %v1004 = vunpack.c.l.b16 %v760
        %v1005 = vunpack.c.h.b16 %v760
        %v1006 = vunpack.c.l.b16 %v761
        %v1007 = vunpack.c.h.b16 %v761
        %v1008 = vunpack.c.l.b16 %v762
        %v1009 = vunpack.c.h.b16 %v762
        %v1010 = vunpack.c.l.b16 %v763
        %v1011 = vunpack.c.h.b16 %v763
        %v1012 = vunpack.c.l.b16 %v764
        %v1013 = vunpack.c.h.b16 %v764
        %v1014 = vunpack.c.l.b16 %v765
        %v1015 = vunpack.c.h.b16 %v765
        %v1016 = vunpack.c.l.b16 %v766
        %v1017 = vunpack.c.h.b16 %v766
        %v1018 = vunpack.c.l.b16 %v767
        %v1019 = vunpack.c.h.b16 %v767
        %v1020 = vunpack.c.l.b16 %v768
        %v1021 = vunpack.c.h.b16 %v768
        %v1022 = vunpack.c.l.b16 %v769
        %v1023 = vunpack.c.h.b16 %v769
        %v1024 = vunpack.c.l.b16 %v770
        %v1025 = vunpack.c.h.b16 %v770
        %v1026 = vunpack.c.l.b16 %v771
        %v1027 = vunpack.c.h.b16 %v771
        %v1028 = vunpack.c.l.b16 %v772
        %v1029 = vunpack.c.h.b16 %v772
        %v1030 = vunpack.c.l.b16 %v773
        %v1031 = vunpack.c.h.b16 %v773
        %v1032 = vunpack.c.l.b16 %v774
        %v1033 = vunpack.c.h.b16 %v774
        %v1034 = vunpack.c.l.b16 %v775
        %v1035 = vunpack.c.h.b16 %v775
        %v1036 = vunpack.c.l.b16 %v776
        %v1037 = vunpack.c.h.b16 %v776
        %v1038 = vunpack.c.l.b16 %v777
        %v1039 = vunpack.c.h.b16 %v777
        %v1040 = vunpack.c.l.b16 %v778
        %v1041 = vunpack.c.h.b16 %v778
        %v1042 = vunpack.c.l.b16 %v779
        %v1043 = vunpack.c.h.b16 %v779
        %v1044 = vunpack.c.l.b16 %v780
        %v1045 = vunpack.c.h.b16 %v780
        %v1046 = vunpack.c.l.b16 %v781
        %v1047 = vunpack.c.h.b16 %v781
        %v1048 = vunpack.c.l.b16 %v782
        %v1049 = vunpack.c.h.b16 %v782
        %v1050 = vunpack.c.l.b16 %v783
        %v1051 = vunpack.c.h.b16 %v783
        %v1052 = vunpack.c.l.b16 %v784
        %v1053 = vunpack.c.h.b16 %v784
        %v1054 = vunpack.c.l.b16 %v785
        %v1055 = vunpack.c.h.b16 %v785
        %v1056 = vunpack.c.l.b16 %v786
        %v1057 = vunpack.c.h.b16 %v786
        %v1058 = vunpack.c.l.b16 %v787
        %v1059 = vunpack.c.h.b16 %v787
        %v1060 = vunpack.c.l.b16 %v788
        %v1061 = vunpack.c.h.b16 %v788
        %v1062 = vunpack.c.l.b16 %v789
        %v1063 = vunpack.c.h.b16 %v789
        %v1064 = vunpack.c.l.b16 %v790
        %v1065 = vunpack.c.h.b16 %v790
        %v1066 = vunpack.c.l.b16 %v791
        %v1067 = vunpack.c.h.b16 %v791
        %v1068 = vpack.c.b16 %v912, %v908
        %v1069 = vpack.c.b16 %v913, %v909
        %v1070 = vpack.c.b16 %v914, %v910
        %v1071 = vpack.c.b16 %v915, %v911
        %v1072 = vpack.c.b16 %v920, %v916
        %v1073 = vpack.c.b16 %v921, %v917
        %v1074 = vpack.c.b16 %v922, %v918
        %v1075 = vpack.c.b16 %v923, %v919
        %v1076 = vpack.c.b16 %v928, %v924
        %v1077 = vpack.c.b16 %v929, %v925
        %v1078 = vpack.c.b16 %v930, %v926
        %v1079 = vpack.c.b16 %v931, %v927
        %v1080 = vpack.c.b16 %v936, %v932
        %v1081 = vpack.c.b16 %v937, %v933
        %v1082 = vpack.c.b16 %v938, %v934
        %v1083 = vpack.c.b16 %v939, %v935
        %v1084 = vpack.c.b16 %v944, %v940
        %v1085 = vpack.c.b16 %v945, %v941
        %v1086 = vpack.c.b16 %v946, %v942
        %v1087 = vpack.c.b16 %v947, %v943
        %v1088 = vpack.c.b16 %v952, %v948
        %v1089 = vpack.c.b16 %v953, %v949
        %v1090 = vpack.c.b16 %v954, %v950
        %v1091 = vpack.c.b16 %v955, %v951
        %v1092 = vpack.c.b16 %v960, %v956
        %v1093 = vpack.c.b16 %v961, %v957
        %v1094 = vpack.c.b16 %v962, %v958
        %v1095 = vpack.c.b16 %v963, %v959
        %v1096 = vpack.c.b16 %v968, %v964
        %v1097 = vpack.c.b16 %v969, %v965
        %v1098 = vpack.c.b16 %v970, %v966
        %v1099 = vpack.c.b16 %v971, %v967
        %v1100 = vpack.c.b16 %v976, %v972
        %v1101 = vpack.c.b16 %v977, %v973
        %v1102 = vpack.c.b16 %v978, %v974
        %v1103 = vpack.c.b16 %v979, %v975
        %v1104 = vpack.c.b16 %v984, %v980
        %v1105 = vpack.c.b16 %v985, %v981
        %v1106 = vpack.c.b16 %v986, %v982
        %v1107 = vpack.c.b16 %v987, %v983
        %v1108 = vpack.c.b16 %v992, %v988
        %v1109 = vpack.c.b16 %v993, %v989
        %v1110 = vpack.c.b16 %v994, %v990
        %v1111 = vpack.c.b16 %v995, %v991
        %v1112 = vpack.c.b16 %v1000, %v996
        %v1113 = vpack.c.b16 %v1001, %v997
        %v1114 = vpack.c.b16 %v1002, %v998
        %v1115 = vpack.c.b16 %v1003, %v999
        %v1116 = vpack.c.b16 %v1008, %v1004
        %v1117 = vpack.c.b16 %v1009, %v1005
        %v1118 = vpack.c.b16 %v1010, %v1006
        %v1119 = vpack.c.b16 %v1011, %v1007
        %v1120 = vpack.c.b16 %v1016, %v1012
        %v1121 = vpack.c.b16 %v1017, %v1013
        %v1122 = vpack.c.b16 %v1018, %v1014
        %v1123 = vpack.c.b16 %v1019, %v1015
        %v1124 = vpack.c.b16 %v1024, %v1020
        %v1125 = vpack.c.b16 %v1025, %v1021
        %v1126 = vpack.c.b16 %v1026, %v1022
        %v1127 = vpack.c.b16 %v1027, %v1023
        %v1128 = vpack.c.b16 %v1032, %v1028
        %v1129 = vpack.c.b16 %v1033, %v1029
        %v1130 = vpack.c.b16 %v1034, %v1030
        %v1131 = vpack.c.b16 %v1035, %v1031
        %v1132 = vpack.c.b16 %v1040, %v1036
        %v1133 = vpack.c.b16 %v1041, %v1037
        %v1134 = vpack.c.b16 %v1042, %v1038
        %v1135 = vpack.c.b16 %v1043, %v1039
        %v1136 = vpack.c.b16 %v1048, %v1044
        %v1137 = vpack.c.b16 %v1049, %v1045
        %v1138 = vpack.c.b16 %v1050, %v1046
        %v1139 = vpack.c.b16 %v1051, %v1047
        %v1140 = vpack.c.b16 %v1056, %v1052
        %v1141 = vpack.c.b16 %v1057, %v1053
        %v1142 = vpack.c.b16 %v1058, %v1054
        %v1143 = vpack.c.b16 %v1059, %v1055
        %v1144 = vpack.c.b16 %v1064, %v1060
        %v1145 = vpack.c.b16 %v1065, %v1061
        %v1146 = vpack.c.b16 %v1066, %v1062
        %v1147 = vpack.c.b16 %v1067, %v1063
        %vm1228 = vcmask 523264
        %v1230 = vsel %vm1228, %v825, 0
        %1232 = vmatprep.subr.bf16.mxu0 %v1069
        %1233 = vmatpush1.bf16.msra.mxu0 %v1068
        %1234 = vmatprep.subr.bf16.mxu0 %v1073
        %1235 = vmatpush1.bf16.msra.mxu0 %v1072
        %1236 = vmatprep.subr.bf16.mxu0 %v1077
        %1237 = vmatpush1.bf16.msra.mxu0 %v1076
        %1238 = vmatprep.subr.bf16.mxu0 %v1081
        %1239 = vmatpush1.bf16.msra.mxu0 %v1080
        %1240 = vmatprep.subr.bf16.mxu0 %v1085
        %1241 = vmatpush1.bf16.msra.mxu0 %v1084
        %1242 = vmatprep.subr.bf16.mxu0 %v1089
        %1243 = vmatpush1.bf16.msra.mxu0 %v1088
        %1244 = vmatprep.subr.bf16.mxu0 %v1093
        %1245 = vmatpush1.bf16.msra.mxu0 %v1092
        %1246 = vmatprep.subr.bf16.mxu0 %v1097
        %1247 = vmatpush1.bf16.msra.mxu0 %v1096
        %1248 = vmatprep.subr.bf16.mxu0 %v1101
        %1249 = vmatpush1.bf16.msra.mxu0 %v1100
        %1250 = vmatprep.subr.bf16.mxu0 %v1105
        %1251 = vmatpush1.bf16.msra.mxu0 %v1104
        %1252 = vmatprep.subr.bf16.mxu0 %v1109
        %1253 = vmatpush1.bf16.msra.mxu0 %v1108
        %1254 = vmatprep.subr.bf16.mxu0 %v1113
        %1255 = vmatpush1.bf16.msra.mxu0 %v1112
        %1256 = vmatprep.subr.bf16.mxu0 %v1117
        %1257 = vmatpush1.bf16.msra.mxu0 %v1116
        %1258 = vmatprep.subr.bf16.mxu0 %v1121
        %1259 = vmatpush1.bf16.msra.mxu0 %v1120
        %1260 = vmatprep.subr.bf16.mxu0 %v1125
        %1261 = vmatpush1.bf16.msra.mxu0 %v1124
        %1262 = vmatprep.subr.bf16.mxu0 %v1129
        %1263 = vmatpush1.bf16.msra.mxu0 %v1128
        %1264 = vmatprep.mubr.bf16.mxu0 %v818
        %1265 = vmatmul.mubr.bf16.gmra.mrb[0].mxu0 %v811
        %v1266 = vpop.f32.mrb[0].mxu0
        %v1267 = vadd.f32 0.0, %v1266
        %v1268 = vpop.f32.mrb[0].mxu0
        %v1269 = vadd.f32 0.0, %v1268
        %v1270 = vpop.f32.mrb[0].mxu0
        %v1271 = vpop.f32.mrb[0].mxu0
        %1272 = vdwg.mxu0
        %1273 = vmatprep.subr.bf16.mxu0 %v1133
        %1274 = vmatpush1.bf16.msra.mxu0 %v1132
        %1275 = vmatprep.subr.bf16.mxu0 %v1137
        %1276 = vmatpush1.bf16.msra.mxu0 %v1136
        %1277 = vmatprep.subr.bf16.mxu0 %v1141
        %1278 = vmatpush1.bf16.msra.mxu0 %v1140
        %1279 = vmatprep.subr.bf16.mxu0 %v1145
        %1280 = vmatpush1.bf16.msra.mxu0 %v1144
        %1281 = vmatprep.subr.bf16.mxu0 0
        %1282 = vmatpush1.bf16.msra.mxu0 0
        %1283 = vmatprep.subr.bf16.mxu0 0
        %1284 = vmatpush1.bf16.msra.mxu0 0
        %1285 = vmatprep.subr.bf16.mxu0 0
        %1286 = vmatpush1.bf16.msra.mxu0 0
        %1287 = vmatprep.subr.bf16.mxu0 0
        %1288 = vmatpush1.bf16.msra.mxu0 0
        %1289 = vmatprep.subr.bf16.mxu0 0
        %1290 = vmatpush1.bf16.msra.mxu0 0
        %1291 = vmatprep.subr.bf16.mxu0 0
        %1292 = vmatpush1.bf16.msra.mxu0 0
        %1293 = vmatprep.subr.bf16.mxu0 0
        %1294 = vmatpush1.bf16.msra.mxu0 0
        %1295 = vmatprep.subr.bf16.mxu0 0
        %1296 = vmatpush1.bf16.msra.mxu0 0
        %1297 = vmatprep.subr.bf16.mxu0 0
        %1298 = vmatpush1.bf16.msra.mxu0 0
        %1299 = vmatprep.subr.bf16.mxu0 0
        %1300 = vmatpush1.bf16.msra.mxu0 0
        %1301 = vmatprep.subr.bf16.mxu0 0
        %1302 = vmatpush1.bf16.msra.mxu0 0
        %1303 = vmatprep.subr.bf16.mxu0 0
        %1304 = vmatpush1.bf16.msra.mxu0 0
        %1305 = vmatprep.mubr.bf16.mxu0 0
        %1306 = vmatmul.mubr.bf16.gmra.mrb[0].mxu0 %v1230
        %v1307 = vpop.f32.mrb[0].mxu0
        %v1308 = vadd.f32 %v1267, %v1307
        %v1309 = vpop.f32.mrb[0].mxu0
        %v1310 = vadd.f32 %v1269, %v1309
        %v1311 = vpop.f32.mrb[0].mxu0
        %v1312 = vpop.f32.mrb[0].mxu0
        %1313 = vdwg.mxu0
        %1314 = vmatprep.subr.bf16.mxu0 %v1071
        %1315 = vmatpush1.bf16.msra.mxu0 %v1070
        %1316 = vmatprep.subr.bf16.mxu0 %v1075
        %1317 = vmatpush1.bf16.msra.mxu0 %v1074
        %1318 = vmatprep.subr.bf16.mxu0 %v1079
        %1319 = vmatpush1.bf16.msra.mxu0 %v1078
        %1320 = vmatprep.subr.bf16.mxu0 %v1083
        %1321 = vmatpush1.bf16.msra.mxu0 %v1082
        %1322 = vmatprep.subr.bf16.mxu0 %v1087
        %1323 = vmatpush1.bf16.msra.mxu0 %v1086
        %1324 = vmatprep.subr.bf16.mxu0 %v1091
        %1325 = vmatpush1.bf16.msra.mxu0 %v1090
        %1326 = vmatprep.subr.bf16.mxu0 %v1095
        %1327 = vmatpush1.bf16.msra.mxu0 %v1094
        %1328 = vmatprep.subr.bf16.mxu0 %v1099
        %1329 = vmatpush1.bf16.msra.mxu0 %v1098
        %1330 = vmatprep.subr.bf16.mxu0 %v1103
        %1331 = vmatpush1.bf16.msra.mxu0 %v1102
        %1332 = vmatprep.subr.bf16.mxu0 %v1107
        %1333 = vmatpush1.bf16.msra.mxu0 %v1106
        %1334 = vmatprep.subr.bf16.mxu0 %v1111
        %1335 = vmatpush1.bf16.msra.mxu0 %v1110
        %1336 = vmatprep.subr.bf16.mxu0 %v1115
        %1337 = vmatpush1.bf16.msra.mxu0 %v1114
        %1338 = vmatprep.subr.bf16.mxu0 %v1119
        %1339 = vmatpush1.bf16.msra.mxu0 %v1118
        %1340 = vmatprep.subr.bf16.mxu0 %v1123
        %1341 = vmatpush1.bf16.msra.mxu0 %v1122
        %1342 = vmatprep.subr.bf16.mxu0 %v1127
        %1343 = vmatpush1.bf16.msra.mxu0 %v1126
        %1344 = vmatprep.subr.bf16.mxu0 %v1131
        %1345 = vmatpush1.bf16.msra.mxu0 %v1130
        %1346 = vmatprep.mubr.bf16.mxu0 %v818
        %1347 = vmatmul.mubr.bf16.gmra.mrb[0].mxu0 %v811
        %v1348 = vpop.f32.mrb[0].mxu0
        %v1349 = vadd.f32 0.0, %v1348
        %v1350 = vpop.f32.mrb[0].mxu0
        %v1351 = vadd.f32 0.0, %v1350
        %v1352 = vpop.f32.mrb[0].mxu0
        %v1353 = vpop.f32.mrb[0].mxu0
        %1354 = vdwg.mxu0
        %1355 = vmatprep.subr.bf16.mxu0 %v1135
        %1356 = vmatpush1.bf16.msra.mxu0 %v1134
        %1357 = vmatprep.subr.bf16.mxu0 %v1139
        %1358 = vmatpush1.bf16.msra.mxu0 %v1138
        %1359 = vmatprep.subr.bf16.mxu0 %v1143
        %1360 = vmatpush1.bf16.msra.mxu0 %v1142
        %1361 = vmatprep.subr.bf16.mxu0 %v1147
        %1362 = vmatpush1.bf16.msra.mxu0 %v1146
        %1363 = vmatprep.subr.bf16.mxu0 0
        %1364 = vmatpush1.bf16.msra.mxu0 0
        %1365 = vmatprep.subr.bf16.mxu0 0
        %1366 = vmatpush1.bf16.msra.mxu0 0
        %1367 = vmatprep.subr.bf16.mxu0 0
        %1368 = vmatpush1.bf16.msra.mxu0 0
        %1369 = vmatprep.subr.bf16.mxu0 0
        %1370 = vmatpush1.bf16.msra.mxu0 0
        %1371 = vmatprep.subr.bf16.mxu0 0
        %1372 = vmatpush1.bf16.msra.mxu0 0
        %1373 = vmatprep.subr.bf16.mxu0 0
        %1374 = vmatpush1.bf16.msra.mxu0 0
        %1375 = vmatprep.subr.bf16.mxu0 0
        %1376 = vmatpush1.bf16.msra.mxu0 0
        %1377 = vmatprep.subr.bf16.mxu0 0
        %1378 = vmatpush1.bf16.msra.mxu0 0
        %1379 = vmatprep.subr.bf16.mxu0 0
        %1380 = vmatpush1.bf16.msra.mxu0 0
        %1381 = vmatprep.subr.bf16.mxu0 0
        %1382 = vmatpush1.bf16.msra.mxu0 0
        %1383 = vmatprep.subr.bf16.mxu0 0
        %1384 = vmatpush1.bf16.msra.mxu0 0
        %1385 = vmatprep.subr.bf16.mxu0 0
        %1386 = vmatpush1.bf16.msra.mxu0 0
        %1387 = vmatprep.mubr.bf16.mxu0 0
        %1388 = vmatmul.mubr.bf16.gmra.mrb[0].mxu0 %v1230
        %v1389 = vpop.f32.mrb[0].mxu0
        %v1390 = vadd.f32 %v1349, %v1389
        %v1391 = vpop.f32.mrb[0].mxu0
        %v1392 = vadd.f32 %v1351, %v1391
        %v1393 = vpop.f32.mrb[0].mxu0
        %v1394 = vpop.f32.mrb[0].mxu0
        %1395 = vdwg.mxu0
        %v1396 = vpack.c.b16 %v796, %v796
        %v1397 = vpack.c.b16 %v797, %v797
        %v1398 = vpack.c.b16 %v798, %v798
        %v1481 = vunpack.c.l.b16 %v629
        %v1482 = vunpack.c.h.b16 %v629
        %v1483 = vunpack.c.l.b16 %v630
        %v1484 = vunpack.c.h.b16 %v630
        %v1485 = vunpack.c.l.b16 %v631
        %v1486 = vunpack.c.h.b16 %v631
        %v1487 = vunpack.c.l.b16 %v632
        %v1488 = vunpack.c.h.b16 %v632
        %v1489 = vunpack.c.l.b16 %v633
        %v1490 = vunpack.c.h.b16 %v633
        %v1491 = vunpack.c.l.b16 %v634
        %v1492 = vunpack.c.h.b16 %v634
        %v1493 = vunpack.c.l.b16 %v635
        %v1494 = vunpack.c.h.b16 %v635
        %v1495 = vunpack.c.l.b16 %v636
        %v1496 = vunpack.c.h.b16 %v636
        %v1497 = vunpack.c.l.b16 %v637
        %v1498 = vunpack.c.h.b16 %v637
        %v1499 = vunpack.c.l.b16 %v638
        %v1500 = vunpack.c.h.b16 %v638
        %v1501 = vunpack.c.l.b16 %v639
        %v1502 = vunpack.c.h.b16 %v639
        %v1503 = vunpack.c.l.b16 %v640
        %v1504 = vunpack.c.h.b16 %v640
        %v1505 = vunpack.c.l.b16 %v641
        %v1506 = vunpack.c.h.b16 %v641
        %v1507 = vunpack.c.l.b16 %v642
        %v1508 = vunpack.c.h.b16 %v642
        %v1509 = vunpack.c.l.b16 %v643
        %v1510 = vunpack.c.h.b16 %v643
        %v1511 = vunpack.c.l.b16 %v644
        %v1512 = vunpack.c.h.b16 %v644
        %v1513 = vunpack.c.l.b16 %v645
        %v1514 = vunpack.c.h.b16 %v645
        %v1515 = vunpack.c.l.b16 %v646
        %v1516 = vunpack.c.h.b16 %v646
        %v1517 = vunpack.c.l.b16 %v647
        %v1518 = vunpack.c.h.b16 %v647
        %v1519 = vunpack.c.l.b16 %v648
        %v1520 = vunpack.c.h.b16 %v648
        %v1521 = vunpack.c.l.b16 %v649
        %v1522 = vunpack.c.h.b16 %v649
        %v1523 = vunpack.c.l.b16 %v650
        %v1524 = vunpack.c.h.b16 %v650
        %v1525 = vunpack.c.l.b16 %v651
        %v1526 = vunpack.c.h.b16 %v651
        %v1527 = vunpack.c.l.b16 %v652
        %v1528 = vunpack.c.h.b16 %v652
        %v1529 = vunpack.c.l.b16 %v653
        %v1530 = vunpack.c.h.b16 %v653
        %v1531 = vunpack.c.l.b16 %v654
        %v1532 = vunpack.c.h.b16 %v654
        %v1533 = vunpack.c.l.b16 %v655
        %v1534 = vunpack.c.h.b16 %v655
        %v1535 = vunpack.c.l.b16 %v656
        %v1536 = vunpack.c.h.b16 %v656
        %v1537 = vunpack.c.l.b16 %v657
        %v1538 = vunpack.c.h.b16 %v657
        %v1539 = vunpack.c.l.b16 %v658
        %v1540 = vunpack.c.h.b16 %v658
        %v1541 = vunpack.c.l.b16 %v659
        %v1542 = vunpack.c.h.b16 %v659
        %v1543 = vunpack.c.l.b16 %v660
        %v1544 = vunpack.c.h.b16 %v660
        %v1545 = vunpack.c.l.b16 %v661
        %v1546 = vunpack.c.h.b16 %v661
        %v1547 = vunpack.c.l.b16 %v662
        %v1548 = vunpack.c.h.b16 %v662
        %v1549 = vunpack.c.l.b16 %v663
        %v1550 = vunpack.c.h.b16 %v663
        %v1551 = vunpack.c.l.b16 %v664
        %v1552 = vunpack.c.h.b16 %v664
        %v1553 = vunpack.c.l.b16 %v665
        %v1554 = vunpack.c.h.b16 %v665
        %v1555 = vunpack.c.l.b16 %v666
        %v1556 = vunpack.c.h.b16 %v666
        %v1557 = vunpack.c.l.b16 %v667
        %v1558 = vunpack.c.h.b16 %v667
        %v1559 = vunpack.c.l.b16 %v668
        %v1560 = vunpack.c.h.b16 %v668
        %v1561 = vunpack.c.l.b16 %v669
        %v1562 = vunpack.c.h.b16 %v669
        %v1563 = vunpack.c.l.b16 %v670
        %v1564 = vunpack.c.h.b16 %v670
        %v1565 = vunpack.c.l.b16 %v671
        %v1566 = vunpack.c.h.b16 %v671
        %v1567 = vunpack.c.l.b16 %v672
        %v1568 = vunpack.c.h.b16 %v672
        %v1569 = vunpack.c.l.b16 %v673
        %v1570 = vunpack.c.h.b16 %v673
        %v1571 = vunpack.c.l.b16 %v674
        %v1572 = vunpack.c.h.b16 %v674
        %v1573 = vunpack.c.l.b16 %v675
        %v1574 = vunpack.c.h.b16 %v675
        %v1575 = vunpack.c.l.b16 %v676
        %v1576 = vunpack.c.h.b16 %v676
        %v1577 = vunpack.c.l.b16 %v677
        %v1578 = vunpack.c.h.b16 %v677
        %v1579 = vunpack.c.l.b16 %v678
        %v1580 = vunpack.c.h.b16 %v678
        %v1581 = vunpack.c.l.b16 %v679
        %v1582 = vunpack.c.h.b16 %v679
        %v1583 = vunpack.c.l.b16 %v680
        %v1584 = vunpack.c.h.b16 %v680
        %v1585 = vunpack.c.l.b16 %v681
        %v1586 = vunpack.c.h.b16 %v681
        %v1587 = vunpack.c.l.b16 %v682
        %v1588 = vunpack.c.h.b16 %v682
        %v1589 = vunpack.c.l.b16 %v683
        %v1590 = vunpack.c.h.b16 %v683
        %v1591 = vunpack.c.l.b16 %v684
        %v1592 = vunpack.c.h.b16 %v684
        %v1593 = vunpack.c.l.b16 %v685
        %v1594 = vunpack.c.h.b16 %v685
        %v1595 = vunpack.c.l.b16 %v686
        %v1596 = vunpack.c.h.b16 %v686
        %v1597 = vunpack.c.l.b16 %v687
        %v1598 = vunpack.c.h.b16 %v687
        %v1599 = vunpack.c.l.b16 %v688
        %v1600 = vunpack.c.h.b16 %v688
        %v1601 = vunpack.c.l.b16 %v689
        %v1602 = vunpack.c.h.b16 %v689
        %v1603 = vunpack.c.l.b16 %v690
        %v1604 = vunpack.c.h.b16 %v690
        %v1605 = vunpack.c.l.b16 %v691
        %v1606 = vunpack.c.h.b16 %v691
        %v1607 = vunpack.c.l.b16 %v692
        %v1608 = vunpack.c.h.b16 %v692
        %v1609 = vunpack.c.l.b16 %v693
        %v1610 = vunpack.c.h.b16 %v693
        %v1611 = vunpack.c.l.b16 %v694
        %v1612 = vunpack.c.h.b16 %v694
        %v1613 = vunpack.c.l.b16 %v695
        %v1614 = vunpack.c.h.b16 %v695
        %v1615 = vunpack.c.l.b16 %v696
        %v1616 = vunpack.c.h.b16 %v696
        %v1617 = vunpack.c.l.b16 %v697
        %v1618 = vunpack.c.h.b16 %v697
        %v1619 = vunpack.c.l.b16 %v698
        %v1620 = vunpack.c.h.b16 %v698
        %v1621 = vunpack.c.l.b16 %v699
        %v1622 = vunpack.c.h.b16 %v699
        %v1623 = vunpack.c.l.b16 %v700
        %v1624 = vunpack.c.h.b16 %v700
        %v1625 = vunpack.c.l.b16 %v701
        %v1626 = vunpack.c.h.b16 %v701
        %v1627 = vunpack.c.l.b16 %v702
        %v1628 = vunpack.c.h.b16 %v702
        %v1629 = vunpack.c.l.b16 %v703
        %v1630 = vunpack.c.h.b16 %v703
        %v1631 = vunpack.c.l.b16 %v704
        %v1632 = vunpack.c.h.b16 %v704
        %v1633 = vunpack.c.l.b16 %v705
        %v1634 = vunpack.c.h.b16 %v705
        %v1635 = vunpack.c.l.b16 %v706
        %v1636 = vunpack.c.h.b16 %v706
        %v1637 = vunpack.c.l.b16 %v707
        %v1638 = vunpack.c.h.b16 %v707
        %v1639 = vunpack.c.l.b16 %v708
        %v1640 = vunpack.c.h.b16 %v708
        %v1641 = vpack.c.b16 %v1485, %v1481
        %v1642 = vpack.c.b16 %v1486, %v1482
        %v1643 = vpack.c.b16 %v1487, %v1483
        %v1644 = vpack.c.b16 %v1488, %v1484
        %v1645 = vpack.c.b16 %v1493, %v1489
        %v1646 = vpack.c.b16 %v1494, %v1490
        %v1647 = vpack.c.b16 %v1495, %v1491
        %v1648 = vpack.c.b16 %v1496, %v1492
        %v1649 = vpack.c.b16 %v1501, %v1497
        %v1650 = vpack.c.b16 %v1502, %v1498
        %v1651 = vpack.c.b16 %v1503, %v1499
        %v1652 = vpack.c.b16 %v1504, %v1500
        %v1653 = vpack.c.b16 %v1509, %v1505
        %v1654 = vpack.c.b16 %v1510, %v1506
        %v1655 = vpack.c.b16 %v1511, %v1507
        %v1656 = vpack.c.b16 %v1512, %v1508
        %v1657 = vpack.c.b16 %v1517, %v1513
        %v1658 = vpack.c.b16 %v1518, %v1514
        %v1659 = vpack.c.b16 %v1519, %v1515
        %v1660 = vpack.c.b16 %v1520, %v1516
        %v1661 = vpack.c.b16 %v1525, %v1521
        %v1662 = vpack.c.b16 %v1526, %v1522
        %v1663 = vpack.c.b16 %v1527, %v1523
        %v1664 = vpack.c.b16 %v1528, %v1524
        %v1665 = vpack.c.b16 %v1533, %v1529
        %v1666 = vpack.c.b16 %v1534, %v1530
        %v1667 = vpack.c.b16 %v1535, %v1531
        %v1668 = vpack.c.b16 %v1536, %v1532
        %v1669 = vpack.c.b16 %v1541, %v1537
        %v1670 = vpack.c.b16 %v1542, %v1538
        %v1671 = vpack.c.b16 %v1543, %v1539
        %v1672 = vpack.c.b16 %v1544, %v1540
        %v1673 = vpack.c.b16 %v1549, %v1545
        %v1674 = vpack.c.b16 %v1550, %v1546
        %v1675 = vpack.c.b16 %v1551, %v1547
        %v1676 = vpack.c.b16 %v1552, %v1548
        %v1677 = vpack.c.b16 %v1557, %v1553
        %v1678 = vpack.c.b16 %v1558, %v1554
        %v1679 = vpack.c.b16 %v1559, %v1555
        %v1680 = vpack.c.b16 %v1560, %v1556
        %v1681 = vpack.c.b16 %v1565, %v1561
        %v1682 = vpack.c.b16 %v1566, %v1562
        %v1683 = vpack.c.b16 %v1567, %v1563
        %v1684 = vpack.c.b16 %v1568, %v1564
        %v1685 = vpack.c.b16 %v1573, %v1569
        %v1686 = vpack.c.b16 %v1574, %v1570
        %v1687 = vpack.c.b16 %v1575, %v1571
        %v1688 = vpack.c.b16 %v1576, %v1572
        %v1689 = vpack.c.b16 %v1581, %v1577
        %v1690 = vpack.c.b16 %v1582, %v1578
        %v1691 = vpack.c.b16 %v1583, %v1579
        %v1692 = vpack.c.b16 %v1584, %v1580
        %v1693 = vpack.c.b16 %v1589, %v1585
        %v1694 = vpack.c.b16 %v1590, %v1586
        %v1695 = vpack.c.b16 %v1591, %v1587
        %v1696 = vpack.c.b16 %v1592, %v1588
        %v1697 = vpack.c.b16 %v1597, %v1593
        %v1698 = vpack.c.b16 %v1598, %v1594
        %v1699 = vpack.c.b16 %v1599, %v1595
        %v1700 = vpack.c.b16 %v1600, %v1596
        %v1701 = vpack.c.b16 %v1605, %v1601
        %v1702 = vpack.c.b16 %v1606, %v1602
        %v1703 = vpack.c.b16 %v1607, %v1603
        %v1704 = vpack.c.b16 %v1608, %v1604
        %v1705 = vpack.c.b16 %v1613, %v1609
        %v1706 = vpack.c.b16 %v1614, %v1610
        %v1707 = vpack.c.b16 %v1615, %v1611
        %v1708 = vpack.c.b16 %v1616, %v1612
        %v1709 = vpack.c.b16 %v1621, %v1617
        %v1710 = vpack.c.b16 %v1622, %v1618
        %v1711 = vpack.c.b16 %v1623, %v1619
        %v1712 = vpack.c.b16 %v1624, %v1620
        %v1713 = vpack.c.b16 %v1629, %v1625
        %v1714 = vpack.c.b16 %v1630, %v1626
        %v1715 = vpack.c.b16 %v1631, %v1627
        %v1716 = vpack.c.b16 %v1632, %v1628
        %v1717 = vpack.c.b16 %v1637, %v1633
        %v1718 = vpack.c.b16 %v1638, %v1634
        %v1719 = vpack.c.b16 %v1639, %v1635
        %v1720 = vpack.c.b16 %v1640, %v1636
        %v1802 = vsel %vm1228, %v1398, 0
        %1804 = vmatprep.subr.bf16.mxu0 %v1642
        %1805 = vmatpush1.bf16.msra.mxu0 %v1641
        %1806 = vmatprep.subr.bf16.mxu0 %v1646
        %1807 = vmatpush1.bf16.msra.mxu0 %v1645
        %1808 = vmatprep.subr.bf16.mxu0 %v1650
        %1809 = vmatpush1.bf16.msra.mxu0 %v1649
        %1810 = vmatprep.subr.bf16.mxu0 %v1654
        %1811 = vmatpush1.bf16.msra.mxu0 %v1653
        %1812 = vmatprep.subr.bf16.mxu0 %v1658
        %1813 = vmatpush1.bf16.msra.mxu0 %v1657
        %1814 = vmatprep.subr.bf16.mxu0 %v1662
        %1815 = vmatpush1.bf16.msra.mxu0 %v1661
        %1816 = vmatprep.subr.bf16.mxu0 %v1666
        %1817 = vmatpush1.bf16.msra.mxu0 %v1665
        %1818 = vmatprep.subr.bf16.mxu0 %v1670
        %1819 = vmatpush1.bf16.msra.mxu0 %v1669
        %1820 = vmatprep.subr.bf16.mxu0 %v1674
        %1821 = vmatpush1.bf16.msra.mxu0 %v1673
        %1822 = vmatprep.subr.bf16.mxu0 %v1678
        %1823 = vmatpush1.bf16.msra.mxu0 %v1677
        %1824 = vmatprep.subr.bf16.mxu0 %v1682
        %1825 = vmatpush1.bf16.msra.mxu0 %v1681
        %1826 = vmatprep.subr.bf16.mxu0 %v1686
        %1827 = vmatpush1.bf16.msra.mxu0 %v1685
        %1828 = vmatprep.subr.bf16.mxu0 %v1690
        %1829 = vmatpush1.bf16.msra.mxu0 %v1689
        %1830 = vmatprep.subr.bf16.mxu0 %v1694
        %1831 = vmatpush1.bf16.msra.mxu0 %v1693
        %1832 = vmatprep.subr.bf16.mxu0 %v1698
        %1833 = vmatpush1.bf16.msra.mxu0 %v1697
        %1834 = vmatprep.subr.bf16.mxu0 %v1702
        %1835 = vmatpush1.bf16.msra.mxu0 %v1701
        %1836 = vmatprep.mubr.bf16.mxu0 %v1397
        %1837 = vmatmul.mubr.bf16.gmra.mrb[0].mxu0 %v1396
        %v1838 = vpop.f32.mrb[0].mxu0
        %v1839 = vadd.f32 %v1308, %v1838
        %v1840 = vpop.f32.mrb[0].mxu0
        %v1841 = vadd.f32 %v1310, %v1840
        %v1842 = vpop.f32.mrb[0].mxu0
        %v1843 = vpop.f32.mrb[0].mxu0
        %1844 = vdwg.mxu0
        %1845 = vmatprep.subr.bf16.mxu0 %v1706
        %1846 = vmatpush1.bf16.msra.mxu0 %v1705
        %1847 = vmatprep.subr.bf16.mxu0 %v1710
        %1848 = vmatpush1.bf16.msra.mxu0 %v1709
        %1849 = vmatprep.subr.bf16.mxu0 %v1714
        %1850 = vmatpush1.bf16.msra.mxu0 %v1713
        %1851 = vmatprep.subr.bf16.mxu0 %v1718
        %1852 = vmatpush1.bf16.msra.mxu0 %v1717
        %1853 = vmatprep.subr.bf16.mxu0 0
        %1854 = vmatpush1.bf16.msra.mxu0 0
        %1855 = vmatprep.subr.bf16.mxu0 0
        %1856 = vmatpush1.bf16.msra.mxu0 0
        %1857 = vmatprep.subr.bf16.mxu0 0
        %1858 = vmatpush1.bf16.msra.mxu0 0
        %1859 = vmatprep.subr.bf16.mxu0 0
        %1860 = vmatpush1.bf16.msra.mxu0 0
        %1861 = vmatprep.subr.bf16.mxu0 0
        %1862 = vmatpush1.bf16.msra.mxu0 0
        %1863 = vmatprep.subr.bf16.mxu0 0
        %1864 = vmatpush1.bf16.msra.mxu0 0
        %1865 = vmatprep.subr.bf16.mxu0 0
        %1866 = vmatpush1.bf16.msra.mxu0 0
        %1867 = vmatprep.subr.bf16.mxu0 0
        %1868 = vmatpush1.bf16.msra.mxu0 0
        %1869 = vmatprep.subr.bf16.mxu0 0
        %1870 = vmatpush1.bf16.msra.mxu0 0
        %1871 = vmatprep.subr.bf16.mxu0 0
        %1872 = vmatpush1.bf16.msra.mxu0 0
        %1873 = vmatprep.subr.bf16.mxu0 0
        %1874 = vmatpush1.bf16.msra.mxu0 0
        %1875 = vmatprep.subr.bf16.mxu0 0
        %1876 = vmatpush1.bf16.msra.mxu0 0
        %1877 = vmatprep.mubr.bf16.mxu0 0
        %1878 = vmatmul.mubr.bf16.gmra.mrb[0].mxu0 %v1802
        %v1879 = vpop.f32.mrb[0].mxu0
        %v1880 = vadd.f32 %v1839, %v1879
        %v1881 = vpop.f32.mrb[0].mxu0
        %v1882 = vadd.f32 %v1841, %v1881
        %v1883 = vpop.f32.mrb[0].mxu0
        %v1884 = vpop.f32.mrb[0].mxu0
        %1885 = vdwg.mxu0
        %1886 = vmatprep.subr.bf16.mxu0 %v1644
        %1887 = vmatpush1.bf16.msra.mxu0 %v1643
        %1888 = vmatprep.subr.bf16.mxu0 %v1648
        %1889 = vmatpush1.bf16.msra.mxu0 %v1647
        %1890 = vmatprep.subr.bf16.mxu0 %v1652
        %1891 = vmatpush1.bf16.msra.mxu0 %v1651
        %1892 = vmatprep.subr.bf16.mxu0 %v1656
        %1893 = vmatpush1.bf16.msra.mxu0 %v1655
        %1894 = vmatprep.subr.bf16.mxu0 %v1660
        %1895 = vmatpush1.bf16.msra.mxu0 %v1659
        %1896 = vmatprep.subr.bf16.mxu0 %v1664
        %1897 = vmatpush1.bf16.msra.mxu0 %v1663
        %1898 = vmatprep.subr.bf16.mxu0 %v1668
        %1899 = vmatpush1.bf16.msra.mxu0 %v1667
        %1900 = vmatprep.subr.bf16.mxu0 %v1672
        %1901 = vmatpush1.bf16.msra.mxu0 %v1671
        %1902 = vmatprep.subr.bf16.mxu0 %v1676
        %1903 = vmatpush1.bf16.msra.mxu0 %v1675
        %1904 = vmatprep.subr.bf16.mxu0 %v1680
        %1905 = vmatpush1.bf16.msra.mxu0 %v1679
        %1906 = vmatprep.subr.bf16.mxu0 %v1684
        %1907 = vmatpush1.bf16.msra.mxu0 %v1683
        %1908 = vmatprep.subr.bf16.mxu0 %v1688
        %1909 = vmatpush1.bf16.msra.mxu0 %v1687
        %1910 = vmatprep.subr.bf16.mxu0 %v1692
        %1911 = vmatpush1.bf16.msra.mxu0 %v1691
        %1912 = vmatprep.subr.bf16.mxu0 %v1696
        %1913 = vmatpush1.bf16.msra.mxu0 %v1695
        %1914 = vmatprep.subr.bf16.mxu0 %v1700
        %1915 = vmatpush1.bf16.msra.mxu0 %v1699
        %1916 = vmatprep.subr.bf16.mxu0 %v1704
        %1917 = vmatpush1.bf16.msra.mxu0 %v1703
        %1918 = vmatprep.mubr.bf16.mxu0 %v1397
        %1919 = vmatmul.mubr.bf16.gmra.mrb[0].mxu0 %v1396
        %v1920 = vpop.f32.mrb[0].mxu0
        %v1921 = vadd.f32 %v1390, %v1920
        %v1922 = vpop.f32.mrb[0].mxu0
        %v1923 = vadd.f32 %v1392, %v1922
        %v1924 = vpop.f32.mrb[0].mxu0
        %v1925 = vpop.f32.mrb[0].mxu0
        %1926 = vdwg.mxu0
        %1927 = vmatprep.subr.bf16.mxu0 %v1708
        %1928 = vmatpush1.bf16.msra.mxu0 %v1707
        %1929 = vmatprep.subr.bf16.mxu0 %v1712
        %1930 = vmatpush1.bf16.msra.mxu0 %v1711
        %1931 = vmatprep.subr.bf16.mxu0 %v1716
        %1932 = vmatpush1.bf16.msra.mxu0 %v1715
        %1933 = vmatprep.subr.bf16.mxu0 %v1720
        %1934 = vmatpush1.bf16.msra.mxu0 %v1719
        %1935 = vmatprep.subr.bf16.mxu0 0
        %1936 = vmatpush1.bf16.msra.mxu0 0
        %1937 = vmatprep.subr.bf16.mxu0 0
        %1938 = vmatpush1.bf16.msra.mxu0 0
        %1939 = vmatprep.subr.bf16.mxu0 0
        %1940 = vmatpush1.bf16.msra.mxu0 0
        %1941 = vmatprep.subr.bf16.mxu0 0
        %1942 = vmatpush1.bf16.msra.mxu0 0
        %1943 = vmatprep.subr.bf16.mxu0 0
        %1944 = vmatpush1.bf16.msra.mxu0 0
        %1945 = vmatprep.subr.bf16.mxu0 0
        %1946 = vmatpush1.bf16.msra.mxu0 0
        %1947 = vmatprep.subr.bf16.mxu0 0
        %1948 = vmatpush1.bf16.msra.mxu0 0
        %1949 = vmatprep.subr.bf16.mxu0 0
        %1950 = vmatpush1.bf16.msra.mxu0 0
        %1951 = vmatprep.subr.bf16.mxu0 0
        %1952 = vmatpush1.bf16.msra.mxu0 0
        %1953 = vmatprep.subr.bf16.mxu0 0
        %1954 = vmatpush1.bf16.msra.mxu0 0
        %1955 = vmatprep.subr.bf16.mxu0 0
        %1956 = vmatpush1.bf16.msra.mxu0 0
        %1957 = vmatprep.subr.bf16.mxu0 0
        %1958 = vmatpush1.bf16.msra.mxu0 0
        %1959 = vmatprep.mubr.bf16.mxu0 0
        %1960 = vmatmul.mubr.bf16.gmra.mrb[0].mxu0 %v1802
        %v1961 = vpop.f32.mrb[0].mxu0
        %v1962 = vadd.f32 %v1921, %v1961
        %v1963 = vpop.f32.mrb[0].mxu0
        %v1964 = vadd.f32 %v1923, %v1963
        %v1965 = vpop.f32.mrb[0].mxu0
        %v1966 = vpop.f32.mrb[0].mxu0
        %1967 = vdwg.mxu0
        %v1968 = vld [vmem:[#allocation3] sm:$0xee]
        %v1969 = vld [vmem:[#allocation3 + $0x8] sm:$0xe]
        %s1970 = scalar_lea.vmem [#allocation8], 1280
        %v1971 = vld [vmem:[%s1970] sm:$0xff]
        %v1972 = vld [vmem:[%s1970 + $0x8] sm:$0xff]
        %v1973 = vld [vmem:[%s1970 + $0x10] sm:$0xff]
        %v1974 = vld [vmem:[%s1970 + $0x18] sm:$0xff]
        %v1975 = vld [vmem:[%s1970 + $0x20] sm:$0xff]
        %v1976 = vld [vmem:[%s1970 + $0x28] sm:$0xff]
        %v1977 = vld [vmem:[%s1970 + $0x30] sm:$0xff]
        %v1978 = vld [vmem:[%s1970 + $0x38] sm:$0xff]
        %v1979 = vld [vmem:[%s1970 + $0x40] sm:$0xff]
        %v1980 = vld [vmem:[%s1970 + $0x48] sm:$0xff]
        %v1981 = vld [vmem:[%s1970 + $0x50] sm:$0xff]
        %v1982 = vld [vmem:[%s1970 + $0x58] sm:$0xff]
        %v1983 = vld [vmem:[%s1970 + $0x60] sm:$0xff]
        %v1984 = vld [vmem:[%s1970 + $0x68] sm:$0xff]
        %v1985 = vld [vmem:[%s1970 + $0x70] sm:$0xff]
        %v1986 = vld [vmem:[%s1970 + $0x78] sm:$0xff]
        %v1987 = vld [vmem:[%s1970 + $0x80] sm:$0xff]
        %v1988 = vld [vmem:[%s1970 + $0x88] sm:$0xff]
        %v1989 = vld [vmem:[%s1970 + $0x90] sm:$0xff]
        %v1990 = vld [vmem:[%s1970 + $0x98] sm:$0xff]
        %v1991 = vld [vmem:[%s1970 + $0xa0] sm:$0xff]
        %v1992 = vld [vmem:[%s1970 + $0xa8] sm:$0xff]
        %v1993 = vld [vmem:[%s1970 + $0xb0] sm:$0xff]
        %v1994 = vld [vmem:[%s1970 + $0xb8] sm:$0xff]
        %v1995 = vld [vmem:[%s1970 + $0xc0] sm:$0xff]
        %v1996 = vld [vmem:[%s1970 + $0xc8] sm:$0xff]
        %v1997 = vld [vmem:[%s1970 + $0xd0] sm:$0xff]
        %v1998 = vld [vmem:[%s1970 + $0xd8] sm:$0xff]
        %v1999 = vld [vmem:[%s1970 + $0xe0] sm:$0xff]
        %v2000 = vld [vmem:[%s1970 + $0xe8] sm:$0xff]
        %v2001 = vld [vmem:[%s1970 + $0xf0] sm:$0xff]
        %v2002 = vld [vmem:[%s1970 + $0xf8] sm:$0xff]
        %v2003 = vld [vmem:[%s1970 + $0x100] sm:$0xff]
        %v2004 = vld [vmem:[%s1970 + $0x108] sm:$0xff]
        %v2005 = vld [vmem:[%s1970 + $0x110] sm:$0xff]
        %v2006 = vld [vmem:[%s1970 + $0x118] sm:$0xff]
        %v2007 = vld [vmem:[%s1970 + $0x120] sm:$0xff]
        %v2008 = vld [vmem:[%s1970 + $0x128] sm:$0xff]
        %v2009 = vld [vmem:[%s1970 + $0x130] sm:$0xff]
        %v2010 = vld [vmem:[%s1970 + $0x138] sm:$0xff]
        %v2011 = vld [vmem:[%s1970 + $0x140] sm:$0xff]
        %v2012 = vld [vmem:[%s1970 + $0x148] sm:$0xff]
        %v2013 = vld [vmem:[%s1970 + $0x150] sm:$0xff]
        %v2014 = vld [vmem:[%s1970 + $0x158] sm:$0xff]
        %v2015 = vld [vmem:[%s1970 + $0x160] sm:$0xff]
        %v2016 = vld [vmem:[%s1970 + $0x168] sm:$0xff]
        %v2017 = vld [vmem:[%s1970 + $0x170] sm:$0xff]
        %v2018 = vld [vmem:[%s1970 + $0x178] sm:$0xff]
        %v2019 = vld [vmem:[%s1970 + $0x180] sm:$0xff]
        %v2020 = vld [vmem:[%s1970 + $0x188] sm:$0xff]
        %v2021 = vld [vmem:[%s1970 + $0x190] sm:$0xff]
        %v2022 = vld [vmem:[%s1970 + $0x198] sm:$0xff]
        %v2023 = vld [vmem:[%s1970 + $0x1a0] sm:$0xff]
        %v2024 = vld [vmem:[%s1970 + $0x1a8] sm:$0xff]
        %v2025 = vld [vmem:[%s1970 + $0x1b0] sm:$0xff]
        %v2026 = vld [vmem:[%s1970 + $0x1b8] sm:$0xff]
        %v2027 = vld [vmem:[%s1970 + $0x1c0] sm:$0xff]
        %v2028 = vld [vmem:[%s1970 + $0x1c8] sm:$0xff]
        %v2029 = vld [vmem:[%s1970 + $0x1d0] sm:$0xff]
        %v2030 = vld [vmem:[%s1970 + $0x1d8] sm:$0xff]
        %v2031 = vld [vmem:[%s1970 + $0x1e0] sm:$0xff]
        %v2032 = vld [vmem:[%s1970 + $0x1e8] sm:$0xff]
        %v2033 = vld [vmem:[%s1970 + $0x1f0] sm:$0xff]
        %v2034 = vld [vmem:[%s1970 + $0x1f8] sm:$0xff]
        %v2035 = vld [vmem:[%s1970 + $0x200] sm:$0xff]
        %v2036 = vld [vmem:[%s1970 + $0x208] sm:$0xff]
        %v2037 = vld [vmem:[%s1970 + $0x210] sm:$0xff]
        %v2038 = vld [vmem:[%s1970 + $0x218] sm:$0xff]
        %v2039 = vld [vmem:[%s1970 + $0x220] sm:$0xff]
        %v2040 = vld [vmem:[%s1970 + $0x228] sm:$0xff]
        %v2041 = vld [vmem:[%s1970 + $0x230] sm:$0xff]
        %v2042 = vld [vmem:[%s1970 + $0x238] sm:$0xff]
        %v2043 = vld [vmem:[%s1970 + $0x240] sm:$0xff]
        %v2044 = vld [vmem:[%s1970 + $0x248] sm:$0xff]
        %v2045 = vld [vmem:[%s1970 + $0x250] sm:$0xff]
        %v2046 = vld [vmem:[%s1970 + $0x258] sm:$0xff]
        %v2047 = vld [vmem:[%s1970 + $0x260] sm:$0xff]
        %v2048 = vld [vmem:[%s1970 + $0x268] sm:$0xff]
        %v2049 = vld [vmem:[%s1970 + $0x270] sm:$0xff]
        %v2050 = vld [vmem:[%s1970 + $0x278] sm:$0xff]
        %v2053 = vunpack.c.l.b16 %v1968
        %v2054 = vunpack.c.h.b16 %v1968
        %v2055 = vunpack.c.l.b16 %v1969
        %v2056 = vpack.c.b16 %v799, %v2053
        %v2057 = vpack.c.b16 %v800, %v2054
        %v2058 = vpack.c.b16 %v801, %v2055
        %v2059 = vrot.slane %v2056, 1
        %v2060 = vrot.slane %v2057, 1
        %v2061 = vrot.slane %v2058, 1
        %v2144 = vunpack.c.l.b16 %v1971
        %v2145 = vunpack.c.h.b16 %v1971
        %v2146 = vunpack.c.l.b16 %v1972
        %v2147 = vunpack.c.h.b16 %v1972
        %v2148 = vunpack.c.l.b16 %v1973
        %v2149 = vunpack.c.h.b16 %v1973
        %v2150 = vunpack.c.l.b16 %v1974
        %v2151 = vunpack.c.h.b16 %v1974
        %v2152 = vunpack.c.l.b16 %v1975
        %v2153 = vunpack.c.h.b16 %v1975
        %v2154 = vunpack.c.l.b16 %v1976
        %v2155 = vunpack.c.h.b16 %v1976
        %v2156 = vunpack.c.l.b16 %v1977
        %v2157 = vunpack.c.h.b16 %v1977
        %v2158 = vunpack.c.l.b16 %v1978
        %v2159 = vunpack.c.h.b16 %v1978
        %v2160 = vunpack.c.l.b16 %v1979
        %v2161 = vunpack.c.h.b16 %v1979
        %v2162 = vunpack.c.l.b16 %v1980
        %v2163 = vunpack.c.h.b16 %v1980
        %v2164 = vunpack.c.l.b16 %v1981
        %v2165 = vunpack.c.h.b16 %v1981
        %v2166 = vunpack.c.l.b16 %v1982
        %v2167 = vunpack.c.h.b16 %v1982
        %v2168 = vunpack.c.l.b16 %v1983
        %v2169 = vunpack.c.h.b16 %v1983
        %v2170 = vunpack.c.l.b16 %v1984
        %v2171 = vunpack.c.h.b16 %v1984
        %v2172 = vunpack.c.l.b16 %v1985
        %v2173 = vunpack.c.h.b16 %v1985
        %v2174 = vunpack.c.l.b16 %v1986
        %v2175 = vunpack.c.h.b16 %v1986
        %v2176 = vunpack.c.l.b16 %v1987
        %v2177 = vunpack.c.h.b16 %v1987
        %v2178 = vunpack.c.l.b16 %v1988
        %v2179 = vunpack.c.h.b16 %v1988
        %v2180 = vunpack.c.l.b16 %v1989
        %v2181 = vunpack.c.h.b16 %v1989
        %v2182 = vunpack.c.l.b16 %v1990
        %v2183 = vunpack.c.h.b16 %v1990
        %v2184 = vunpack.c.l.b16 %v1991
        %v2185 = vunpack.c.h.b16 %v1991
        %v2186 = vunpack.c.l.b16 %v1992
        %v2187 = vunpack.c.h.b16 %v1992
        %v2188 = vunpack.c.l.b16 %v1993
        %v2189 = vunpack.c.h.b16 %v1993
        %v2190 = vunpack.c.l.b16 %v1994
        %v2191 = vunpack.c.h.b16 %v1994
        %v2192 = vunpack.c.l.b16 %v1995
        %v2193 = vunpack.c.h.b16 %v1995
        %v2194 = vunpack.c.l.b16 %v1996
        %v2195 = vunpack.c.h.b16 %v1996
        %v2196 = vunpack.c.l.b16 %v1997
        %v2197 = vunpack.c.h.b16 %v1997
        %v2198 = vunpack.c.l.b16 %v1998
        %v2199 = vunpack.c.h.b16 %v1998
        %v2200 = vunpack.c.l.b16 %v1999
        %v2201 = vunpack.c.h.b16 %v1999
        %v2202 = vunpack.c.l.b16 %v2000
        %v2203 = vunpack.c.h.b16 %v2000
        %v2204 = vunpack.c.l.b16 %v2001
        %v2205 = vunpack.c.h.b16 %v2001
        %v2206 = vunpack.c.l.b16 %v2002
        %v2207 = vunpack.c.h.b16 %v2002
        %v2208 = vunpack.c.l.b16 %v2003
        %v2209 = vunpack.c.h.b16 %v2003
        %v2210 = vunpack.c.l.b16 %v2004
        %v2211 = vunpack.c.h.b16 %v2004
        %v2212 = vunpack.c.l.b16 %v2005
        %v2213 = vunpack.c.h.b16 %v2005
        %v2214 = vunpack.c.l.b16 %v2006
        %v2215 = vunpack.c.h.b16 %v2006
        %v2216 = vunpack.c.l.b16 %v2007
        %v2217 = vunpack.c.h.b16 %v2007
        %v2218 = vunpack.c.l.b16 %v2008
        %v2219 = vunpack.c.h.b16 %v2008
        %v2220 = vunpack.c.l.b16 %v2009
        %v2221 = vunpack.c.h.b16 %v2009
        %v2222 = vunpack.c.l.b16 %v2010
        %v2223 = vunpack.c.h.b16 %v2010
        %v2224 = vunpack.c.l.b16 %v2011
        %v2225 = vunpack.c.h.b16 %v2011
        %v2226 = vunpack.c.l.b16 %v2012
        %v2227 = vunpack.c.h.b16 %v2012
        %v2228 = vunpack.c.l.b16 %v2013
        %v2229 = vunpack.c.h.b16 %v2013
        %v2230 = vunpack.c.l.b16 %v2014
        %v2231 = vunpack.c.h.b16 %v2014
        %v2232 = vunpack.c.l.b16 %v2015
        %v2233 = vunpack.c.h.b16 %v2015
        %v2234 = vunpack.c.l.b16 %v2016
        %v2235 = vunpack.c.h.b16 %v2016
        %v2236 = vunpack.c.l.b16 %v2017
        %v2237 = vunpack.c.h.b16 %v2017
        %v2238 = vunpack.c.l.b16 %v2018
        %v2239 = vunpack.c.h.b16 %v2018
        %v2240 = vunpack.c.l.b16 %v2019
        %v2241 = vunpack.c.h.b16 %v2019
        %v2242 = vunpack.c.l.b16 %v2020
        %v2243 = vunpack.c.h.b16 %v2020
        %v2244 = vunpack.c.l.b16 %v2021
        %v2245 = vunpack.c.h.b16 %v2021
        %v2246 = vunpack.c.l.b16 %v2022
        %v2247 = vunpack.c.h.b16 %v2022
        %v2248 = vunpack.c.l.b16 %v2023
        %v2249 = vunpack.c.h.b16 %v2023
        %v2250 = vunpack.c.l.b16 %v2024
        %v2251 = vunpack.c.h.b16 %v2024
        %v2252 = vunpack.c.l.b16 %v2025
        %v2253 = vunpack.c.h.b16 %v2025
        %v2254 = vunpack.c.l.b16 %v2026
        %v2255 = vunpack.c.h.b16 %v2026
        %v2256 = vunpack.c.l.b16 %v2027
        %v2257 = vunpack.c.h.b16 %v2027
        %v2258 = vunpack.c.l.b16 %v2028
        %v2259 = vunpack.c.h.b16 %v2028
        %v2260 = vunpack.c.l.b16 %v2029
        %v2261 = vunpack.c.h.b16 %v2029
        %v2262 = vunpack.c.l.b16 %v2030
        %v2263 = vunpack.c.h.b16 %v2030
        %v2264 = vunpack.c.l.b16 %v2031
        %v2265 = vunpack.c.h.b16 %v2031
        %v2266 = vunpack.c.l.b16 %v2032
        %v2267 = vunpack.c.h.b16 %v2032
        %v2268 = vunpack.c.l.b16 %v2033
        %v2269 = vunpack.c.h.b16 %v2033
        %v2270 = vunpack.c.l.b16 %v2034
        %v2271 = vunpack.c.h.b16 %v2034
        %v2272 = vunpack.c.l.b16 %v2035
        %v2273 = vunpack.c.h.b16 %v2035
        %v2274 = vunpack.c.l.b16 %v2036
        %v2275 = vunpack.c.h.b16 %v2036
        %v2276 = vunpack.c.l.b16 %v2037
        %v2277 = vunpack.c.h.b16 %v2037
        %v2278 = vunpack.c.l.b16 %v2038
        %v2279 = vunpack.c.h.b16 %v2038
        %v2280 = vunpack.c.l.b16 %v2039
        %v2281 = vunpack.c.h.b16 %v2039
        %v2282 = vunpack.c.l.b16 %v2040
        %v2283 = vunpack.c.h.b16 %v2040
        %v2284 = vunpack.c.l.b16 %v2041
        %v2285 = vunpack.c.h.b16 %v2041
        %v2286 = vunpack.c.l.b16 %v2042
        %v2287 = vunpack.c.h.b16 %v2042
        %v2288 = vunpack.c.l.b16 %v2043
        %v2289 = vunpack.c.h.b16 %v2043
        %v2290 = vunpack.c.l.b16 %v2044
        %v2291 = vunpack.c.h.b16 %v2044
        %v2292 = vunpack.c.l.b16 %v2045
        %v2293 = vunpack.c.h.b16 %v2045
        %v2294 = vunpack.c.l.b16 %v2046
        %v2295 = vunpack.c.h.b16 %v2046
        %v2296 = vunpack.c.l.b16 %v2047
        %v2297 = vunpack.c.h.b16 %v2047
        %v2298 = vunpack.c.l.b16 %v2048
        %v2299 = vunpack.c.h.b16 %v2048
        %v2300 = vunpack.c.l.b16 %v2049
        %v2301 = vunpack.c.h.b16 %v2049
        %v2302 = vunpack.c.l.b16 %v2050
        %v2303 = vunpack.c.h.b16 %v2050
        %v2304 = vpack.c.b16 %v2148, %v2144
        %v2305 = vpack.c.b16 %v2149, %v2145
        %v2306 = vpack.c.b16 %v2150, %v2146
        %v2307 = vpack.c.b16 %v2151, %v2147
        %v2308 = vpack.c.b16 %v2156, %v2152
        %v2309 = vpack.c.b16 %v2157, %v2153
        %v2310 = vpack.c.b16 %v2158, %v2154
        %v2311 = vpack.c.b16 %v2159, %v2155
        %v2312 = vpack.c.b16 %v2164, %v2160
        %v2313 = vpack.c.b16 %v2165, %v2161
        %v2314 = vpack.c.b16 %v2166, %v2162
        %v2315 = vpack.c.b16 %v2167, %v2163
        %v2316 = vpack.c.b16 %v2172, %v2168
        %v2317 = vpack.c.b16 %v2173, %v2169
        %v2318 = vpack.c.b16 %v2174, %v2170
        %v2319 = vpack.c.b16 %v2175, %v2171
        %v2320 = vpack.c.b16 %v2180, %v2176
        %v2321 = vpack.c.b16 %v2181, %v2177
        %v2322 = vpack.c.b16 %v2182, %v2178
        %v2323 = vpack.c.b16 %v2183, %v2179
        %v2324 = vpack.c.b16 %v2188, %v2184
        %v2325 = vpack.c.b16 %v2189, %v2185
        %v2326 = vpack.c.b16 %v2190, %v2186
        %v2327 = vpack.c.b16 %v2191, %v2187
        %v2328 = vpack.c.b16 %v2196, %v2192
        %v2329 = vpack.c.b16 %v2197, %v2193
        %v2330 = vpack.c.b16 %v2198, %v2194
        %v2331 = vpack.c.b16 %v2199, %v2195
        %v2332 = vpack.c.b16 %v2204, %v2200
        %v2333 = vpack.c.b16 %v2205, %v2201
        %v2334 = vpack.c.b16 %v2206, %v2202
        %v2335 = vpack.c.b16 %v2207, %v2203
        %v2336 = vpack.c.b16 %v2212, %v2208
        %v2337 = vpack.c.b16 %v2213, %v2209
        %v2338 = vpack.c.b16 %v2214, %v2210
        %v2339 = vpack.c.b16 %v2215, %v2211
        %v2340 = vpack.c.b16 %v2220, %v2216
        %v2341 = vpack.c.b16 %v2221, %v2217
        %v2342 = vpack.c.b16 %v2222, %v2218
        %v2343 = vpack.c.b16 %v2223, %v2219
        %v2344 = vpack.c.b16 %v2228, %v2224
        %v2345 = vpack.c.b16 %v2229, %v2225
        %v2346 = vpack.c.b16 %v2230, %v2226
        %v2347 = vpack.c.b16 %v2231, %v2227
        %v2348 = vpack.c.b16 %v2236, %v2232
        %v2349 = vpack.c.b16 %v2237, %v2233
        %v2350 = vpack.c.b16 %v2238, %v2234
        %v2351 = vpack.c.b16 %v2239, %v2235
        %v2352 = vpack.c.b16 %v2244, %v2240
        %v2353 = vpack.c.b16 %v2245, %v2241
        %v2354 = vpack.c.b16 %v2246, %v2242
        %v2355 = vpack.c.b16 %v2247, %v2243
        %v2356 = vpack.c.b16 %v2252, %v2248
        %v2357 = vpack.c.b16 %v2253, %v2249
        %v2358 = vpack.c.b16 %v2254, %v2250
        %v2359 = vpack.c.b16 %v2255, %v2251
        %v2360 = vpack.c.b16 %v2260, %v2256
        %v2361 = vpack.c.b16 %v2261, %v2257
        %v2362 = vpack.c.b16 %v2262, %v2258
        %v2363 = vpack.c.b16 %v2263, %v2259
        %v2364 = vpack.c.b16 %v2268, %v2264
        %v2365 = vpack.c.b16 %v2269, %v2265
        %v2366 = vpack.c.b16 %v2270, %v2266
        %v2367 = vpack.c.b16 %v2271, %v2267
        %v2368 = vpack.c.b16 %v2276, %v2272
        %v2369 = vpack.c.b16 %v2277, %v2273
        %v2370 = vpack.c.b16 %v2278, %v2274
        %v2371 = vpack.c.b16 %v2279, %v2275
        %v2372 = vpack.c.b16 %v2284, %v2280
        %v2373 = vpack.c.b16 %v2285, %v2281
        %v2374 = vpack.c.b16 %v2286, %v2282
        %v2375 = vpack.c.b16 %v2287, %v2283
        %v2376 = vpack.c.b16 %v2292, %v2288
        %v2377 = vpack.c.b16 %v2293, %v2289
        %v2378 = vpack.c.b16 %v2294, %v2290
        %v2379 = vpack.c.b16 %v2295, %v2291
        %v2380 = vpack.c.b16 %v2300, %v2296
        %v2381 = vpack.c.b16 %v2301, %v2297
        %v2382 = vpack.c.b16 %v2302, %v2298
        %v2383 = vpack.c.b16 %v2303, %v2299
        %v2465 = vsel %vm1228, %v2061, 0
        %2467 = vmatprep.subr.bf16.mxu0 %v2305
        %2468 = vmatpush1.bf16.msra.mxu0 %v2304
        %2469 = vmatprep.subr.bf16.mxu0 %v2309
        %2470 = vmatpush1.bf16.msra.mxu0 %v2308
        %2471 = vmatprep.subr.bf16.mxu0 %v2313
        %2472 = vmatpush1.bf16.msra.mxu0 %v2312
        %2473 = vmatprep.subr.bf16.mxu0 %v2317
        %2474 = vmatpush1.bf16.msra.mxu0 %v2316
        %2475 = vmatprep.subr.bf16.mxu0 %v2321
        %2476 = vmatpush1.bf16.msra.mxu0 %v2320
        %2477 = vmatprep.subr.bf16.mxu0 %v2325
        %2478 = vmatpush1.bf16.msra.mxu0 %v2324
        %2479 = vmatprep.subr.bf16.mxu0 %v2329
        %2480 = vmatpush1.bf16.msra.mxu0 %v2328
        %2481 = vmatprep.subr.bf16.mxu0 %v2333
        %2482 = vmatpush1.bf16.msra.mxu0 %v2332
        %2483 = vmatprep.subr.bf16.mxu0 %v2337
        %2484 = vmatpush1.bf16.msra.mxu0 %v2336
        %2485 = vmatprep.subr.bf16.mxu0 %v2341
        %2486 = vmatpush1.bf16.msra.mxu0 %v2340
        %2487 = vmatprep.subr.bf16.mxu0 %v2345
        %2488 = vmatpush1.bf16.msra.mxu0 %v2344
        %2489 = vmatprep.subr.bf16.mxu0 %v2349
        %2490 = vmatpush1.bf16.msra.mxu0 %v2348
        %2491 = vmatprep.subr.bf16.mxu0 %v2353
        %2492 = vmatpush1.bf16.msra.mxu0 %v2352
        %2493 = vmatprep.subr.bf16.mxu0 %v2357
        %2494 = vmatpush1.bf16.msra.mxu0 %v2356
        %2495 = vmatprep.subr.bf16.mxu0 %v2361
        %2496 = vmatpush1.bf16.msra.mxu0 %v2360
        %2497 = vmatprep.subr.bf16.mxu0 %v2365
        %2498 = vmatpush1.bf16.msra.mxu0 %v2364
        %2499 = vmatprep.mubr.bf16.mxu0 %v2060
        %2500 = vmatmul.mubr.bf16.gmra.mrb[0].mxu0 %v2059
        %v2501 = vpop.f32.mrb[0].mxu0
        %v2502 = vadd.f32 0.0, %v2501
        %v2503 = vpop.f32.mrb[0].mxu0
        %v2504 = vadd.f32 0.0, %v2503
        %v2505 = vpop.f32.mrb[0].mxu0
        %v2506 = vpop.f32.mrb[0].mxu0
        %2507 = vdwg.mxu0
        %2508 = vmatprep.subr.bf16.mxu0 %v2369
        %2509 = vmatpush1.bf16.msra.mxu0 %v2368
        %2510 = vmatprep.subr.bf16.mxu0 %v2373
        %2511 = vmatpush1.bf16.msra.mxu0 %v2372
        %2512 = vmatprep.subr.bf16.mxu0 %v2377
        %2513 = vmatpush1.bf16.msra.mxu0 %v2376
        %2514 = vmatprep.subr.bf16.mxu0 %v2381
        %2515 = vmatpush1.bf16.msra.mxu0 %v2380
        %2516 = vmatprep.subr.bf16.mxu0 0
        %2517 = vmatpush1.bf16.msra.mxu0 0
        %2518 = vmatprep.subr.bf16.mxu0 0
        %2519 = vmatpush1.bf16.msra.mxu0 0
        %2520 = vmatprep.subr.bf16.mxu0 0
        %2521 = vmatpush1.bf16.msra.mxu0 0
        %2522 = vmatprep.subr.bf16.mxu0 0
        %2523 = vmatpush1.bf16.msra.mxu0 0
        %2524 = vmatprep.subr.bf16.mxu0 0
        %2525 = vmatpush1.bf16.msra.mxu0 0
        %2526 = vmatprep.subr.bf16.mxu0 0
        %2527 = vmatpush1.bf16.msra.mxu0 0
        %2528 = vmatprep.subr.bf16.mxu0 0
        %2529 = vmatpush1.bf16.msra.mxu0 0
        %2530 = vmatprep.subr.bf16.mxu0 0
        %2531 = vmatpush1.bf16.msra.mxu0 0
        %2532 = vmatprep.subr.bf16.mxu0 0
        %2533 = vmatpush1.bf16.msra.mxu0 0
        %2534 = vmatprep.subr.bf16.mxu0 0
        %2535 = vmatpush1.bf16.msra.mxu0 0
        %2536 = vmatprep.subr.bf16.mxu0 0
        %2537 = vmatpush1.bf16.msra.mxu0 0
        %2538 = vmatprep.subr.bf16.mxu0 0
        %2539 = vmatpush1.bf16.msra.mxu0 0
        %2540 = vmatprep.mubr.bf16.mxu0 0
        %2541 = vmatmul.mubr.bf16.gmra.mrb[0].mxu0 %v2465
        %v2542 = vpop.f32.mrb[0].mxu0
        %v2543 = vadd.f32 %v2502, %v2542
        %v2544 = vpop.f32.mrb[0].mxu0
        %v2545 = vadd.f32 %v2504, %v2544
        %v2546 = vpop.f32.mrb[0].mxu0
        %v2547 = vpop.f32.mrb[0].mxu0
        %2548 = vdwg.mxu0
        %2549 = vmatprep.subr.bf16.mxu0 %v2307
        %2550 = vmatpush1.bf16.msra.mxu0 %v2306
        %2551 = vmatprep.subr.bf16.mxu0 %v2311
        %2552 = vmatpush1.bf16.msra.mxu0 %v2310
        %2553 = vmatprep.subr.bf16.mxu0 %v2315
        %2554 = vmatpush1.bf16.msra.mxu0 %v2314
        %2555 = vmatprep.subr.bf16.mxu0 %v2319
        %2556 = vmatpush1.bf16.msra.mxu0 %v2318
        %2557 = vmatprep.subr.bf16.mxu0 %v2323
        %2558 = vmatpush1.bf16.msra.mxu0 %v2322
        %2559 = vmatprep.subr.bf16.mxu0 %v2327
        %2560 = vmatpush1.bf16.msra.mxu0 %v2326
        %2561 = vmatprep.subr.bf16.mxu0 %v2331
        %2562 = vmatpush1.bf16.msra.mxu0 %v2330
        %2563 = vmatprep.subr.bf16.mxu0 %v2335
        %2564 = vmatpush1.bf16.msra.mxu0 %v2334
        %2565 = vmatprep.subr.bf16.mxu0 %v2339
        %2566 = vmatpush1.bf16.msra.mxu0 %v2338
        %2567 = vmatprep.subr.bf16.mxu0 %v2343
        %2568 = vmatpush1.bf16.msra.mxu0 %v2342
        %2569 = vmatprep.subr.bf16.mxu0 %v2347
        %2570 = vmatpush1.bf16.msra.mxu0 %v2346
        %2571 = vmatprep.subr.bf16.mxu0 %v2351
        %2572 = vmatpush1.bf16.msra.mxu0 %v2350
        %2573 = vmatprep.subr.bf16.mxu0 %v2355
        %2574 = vmatpush1.bf16.msra.mxu0 %v2354
        %2575 = vmatprep.subr.bf16.mxu0 %v2359
        %2576 = vmatpush1.bf16.msra.mxu0 %v2358
        %2577 = vmatprep.subr.bf16.mxu0 %v2363
        %2578 = vmatpush1.bf16.msra.mxu0 %v2362
        %2579 = vmatprep.subr.bf16.mxu0 %v2367
        %2580 = vmatpush1.bf16.msra.mxu0 %v2366
        %2581 = vmatprep.mubr.bf16.mxu0 %v2060
        %2582 = vmatmul.mubr.bf16.gmra.mrb[0].mxu0 %v2059
        %v2583 = vpop.f32.mrb[0].mxu0
        %v2584 = vadd.f32 0.0, %v2583
        %v2585 = vpop.f32.mrb[0].mxu0
        %v2586 = vadd.f32 0.0, %v2585
        %v2587 = vpop.f32.mrb[0].mxu0
        %v2588 = vpop.f32.mrb[0].mxu0
        %2589 = vdwg.mxu0
        %2590 = vmatprep.subr.bf16.mxu0 %v2371
        %2591 = vmatpush1.bf16.msra.mxu0 %v2370
        %2592 = vmatprep.subr.bf16.mxu0 %v2375
        %2593 = vmatpush1.bf16.msra.mxu0 %v2374
        %2594 = vmatprep.subr.bf16.mxu0 %v2379
        %2595 = vmatpush1.bf16.msra.mxu0 %v2378
        %2596 = vmatprep.subr.bf16.mxu0 %v2383
        %2597 = vmatpush1.bf16.msra.mxu0 %v2382
        %2598 = vmatprep.subr.bf16.mxu0 0
        %2599 = vmatpush1.bf16.msra.mxu0 0
        %2600 = vmatprep.subr.bf16.mxu0 0
        %2601 = vmatpush1.bf16.msra.mxu0 0
        %2602 = vmatprep.subr.bf16.mxu0 0
        %2603 = vmatpush1.bf16.msra.mxu0 0
        %2604 = vmatprep.subr.bf16.mxu0 0
        %2605 = vmatpush1.bf16.msra.mxu0 0
        %2606 = vmatprep.subr.bf16.mxu0 0
        %2607 = vmatpush1.bf16.msra.mxu0 0
        %2608 = vmatprep.subr.bf16.mxu0 0
        %2609 = vmatpush1.bf16.msra.mxu0 0
        %2610 = vmatprep.subr.bf16.mxu0 0
        %2611 = vmatpush1.bf16.msra.mxu0 0
        %2612 = vmatprep.subr.bf16.mxu0 0
        %2613 = vmatpush1.bf16.msra.mxu0 0
        %2614 = vmatprep.subr.bf16.mxu0 0
        %2615 = vmatpush1.bf16.msra.mxu0 0
        %2616 = vmatprep.subr.bf16.mxu0 0
        %2617 = vmatpush1.bf16.msra.mxu0 0
        %2618 = vmatprep.subr.bf16.mxu0 0
        %2619 = vmatpush1.bf16.msra.mxu0 0
        %2620 = vmatprep.subr.bf16.mxu0 0
        %2621 = vmatpush1.bf16.msra.mxu0 0
        %2622 = vmatprep.mubr.bf16.mxu0 0
        %2623 = vmatmul.mubr.bf16.gmra.mrb[0].mxu0 %v2465
        %v2624 = vpop.f32.mrb[0].mxu0
        %v2625 = vadd.f32 %v2584, %v2624
        %v2626 = vpop.f32.mrb[0].mxu0
        %v2627 = vadd.f32 %v2586, %v2626
        %v2628 = vpop.f32.mrb[0].mxu0
        %v2629 = vpop.f32.mrb[0].mxu0
        %2630 = vdwg.mxu0
        %v2631 = vadd.f32 %v1880, %v2543
        %v2632 = vadd.f32 %v1882, %v2545
        %v2633 = vadd.f32 %v1962, %v2625
        %v2634 = vadd.f32 %v1964, %v2627
        %v2635 = vld [vmem:[#allocation9] sm:$0xf]
        %v2637 = vlaneseq
        %v2638 = vshrl.u32 %v2637, 7
        %v2639 = vsub.s32 0, %v2638
        %v2640 = vrot.slane %v2635, %v2639
        %v2641 = vlaneseq
        %v2642 = vshrl.u32 %v2641, 7
        %v2643 = vsub.s32 1, %v2642
        %v2644 = vrot.slane %v2635, %v2643
        %v2645 = vlaneseq
        %v2646 = vshrl.u32 %v2645, 7
        %v2647 = vsub.s32 2, %v2646
        %v2648 = vrot.slane %v2635, %v2647
        %v2649 = vlaneseq
        %v2650 = vshrl.u32 %v2649, 7
        %v2651 = vsub.s32 3, %v2650
        %v2652 = vrot.slane %v2635, %v2651
        %v2657 = vadd.f32 %v2631, %v2640
        %v2658 = vadd.f32 %v2632, %v2644
        %v2659 = vadd.f32 %v2633, %v2648
        %v2660 = vadd.f32 %v2634, %v2652
        %v2661 = vmax.f32 %v2657, 0.0
        %v2662 = vmax.f32 %v2658, 0.0
        %v2663 = vmax.f32 %v2659, 0.0
        %v2664 = vmax.f32 %v2660, 0.0
        %v2665 = vpack.c.bf16 %v2661, %v2661
        %v2666 = vpack.c.bf16 %v2662, %v2662
        %v2667 = vpack.c.bf16 %v2663, %v2663
        %v2668 = vpack.c.bf16 %v2664, %v2664
        %v2673 = vunpack.c.l.b16 %v2665
        %v2674 = vunpack.c.l.b16 %v2666
        %v2675 = vunpack.c.l.b16 %v2667
        %v2676 = vunpack.c.l.b16 %v2668
        %v2677 = vpack.c.b16 %v2674, %v2673
        %v2678 = vpack.c.b16 %v2676, %v2675
        %2681 = vst [vmem:[%s276] sm:$0xff] %v2677
        %2682 = vst [vmem:[%s276 + $0x8] sm:$0xff] %v2678
        %p2683 = scmp.lt.s32.totalorder %s19, 1
        %s2684 = scalar_select %p2683, %s19, 1
        %s2685 = smul.addr %s2684, 4
        %s2686 = smul.addr %s2685, 4
        %s2687 = scalar_lea.vmem %s5, %s2686
        // Predicated region
        $region57: #{actor_forward.2} parent=39 // pred_check
          %p2688 = pneg %p147
        $region58: #{actor_forward.2} parent=39 // pred_check_branch
          %2690 = sbr.rel (%p2688) target = $region60
        $region59: #{actor_forward.2} parent=39 // pred_region
          _
        $region60: #{actor_forward.2} parent=39 // pred_fallthru
          _
      $region40: #{actor_forward.2} parent=5 // pred_fallthru
        _
      %p2691 = scmp.le.s32.totalorder 2, %s14
      // Predicated region
      $region61: #{actor_forward.2} parent=5 // pred_check
        %p2692 = pneg %p2691
      $region62: #{actor_forward.2} parent=5 // pred_check_branch
        %2694 = sbr.rel (%p2692) target = $region64
      $region63: #{actor_forward.2} parent=5 // pred_region
        %s2695 = ssub.s32 %s14, 2
        // Predicated region
        $region65: #{actor_forward.2} parent=63 // pred_check
          %p2696 = pneg %p153
        $region66: #{actor_forward.2} parent=63 // pred_check_branch
          %2698 = sbr.rel (%p2696) target = $region68
        $region67: #{actor_forward.2} parent=63 // pred_region
          %p2699 = scmp.lt.s32.totalorder %s20, 1
          %s2700 = scalar_select %p2699, %s20, 1
          %s2701 = smul.addr %s2700, 4
          %s2702 = smul.addr %s2701, 4
          %s2703 = scalar_lea.vmem %s5, %s2702
        $region68: #{actor_forward.2} parent=63 // pred_fallthru
          _
      $region64: #{actor_forward.2} parent=5 // pred_fallthru
        _
    $region6: #{actor_forward.2} parent=1 // loop_footer
      %s18 = sadd.s32 1, %s14
    $region7: #{actor_forward.2} parent=1 // loop_footer_branch
      %13 = sbr.rel target = $region3
    $region8: #{actor_forward.2} parent=1 // loop_exit
      _
    %2704 = vsyncpa [#allocation5], 1
    %s2705 = scalar_lea.sflag [#allocation5], 1
    %2706 = vsyncpa %s2705, 1
    %2707 = vsyncpa [#allocation7], 1
    %2708 = vsyncpa [#allocation10], 1

// kernel: actor_forward.3
$region0: #{actor_forward.3}
  #allocation0 [shape = 'u32[]', space=smem, size = 0x4, offset = 0x4, fixed_abs, tag = 'smem constant byte address 0x4 - core index']
  #allocation1 [shape = 'u32[144,128]{1,0:T(1,128)}', space=vmem, size = 0x12000, scoped, tag = 'internal scratch']
  %s0 = inlined_call_operand.vmem [shape: bf16[2,4096], index: 0, kind: input, shape index: {}]
  %s1 = inlined_call_operand.hbm [shape: bf16[4096,256], index: 1, kind: input, shape index: {}]
  %s2 = inlined_call_operand.hbm [shape: f32[1,256], index: 2, kind: input, shape index: {}]
  %s3 = inlined_call_operand.hbm [shape: bf16[256,128], index: 3, kind: input, shape index: {}]
  %s4 = inlined_call_operand.hbm [shape: f32[1,128], index: 4, kind: input, shape index: {}]
  %s5 = inlined_call_operand.hbm [shape: f32[2,128], index: 5, kind: output, shape index: {}]
  %s6 = sld [smem:[#allocation0]]
  $region46: #{actor_forward.3} parent=0
    _
  %s8 = ssub.s32 1, %s6
  %s9 = scalar_select 0, %s8, %s6
  $region1: #{actor_forward.3} parent=0
    #allocation2 [shape = 'u8[2097152]{0}', space=vmem, size = 0x200000, scoped, tag = 'input window, operand 1, single buffered']
    #allocation3 [shape = 's32[1]{0}', space=sflag, size = 0x4, scoped, tag = 'scoped memory for actor_forward.3']
    #allocation4 [shape = 's32[1]{0}', space=sflag, size = 0x4, scoped, tag = 'scoped memory for actor_forward.3']
    #allocation5 [shape = 'u8[1024]{0}', space=vmem, size = 0x400, scoped, tag = 'input window, operand 2, single buffered']
    #allocation6 [shape = 's32[1]{0}', space=sflag, size = 0x4, scoped, tag = 'scoped memory for actor_forward.3']
    #allocation7 [shape = 'u8[65536]{0}', space=vmem, size = 0x10000, scoped, tag = 'input window, operand 3, single buffered']
    #allocation8 [shape = 'u8[512]{0}', space=vmem, size = 0x400, scoped, tag = 'input window, operand 4, single buffered']
    #allocation9 [shape = 's32[1]{0}', space=sflag, size = 0x4, scoped, tag = 'scoped memory for actor_forward.3']
    #allocation10 [shape = 'u8[1024]{0}', space=vmem, size = 0x400, scoped, tag = 'output window, operand 0, single buffered']
    %10 = vsyncpa [#allocation3], 0
    %11 = vsyncpa [#allocation6], 0
    %12 = vsyncpa [#allocation9], 0
    %13 = vsyncpa [#allocation4], 0
    // Predicated region
    $region2: #{actor_forward.3} parent=1 // pred_check
      _
    $region3: #{actor_forward.3} parent=1 // pred_check_branch
      %15 = sbr.rel (0) target = $region5
    $region4: #{actor_forward.3} parent=1 // pred_region
      _
    $region5: #{actor_forward.3} parent=1 // pred_fallthru
      _
    // Predicated region
    $region6: #{actor_forward.3} parent=1 // pred_check
      _
    $region7: #{actor_forward.3} parent=1 // pred_check_branch
      %17 = sbr.rel (0) target = $region9
    $region8: #{actor_forward.3} parent=1 // pred_region
      %s19 = ssub.s32 65536, 65536
      %20 = vsyncadd [#allocation3], %s19
      %s21 = sshll.u32 [#allocation2], 4
      %s22 = int_to_ptr.vmem [resolvable:$true] %s21
      %27 = dma.hbm_to_vmem [thread:$0]  %s1, 65536, %s22, [#allocation3], 128, 128, 8
    $region9: #{actor_forward.3} parent=1 // pred_fallthru
      _
    // Predicated region
    $region10: #{actor_forward.3} parent=1 // pred_check
      _
    $region11: #{actor_forward.3} parent=1 // pred_check_branch
      %29 = sbr.rel (0) target = $region13
    $region12: #{actor_forward.3} parent=1 // pred_region
      %s31 = ssub.s32 32, 32
      %32 = vsyncadd [#allocation6], %s31
      %s34 = sshll.u32 [#allocation5], 4
      %s35 = int_to_ptr.vmem [resolvable:$true] %s34
      %37 = dma.hbm_to_vmem [thread:$0]  %s2, 32, %s35, [#allocation6]
    $region13: #{actor_forward.3} parent=1 // pred_fallthru
      _
    // Predicated region
    $region14: #{actor_forward.3} parent=1 // pred_check
      _
    $region15: #{actor_forward.3} parent=1 // pred_check_branch
      %39 = sbr.rel (0) target = $region17
    $region16: #{actor_forward.3} parent=1 // pred_region
      %s41 = ssub.s32 2048, 2048
      %42 = vsyncadd [#allocation6], %s41
      %s43 = sshll.u32 [#allocation7], 4
      %s44 = int_to_ptr.vmem [resolvable:$true] %s43
      %49 = dma.hbm_to_vmem [thread:$0]  %s3, 2048, %s44, [#allocation6], 64, 64, 4
    $region17: #{actor_forward.3} parent=1 // pred_fallthru
      _
    // Predicated region
    $region18: #{actor_forward.3} parent=1 // pred_check
      _
    $region19: #{actor_forward.3} parent=1 // pred_check_branch
      %51 = sbr.rel (0) target = $region21
    $region20: #{actor_forward.3} parent=1 // pred_region
      %s53 = ssub.s32 16, 16
      %54 = vsyncadd [#allocation9], %s53
      %s56 = sshll.u32 [#allocation8], 4
      %s57 = int_to_ptr.vmem [resolvable:$true] %s56
      %59 = dma.hbm_to_vmem [thread:$0]  %s4, 16, %s57, [#allocation9]
    $region21: #{actor_forward.3} parent=1 // pred_fallthru
      _
    // Predicated region
    $region22: #{actor_forward.3} parent=1 // pred_check
      _
    $region23: #{actor_forward.3} parent=1 // pred_check_branch
      %61 = sbr.rel (0) target = $region25
    $region24: #{actor_forward.3} parent=1 // pred_region
      %62 = dma.done [#allocation3], 65536
    $region25: #{actor_forward.3} parent=1 // pred_fallthru
      _
    // Predicated region
    $region26: #{actor_forward.3} parent=1 // pred_check
      _
    $region27: #{actor_forward.3} parent=1 // pred_check_branch
      %64 = sbr.rel (0) target = $region29
    $region28: #{actor_forward.3} parent=1 // pred_region
      %65 = dma.done [#allocation6], 32
    $region29: #{actor_forward.3} parent=1 // pred_fallthru
      _
    // Predicated region
    $region30: #{actor_forward.3} parent=1 // pred_check
      _
    $region31: #{actor_forward.3} parent=1 // pred_check_branch
      %67 = sbr.rel (0) target = $region33
    $region32: #{actor_forward.3} parent=1 // pred_region
      %68 = dma.done [#allocation6], 2048
    $region33: #{actor_forward.3} parent=1 // pred_fallthru
      _
    // Predicated region
    $region34: #{actor_forward.3} parent=1 // pred_check
      _
    $region35: #{actor_forward.3} parent=1 // pred_check_branch
      %70 = sbr.rel (0) target = $region37
    $region36: #{actor_forward.3} parent=1 // pred_region
      %71 = dma.done [#allocation9], 16
    $region37: #{actor_forward.3} parent=1 // pred_fallthru
      _
    %v73 = vld [vmem:[%s0] sm:$0xff]
    %v74 = vld [vmem:[%s0 + $0x8] sm:$0xff]
    %v75 = vld [vmem:[%s0 + $0x10] sm:$0xff]
    %v76 = vld [vmem:[%s0 + $0x18] sm:$0xff]
    %v77 = vld [vmem:[#allocation2] sm:$0xff]
    %v78 = vld [vmem:[#allocation2 + $0x8] sm:$0xff]
    %v79 = vld [vmem:[#allocation2 + $0x10] sm:$0xff]
    %v80 = vld [vmem:[#allocation2 + $0x18] sm:$0xff]
    %v81 = vld [vmem:[#allocation2 + $0x20] sm:$0xff]
    %v82 = vld [vmem:[#allocation2 + $0x28] sm:$0xff]
    %v83 = vld [vmem:[#allocation2 + $0x30] sm:$0xff]
    %v84 = vld [vmem:[#allocation2 + $0x38] sm:$0xff]
    %v85 = vld [vmem:[#allocation2 + $0x40] sm:$0xff]
    %v86 = vld [vmem:[#allocation2 + $0x48] sm:$0xff]
    %v87 = vld [vmem:[#allocation2 + $0x50] sm:$0xff]
    %v88 = vld [vmem:[#allocation2 + $0x58] sm:$0xff]
    %v89 = vld [vmem:[#allocation2 + $0x60] sm:$0xff]
    %v90 = vld [vmem:[#allocation2 + $0x68] sm:$0xff]
    %v91 = vld [vmem:[#allocation2 + $0x70] sm:$0xff]
    %v92 = vld [vmem:[#allocation2 + $0x78] sm:$0xff]
    %v93 = vld [vmem:[#allocation2 + $0x80] sm:$0xff]
    %v94 = vld [vmem:[#allocation2 + $0x88] sm:$0xff]
    %v95 = vld [vmem:[#allocation2 + $0x90] sm:$0xff]
    %v96 = vld [vmem:[#allocation2 + $0x98] sm:$0xff]
    %v97 = vld [vmem:[#allocation2 + $0xa0] sm:$0xff]
    %v98 = vld [vmem:[#allocation2 + $0xa8] sm:$0xff]
    %v99 = vld [vmem:[#allocation2 + $0xb0] sm:$0xff]
    %v100 = vld [vmem:[#allocation2 + $0xb8] sm:$0xff]
    %v101 = vld [vmem:[#allocation2 + $0xc0] sm:$0xff]
    %v102 = vld [vmem:[#allocation2 + $0xc8] sm:$0xff]
    %v103 = vld [vmem:[#allocation2 + $0xd0] sm:$0xff]
    %v104 = vld [vmem:[#allocation2 + $0xd8] sm:$0xff]
    %v105 = vld [vmem:[#allocation2 + $0xe0] sm:$0xff]
    %v106 = vld [vmem:[#allocation2 + $0xe8] sm:$0xff]
    %v107 = vld [vmem:[#allocation2 + $0xf0] sm:$0xff]
    %v108 = vld [vmem:[#allocation2 + $0xf8] sm:$0xff]
    %v109 = vld [vmem:[#allocation2 + $0x100] sm:$0xff]
    %v110 = vld [vmem:[#allocation2 + $0x108] sm:$0xff]
    %v111 = vld [vmem:[#allocation2 + $0x110] sm:$0xff]
    %v112 = vld [vmem:[#allocation2 + $0x118] sm:$0xff]
    %v113 = vld [vmem:[#allocation2 + $0x120] sm:$0xff]
    %v114 = vld [vmem:[#allocation2 + $0x128] sm:$0xff]
    %v115 = vld [vmem:[#allocation2 + $0x130] sm:$0xff]
    %v116 = vld [vmem:[#allocation2 + $0x138] sm:$0xff]
    %v117 = vld [vmem:[#allocation2 + $0x140] sm:$0xff]
    %v118 = vld [vmem:[#allocation2 + $0x148] sm:$0xff]
    %v119 = vld [vmem:[#allocation2 + $0x150] sm:$0xff]
    %v120 = vld [vmem:[#allocation2 + $0x158] sm:$0xff]
    %v121 = vld [vmem:[#allocation2 + $0x160] sm:$0xff]
    %v122 = vld [vmem:[#allocation2 + $0x168] sm:$0xff]
    %v123 = vld [vmem:[#allocation2 + $0x170] sm:$0xff]
    %v124 = vld [vmem:[#allocation2 + $0x178] sm:$0xff]
    %v125 = vld [vmem:[#allocation2 + $0x180] sm:$0xff]
    %v126 = vld [vmem:[#allocation2 + $0x188] sm:$0xff]
    %v127 = vld [vmem:[#allocation2 + $0x190] sm:$0xff]
    %v128 = vld [vmem:[#allocation2 + $0x198] sm:$0xff]
    %v129 = vld [vmem:[#allocation2 + $0x1a0] sm:$0xff]
    %v130 = vld [vmem:[#allocation2 + $0x1a8] sm:$0xff]
    %v131 = vld [vmem:[#allocation2 + $0x1b0] sm:$0xff]
    %v132 = vld [vmem:[#allocation2 + $0x1b8] sm:$0xff]
    %v133 = vld [vmem:[#allocation2 + $0x1c0] sm:$0xff]
    %v134 = vld [vmem:[#allocation2 + $0x1c8] sm:$0xff]
    %v135 = vld [vmem:[#allocation2 + $0x1d0] sm:$0xff]
    %v136 = vld [vmem:[#allocation2 + $0x1d8] sm:$0xff]
    %v137 = vld [vmem:[#allocation2 + $0x1e0] sm:$0xff]
    %v138 = vld [vmem:[#allocation2 + $0x1e8] sm:$0xff]
    %v139 = vld [vmem:[#allocation2 + $0x1f0] sm:$0xff]
    %v140 = vld [vmem:[#allocation2 + $0x1f8] sm:$0xff]
    %v141 = vld [vmem:[#allocation2 + $0x200] sm:$0xff]
    %v142 = vld [vmem:[#allocation2 + $0x208] sm:$0xff]
    %v143 = vld [vmem:[#allocation2 + $0x210] sm:$0xff]
    %v144 = vld [vmem:[#allocation2 + $0x218] sm:$0xff]
    %v145 = vld [vmem:[#allocation2 + $0x220] sm:$0xff]
    %v146 = vld [vmem:[#allocation2 + $0x228] sm:$0xff]
    %v147 = vld [vmem:[#allocation2 + $0x230] sm:$0xff]
    %v148 = vld [vmem:[#allocation2 + $0x238] sm:$0xff]
    %v149 = vld [vmem:[#allocation2 + $0x240] sm:$0xff]
    %v150 = vld [vmem:[#allocation2 + $0x248] sm:$0xff]
    %v151 = vld [vmem:[#allocation2 + $0x250] sm:$0xff]
    %v152 = vld [vmem:[#allocation2 + $0x258] sm:$0xff]
    %v153 = vld [vmem:[#allocation2 + $0x260] sm:$0xff]
    %v154 = vld [vmem:[#allocation2 + $0x268] sm:$0xff]
    %v155 = vld [vmem:[#allocation2 + $0x270] sm:$0xff]
    %v156 = vld [vmem:[#allocation2 + $0x278] sm:$0xff]
    %v157 = vld [vmem:[#allocation2 + $0x280] sm:$0xff]
    %v158 = vld [vmem:[#allocation2 + $0x288] sm:$0xff]
    %v159 = vld [vmem:[#allocation2 + $0x290] sm:$0xff]
    %v160 = vld [vmem:[#allocation2 + $0x298] sm:$0xff]
    %v161 = vld [vmem:[#allocation2 + $0x2a0] sm:$0xff]
    %v162 = vld [vmem:[#allocation2 + $0x2a8] sm:$0xff]
    %v163 = vld [vmem:[#allocation2 + $0x2b0] sm:$0xff]
    %v164 = vld [vmem:[#allocation2 + $0x2b8] sm:$0xff]
    %v165 = vld [vmem:[#allocation2 + $0x2c0] sm:$0xff]
    %v166 = vld [vmem:[#allocation2 + $0x2c8] sm:$0xff]
    %v167 = vld [vmem:[#allocation2 + $0x2d0] sm:$0xff]
    %v168 = vld [vmem:[#allocation2 + $0x2d8] sm:$0xff]
    %v169 = vld [vmem:[#allocation2 + $0x2e0] sm:$0xff]
    %v170 = vld [vmem:[#allocation2 + $0x2e8] sm:$0xff]
    %v171 = vld [vmem:[#allocation2 + $0x2f0] sm:$0xff]
    %v172 = vld [vmem:[#allocation2 + $0x2f8] sm:$0xff]
    %v173 = vld [vmem:[#allocation2 + $0x300] sm:$0xff]
    %v174 = vld [vmem:[#allocation2 + $0x308] sm:$0xff]
    %v175 = vld [vmem:[#allocation2 + $0x310] sm:$0xff]
    %v176 = vld [vmem:[#allocation2 + $0x318] sm:$0xff]
    %v177 = vld [vmem:[#allocation2 + $0x320] sm:$0xff]
    %v178 = vld [vmem:[#allocation2 + $0x328] sm:$0xff]
    %v179 = vld [vmem:[#allocation2 + $0x330] sm:$0xff]
    %v180 = vld [vmem:[#allocation2 + $0x338] sm:$0xff]
    %v181 = vld [vmem:[#allocation2 + $0x340] sm:$0xff]
    %v182 = vld [vmem:[#allocation2 + $0x348] sm:$0xff]
    %v183 = vld [vmem:[#allocation2 + $0x350] sm:$0xff]
    %v184 = vld [vmem:[#allocation2 + $0x358] sm:$0xff]
    %v185 = vld [vmem:[#allocation2 + $0x360] sm:$0xff]
    %v186 = vld [vmem:[#allocation2 + $0x368] sm:$0xff]
    %v187 = vld [vmem:[#allocation2 + $0x370] sm:$0xff]
    %v188 = vld [vmem:[#allocation2 + $0x378] sm:$0xff]
    %v189 = vld [vmem:[#allocation2 + $0x380] sm:$0xff]
    %v190 = vld [vmem:[#allocation2 + $0x388] sm:$0xff]
    %v191 = vld [vmem:[#allocation2 + $0x390] sm:$0xff]
    %v192 = vld [vmem:[#allocation2 + $0x398] sm:$0xff]
    %v193 = vld [vmem:[#allocation2 + $0x3a0] sm:$0xff]
    %v194 = vld [vmem:[#allocation2 + $0x3a8] sm:$0xff]
    %v195 = vld [vmem:[#allocation2 + $0x3b0] sm:$0xff]
    %v196 = vld [vmem:[#allocation2 + $0x3b8] sm:$0xff]
    %v197 = vld [vmem:[#allocation2 + $0x3c0] sm:$0xff]
    %v198 = vld [vmem:[#allocation2 + $0x3c8] sm:$0xff]
    %v199 = vld [vmem:[#allocation2 + $0x3d0] sm:$0xff]
    %v200 = vld [vmem:[#allocation2 + $0x3d8] sm:$0xff]
    %v201 = vld [vmem:[#allocation2 + $0x3e0] sm:$0xff]
    %v202 = vld [vmem:[#allocation2 + $0x3e8] sm:$0xff]
    %v203 = vld [vmem:[#allocation2 + $0x3f0] sm:$0xff]
    %v204 = vld [vmem:[#allocation2 + $0x3f8] sm:$0xff]
    %v205 = vld [vmem:[#allocation2 + $0x400] sm:$0xff]
    %v206 = vld [vmem:[#allocation2 + $0x408] sm:$0xff]
    %v207 = vld [vmem:[#allocation2 + $0x410] sm:$0xff]
    %v208 = vld [vmem:[#allocation2 + $0x418] sm:$0xff]
    %v209 = vld [vmem:[#allocation2 + $0x420] sm:$0xff]
    %v210 = vld [vmem:[#allocation2 + $0x428] sm:$0xff]
    %v211 = vld [vmem:[#allocation2 + $0x430] sm:$0xff]
    %v212 = vld [vmem:[#allocation2 + $0x438] sm:$0xff]
    %v213 = vld [vmem:[#allocation2 + $0x440] sm:$0xff]
    %v214 = vld [vmem:[#allocation2 + $0x448] sm:$0xff]
    %v215 = vld [vmem:[#allocation2 + $0x450] sm:$0xff]
    %v216 = vld [vmem:[#allocation2 + $0x458] sm:$0xff]
    %v217 = vld [vmem:[#allocation2 + $0x460] sm:$0xff]
    %v218 = vld [vmem:[#allocation2 + $0x468] sm:$0xff]
    %v219 = vld [vmem:[#allocation2 + $0x470] sm:$0xff]
    %v220 = vld [vmem:[#allocation2 + $0x478] sm:$0xff]
    %v221 = vld [vmem:[#allocation2 + $0x480] sm:$0xff]
    %v222 = vld [vmem:[#allocation2 + $0x488] sm:$0xff]
    %v223 = vld [vmem:[#allocation2 + $0x490] sm:$0xff]
    %v224 = vld [vmem:[#allocation2 + $0x498] sm:$0xff]
    %v225 = vld [vmem:[#allocation2 + $0x4a0] sm:$0xff]
    %v226 = vld [vmem:[#allocation2 + $0x4a8] sm:$0xff]
    %v227 = vld [vmem:[#allocation2 + $0x4b0] sm:$0xff]
    %v228 = vld [vmem:[#allocation2 + $0x4b8] sm:$0xff]
    %v229 = vld [vmem:[#allocation2 + $0x4c0] sm:$0xff]
    %v230 = vld [vmem:[#allocation2 + $0x4c8] sm:$0xff]
    %v231 = vld [vmem:[#allocation2 + $0x4d0] sm:$0xff]
    %v232 = vld [vmem:[#allocation2 + $0x4d8] sm:$0xff]
    %v233 = vld [vmem:[#allocation2 + $0x4e0] sm:$0xff]
    %v234 = vld [vmem:[#allocation2 + $0x4e8] sm:$0xff]
    %v235 = vld [vmem:[#allocation2 + $0x4f0] sm:$0xff]
    %v236 = vld [vmem:[#allocation2 + $0x4f8] sm:$0xff]
    %v237 = vld [vmem:[#allocation2 + $0x500] sm:$0xff]
    %v238 = vld [vmem:[#allocation2 + $0x508] sm:$0xff]
    %v239 = vld [vmem:[#allocation2 + $0x510] sm:$0xff]
    %v240 = vld [vmem:[#allocation2 + $0x518] sm:$0xff]
    %v241 = vld [vmem:[#allocation2 + $0x520] sm:$0xff]
    %v242 = vld [vmem:[#allocation2 + $0x528] sm:$0xff]
    %v243 = vld [vmem:[#allocation2 + $0x530] sm:$0xff]
    %v244 = vld [vmem:[#allocation2 + $0x538] sm:$0xff]
    %v245 = vld [vmem:[#allocation2 + $0x540] sm:$0xff]
    %v246 = vld [vmem:[#allocation2 + $0x548] sm:$0xff]
    %v247 = vld [vmem:[#allocation2 + $0x550] sm:$0xff]
    %v248 = vld [vmem:[#allocation2 + $0x558] sm:$0xff]
    %v249 = vld [vmem:[#allocation2 + $0x560] sm:$0xff]
    %v250 = vld [vmem:[#allocation2 + $0x568] sm:$0xff]
    %v251 = vld [vmem:[#allocation2 + $0x570] sm:$0xff]
    %v252 = vld [vmem:[#allocation2 + $0x578] sm:$0xff]
    %v253 = vld [vmem:[#allocation2 + $0x580] sm:$0xff]
    %v254 = vld [vmem:[#allocation2 + $0x588] sm:$0xff]
    %v255 = vld [vmem:[#allocation2 + $0x590] sm:$0xff]
    %v256 = vld [vmem:[#allocation2 + $0x598] sm:$0xff]
    %v257 = vld [vmem:[#allocation2 + $0x5a0] sm:$0xff]
    %v258 = vld [vmem:[#allocation2 + $0x5a8] sm:$0xff]
    %v259 = vld [vmem:[#allocation2 + $0x5b0] sm:$0xff]
    %v260 = vld [vmem:[#allocation2 + $0x5b8] sm:$0xff]
    %v261 = vld [vmem:[#allocation2 + $0x5c0] sm:$0xff]
    %v262 = vld [vmem:[#allocation2 + $0x5c8] sm:$0xff]
    %v263 = vld [vmem:[#allocation2 + $0x5d0] sm:$0xff]
    %v264 = vld [vmem:[#allocation2 + $0x5d8] sm:$0xff]
    %v265 = vld [vmem:[#allocation2 + $0x5e0] sm:$0xff]
    %v266 = vld [vmem:[#allocation2 + $0x5e8] sm:$0xff]
    %v267 = vld [vmem:[#allocation2 + $0x5f0] sm:$0xff]
    %v268 = vld [vmem:[#allocation2 + $0x5f8] sm:$0xff]
    %v269 = vld [vmem:[#allocation2 + $0x600] sm:$0xff]
    %v270 = vld [vmem:[#allocation2 + $0x608] sm:$0xff]
    %v271 = vld [vmem:[#allocation2 + $0x610] sm:$0xff]
    %v272 = vld [vmem:[#allocation2 + $0x618] sm:$0xff]
    %v273 = vld [vmem:[#allocation2 + $0x620] sm:$0xff]
    %v274 = vld [vmem:[#allocation2 + $0x628] sm:$0xff]
    %v275 = vld [vmem:[#allocation2 + $0x630] sm:$0xff]
    %v276 = vld [vmem:[#allocation2 + $0x638] sm:$0xff]
    %v277 = vld [vmem:[#allocation2 + $0x640] sm:$0xff]
    %v278 = vld [vmem:[#allocation2 + $0x648] sm:$0xff]
    %v279 = vld [vmem:[#allocation2 + $0x650] sm:$0xff]
    %v280 = vld [vmem:[#allocation2 + $0x658] sm:$0xff]
    %v281 = vld [vmem:[#allocation2 + $0x660] sm:$0xff]
    %v282 = vld [vmem:[#allocation2 + $0x668] sm:$0xff]
    %v283 = vld [vmem:[#allocation2 + $0x670] sm:$0xff]
    %v284 = vld [vmem:[#allocation2 + $0x678] sm:$0xff]
    %v285 = vld [vmem:[#allocation2 + $0x680] sm:$0xff]
    %v286 = vld [vmem:[#allocation2 + $0x688] sm:$0xff]
    %v287 = vld [vmem:[#allocation2 + $0x690] sm:$0xff]
    %v288 = vld [vmem:[#allocation2 + $0x698] sm:$0xff]
    %v289 = vld [vmem:[#allocation2 + $0x6a0] sm:$0xff]
    %v290 = vld [vmem:[#allocation2 + $0x6a8] sm:$0xff]
    %v291 = vld [vmem:[#allocation2 + $0x6b0] sm:$0xff]
    %v292 = vld [vmem:[#allocation2 + $0x6b8] sm:$0xff]
    %v293 = vld [vmem:[#allocation2 + $0x6c0] sm:$0xff]
    %v294 = vld [vmem:[#allocation2 + $0x6c8] sm:$0xff]
    %v295 = vld [vmem:[#allocation2 + $0x6d0] sm:$0xff]
    %v296 = vld [vmem:[#allocation2 + $0x6d8] sm:$0xff]
    %v297 = vld [vmem:[#allocation2 + $0x6e0] sm:$0xff]
    %v298 = vld [vmem:[#allocation2 + $0x6e8] sm:$0xff]
    %v299 = vld [vmem:[#allocation2 + $0x6f0] sm:$0xff]
    %v300 = vld [vmem:[#allocation2 + $0x6f8] sm:$0xff]
    %v301 = vld [vmem:[#allocation2 + $0x700] sm:$0xff]
    %v302 = vld [vmem:[#allocation2 + $0x708] sm:$0xff]
    %v303 = vld [vmem:[#allocation2 + $0x710] sm:$0xff]
    %v304 = vld [vmem:[#allocation2 + $0x718] sm:$0xff]
    %v305 = vld [vmem:[#allocation2 + $0x720] sm:$0xff]
    %v306 = vld [vmem:[#allocation2 + $0x728] sm:$0xff]
    %v307 = vld [vmem:[#allocation2 + $0x730] sm:$0xff]
    %v308 = vld [vmem:[#allocation2 + $0x738] sm:$0xff]
    %v309 = vld [vmem:[#allocation2 + $0x740] sm:$0xff]
    %v310 = vld [vmem:[#allocation2 + $0x748] sm:$0xff]
    %v311 = vld [vmem:[#allocation2 + $0x750] sm:$0xff]
    %v312 = vld [vmem:[#allocation2 + $0x758] sm:$0xff]
    %v313 = vld [vmem:[#allocation2 + $0x760] sm:$0xff]
    %v314 = vld [vmem:[#allocation2 + $0x768] sm:$0xff]
    %v315 = vld [vmem:[#allocation2 + $0x770] sm:$0xff]
    %v316 = vld [vmem:[#allocation2 + $0x778] sm:$0xff]
    %v317 = vld [vmem:[#allocation2 + $0x780] sm:$0xff]
    %v318 = vld [vmem:[#allocation2 + $0x788] sm:$0xff]
    %v319 = vld [vmem:[#allocation2 + $0x790] sm:$0xff]
    %v320 = vld [vmem:[#allocation2 + $0x798] sm:$0xff]
    %v321 = vld [vmem:[#allocation2 + $0x7a0] sm:$0xff]
    %v322 = vld [vmem:[#allocation2 + $0x7a8] sm:$0xff]
    %v323 = vld [vmem:[#allocation2 + $0x7b0] sm:$0xff]
    %v324 = vld [vmem:[#allocation2 + $0x7b8] sm:$0xff]
    %v325 = vld [vmem:[#allocation2 + $0x7c0] sm:$0xff]
    %v326 = vld [vmem:[#allocation2 + $0x7c8] sm:$0xff]
    %v327 = vld [vmem:[#allocation2 + $0x7d0] sm:$0xff]
    %v328 = vld [vmem:[#allocation2 + $0x7d8] sm:$0xff]
    %v329 = vld [vmem:[#allocation2 + $0x7e0] sm:$0xff]
    %v330 = vld [vmem:[#allocation2 + $0x7e8] sm:$0xff]
    %v331 = vld [vmem:[#allocation2 + $0x7f0] sm:$0xff]
    %v332 = vld [vmem:[#allocation2 + $0x7f8] sm:$0xff]
    %v333 = vld [vmem:[#allocation2 + $0x800] sm:$0xff]
    %v334 = vld [vmem:[#allocation2 + $0x808] sm:$0xff]
    %v335 = vld [vmem:[#allocation2 + $0x810] sm:$0xff]
    %v336 = vld [vmem:[#allocation2 + $0x818] sm:$0xff]
    %v337 = vld [vmem:[#allocation2 + $0x820] sm:$0xff]
    %v338 = vld [vmem:[#allocation2 + $0x828] sm:$0xff]
    %v339 = vld [vmem:[#allocation2 + $0x830] sm:$0xff]
    %v340 = vld [vmem:[#allocation2 + $0x838] sm:$0xff]
    %v341 = vld [vmem:[#allocation2 + $0x840] sm:$0xff]
    %v342 = vld [vmem:[#allocation2 + $0x848] sm:$0xff]
    %v343 = vld [vmem:[#allocation2 + $0x850] sm:$0xff]
    %v344 = vld [vmem:[#allocation2 + $0x858] sm:$0xff]
    %v345 = vld [vmem:[#allocation2 + $0x860] sm:$0xff]
    %v346 = vld [vmem:[#allocation2 + $0x868] sm:$0xff]
    %v347 = vld [vmem:[#allocation2 + $0x870] sm:$0xff]
    %v348 = vld [vmem:[#allocation2 + $0x878] sm:$0xff]
    %v349 = vld [vmem:[#allocation2 + $0x880] sm:$0xff]
    %v350 = vld [vmem:[#allocation2 + $0x888] sm:$0xff]
    %v351 = vld [vmem:[#allocation2 + $0x890] sm:$0xff]
    %v352 = vld [vmem:[#allocation2 + $0x898] sm:$0xff]
    %v353 = vld [vmem:[#allocation2 + $0x8a0] sm:$0xff]
    %v354 = vld [vmem:[#allocation2 + $0x8a8] sm:$0xff]
    %v355 = vld [vmem:[#allocation2 + $0x8b0] sm:$0xff]
    %v356 = vld [vmem:[#allocation2 + $0x8b8] sm:$0xff]
    %v357 = vld [vmem:[#allocation2 + $0x8c0] sm:$0xff]
    %v358 = vld [vmem:[#allocation2 + $0x8c8] sm:$0xff]
    %v359 = vld [vmem:[#allocation2 + $0x8d0] sm:$0xff]
    %v360 = vld [vmem:[#allocation2 + $0x8d8] sm:$0xff]
    %v361 = vld [vmem:[#allocation2 + $0x8e0] sm:$0xff]
    %v362 = vld [vmem:[#allocation2 + $0x8e8] sm:$0xff]
    %v363 = vld [vmem:[#allocation2 + $0x8f0] sm:$0xff]
    %v364 = vld [vmem:[#allocation2 + $0x8f8] sm:$0xff]
    %v365 = vld [vmem:[#allocation2 + $0x900] sm:$0xff]
    %v366 = vld [vmem:[#allocation2 + $0x908] sm:$0xff]
    %v367 = vld [vmem:[#allocation2 + $0x910] sm:$0xff]
    %v368 = vld [vmem:[#allocation2 + $0x918] sm:$0xff]
    %v369 = vld [vmem:[#allocation2 + $0x920] sm:$0xff]
    %v370 = vld [vmem:[#allocation2 + $0x928] sm:$0xff]
    %v371 = vld [vmem:[#allocation2 + $0x930] sm:$0xff]
    %v372 = vld [vmem:[#allocation2 + $0x938] sm:$0xff]
    %v373 = vld [vmem:[#allocation2 + $0x940] sm:$0xff]
    %v374 = vld [vmem:[#allocation2 + $0x948] sm:$0xff]
    %v375 = vld [vmem:[#allocation2 + $0x950] sm:$0xff]
    %v376 = vld [vmem:[#allocation2 + $0x958] sm:$0xff]
    %v377 = vld [vmem:[#allocation2 + $0x960] sm:$0xff]
    %v378 = vld [vmem:[#allocation2 + $0x968] sm:$0xff]
    %v379 = vld [vmem:[#allocation2 + $0x970] sm:$0xff]
    %v380 = vld [vmem:[#allocation2 + $0x978] sm:$0xff]
    %v381 = vld [vmem:[#allocation2 + $0x980] sm:$0xff]
    %v382 = vld [vmem:[#allocation2 + $0x988] sm:$0xff]
    %v383 = vld [vmem:[#allocation2 + $0x990] sm:$0xff]
    %v384 = vld [vmem:[#allocation2 + $0x998] sm:$0xff]
    %v385 = vld [vmem:[#allocation2 + $0x9a0] sm:$0xff]
    %v386 = vld [vmem:[#allocation2 + $0x9a8] sm:$0xff]
    %v387 = vld [vmem:[#allocation2 + $0x9b0] sm:$0xff]
    %v388 = vld [vmem:[#allocation2 + $0x9b8] sm:$0xff]
    %v389 = vld [vmem:[#allocation2 + $0x9c0] sm:$0xff]
    %v390 = vld [vmem:[#allocation2 + $0x9c8] sm:$0xff]
    %v391 = vld [vmem:[#allocation2 + $0x9d0] sm:$0xff]
    %v392 = vld [vmem:[#allocation2 + $0x9d8] sm:$0xff]
    %v393 = vld [vmem:[#allocation2 + $0x9e0] sm:$0xff]
    %v394 = vld [vmem:[#allocation2 + $0x9e8] sm:$0xff]
    %v395 = vld [vmem:[#allocation2 + $0x9f0] sm:$0xff]
    %v396 = vld [vmem:[#allocation2 + $0x9f8] sm:$0xff]
    %v397 = vld [vmem:[#allocation2 + $0xa00] sm:$0xff]
    %v398 = vld [vmem:[#allocation2 + $0xa08] sm:$0xff]
    %v399 = vld [vmem:[#allocation2 + $0xa10] sm:$0xff]
    %v400 = vld [vmem:[#allocation2 + $0xa18] sm:$0xff]
    %v401 = vld [vmem:[#allocation2 + $0xa20] sm:$0xff]
    %v402 = vld [vmem:[#allocation2 + $0xa28] sm:$0xff]
    %v403 = vld [vmem:[#allocation2 + $0xa30] sm:$0xff]
    %v404 = vld [vmem:[#allocation2 + $0xa38] sm:$0xff]
    %v405 = vld [vmem:[#allocation2 + $0xa40] sm:$0xff]
    %v406 = vld [vmem:[#allocation2 + $0xa48] sm:$0xff]
    %v407 = vld [vmem:[#allocation2 + $0xa50] sm:$0xff]
    %v408 = vld [vmem:[#allocation2 + $0xa58] sm:$0xff]
    %v409 = vld [vmem:[#allocation2 + $0xa60] sm:$0xff]
    %v410 = vld [vmem:[#allocation2 + $0xa68] sm:$0xff]
    %v411 = vld [vmem:[#allocation2 + $0xa70] sm:$0xff]
    %v412 = vld [vmem:[#allocation2 + $0xa78] sm:$0xff]
    %v413 = vld [vmem:[#allocation2 + $0xa80] sm:$0xff]
    %v414 = vld [vmem:[#allocation2 + $0xa88] sm:$0xff]
    %v415 = vld [vmem:[#allocation2 + $0xa90] sm:$0xff]
    %v416 = vld [vmem:[#allocation2 + $0xa98] sm:$0xff]
    %v417 = vld [vmem:[#allocation2 + $0xaa0] sm:$0xff]
    %v418 = vld [vmem:[#allocation2 + $0xaa8] sm:$0xff]
    %v419 = vld [vmem:[#allocation2 + $0xab0] sm:$0xff]
    %v420 = vld [vmem:[#allocation2 + $0xab8] sm:$0xff]
    %v421 = vld [vmem:[#allocation2 + $0xac0] sm:$0xff]
    %v422 = vld [vmem:[#allocation2 + $0xac8] sm:$0xff]
    %v423 = vld [vmem:[#allocation2 + $0xad0] sm:$0xff]
    %v424 = vld [vmem:[#allocation2 + $0xad8] sm:$0xff]
    %v425 = vld [vmem:[#allocation2 + $0xae0] sm:$0xff]
    %v426 = vld [vmem:[#allocation2 + $0xae8] sm:$0xff]
    %v427 = vld [vmem:[#allocation2 + $0xaf0] sm:$0xff]
    %v428 = vld [vmem:[#allocation2 + $0xaf8] sm:$0xff]
    %v429 = vld [vmem:[#allocation2 + $0xb00] sm:$0xff]
    %v430 = vld [vmem:[#allocation2 + $0xb08] sm:$0xff]
    %v431 = vld [vmem:[#allocation2 + $0xb10] sm:$0xff]
    %v432 = vld [vmem:[#allocation2 + $0xb18] sm:$0xff]
    %v433 = vld [vmem:[#allocation2 + $0xb20] sm:$0xff]
    %v434 = vld [vmem:[#allocation2 + $0xb28] sm:$0xff]
    %v435 = vld [vmem:[#allocation2 + $0xb30] sm:$0xff]
    %v436 = vld [vmem:[#allocation2 + $0xb38] sm:$0xff]
    %v437 = vld [vmem:[#allocation2 + $0xb40] sm:$0xff]
    %v438 = vld [vmem:[#allocation2 + $0xb48] sm:$0xff]
    %v439 = vld [vmem:[#allocation2 + $0xb50] sm:$0xff]
    %v440 = vld [vmem:[#allocation2 + $0xb58] sm:$0xff]
    %v441 = vld [vmem:[#allocation2 + $0xb60] sm:$0xff]
    %v442 = vld [vmem:[#allocation2 + $0xb68] sm:$0xff]
    %v443 = vld [vmem:[#allocation2 + $0xb70] sm:$0xff]
    %v444 = vld [vmem:[#allocation2 + $0xb78] sm:$0xff]
    %v445 = vld [vmem:[#allocation2 + $0xb80] sm:$0xff]
    %v446 = vld [vmem:[#allocation2 + $0xb88] sm:$0xff]
    %v447 = vld [vmem:[#allocation2 + $0xb90] sm:$0xff]
    %v448 = vld [vmem:[#allocation2 + $0xb98] sm:$0xff]
    %v449 = vld [vmem:[#allocation2 + $0xba0] sm:$0xff]
    %v450 = vld [vmem:[#allocation2 + $0xba8] sm:$0xff]
    %v451 = vld [vmem:[#allocation2 + $0xbb0] sm:$0xff]
    %v452 = vld [vmem:[#allocation2 + $0xbb8] sm:$0xff]
    %v453 = vld [vmem:[#allocation2 + $0xbc0] sm:$0xff]
    %v454 = vld [vmem:[#allocation2 + $0xbc8] sm:$0xff]
    %v455 = vld [vmem:[#allocation2 + $0xbd0] sm:$0xff]
    %v456 = vld [vmem:[#allocation2 + $0xbd8] sm:$0xff]
    %v457 = vld [vmem:[#allocation2 + $0xbe0] sm:$0xff]
    %v458 = vld [vmem:[#allocation2 + $0xbe8] sm:$0xff]
    %v459 = vld [vmem:[#allocation2 + $0xbf0] sm:$0xff]
    %v460 = vld [vmem:[#allocation2 + $0xbf8] sm:$0xff]
    %v461 = vld [vmem:[#allocation2 + $0xc00] sm:$0xff]
    %v462 = vld [vmem:[#allocation2 + $0xc08] sm:$0xff]
    %v463 = vld [vmem:[#allocation2 + $0xc10] sm:$0xff]
    %v464 = vld [vmem:[#allocation2 + $0xc18] sm:$0xff]
    %v465 = vld [vmem:[#allocation2 + $0xc20] sm:$0xff]
    %v466 = vld [vmem:[#allocation2 + $0xc28] sm:$0xff]
    %v467 = vld [vmem:[#allocation2 + $0xc30] sm:$0xff]
    %v468 = vld [vmem:[#allocation2 + $0xc38] sm:$0xff]
    %v469 = vld [vmem:[#allocation2 + $0xc40] sm:$0xff]
    %v470 = vld [vmem:[#allocation2 + $0xc48] sm:$0xff]
    %v471 = vld [vmem:[#allocation2 + $0xc50] sm:$0xff]
    %v472 = vld [vmem:[#allocation2 + $0xc58] sm:$0xff]
    %v473 = vld [vmem:[#allocation2 + $0xc60] sm:$0xff]
    %v474 = vld [vmem:[#allocation2 + $0xc68] sm:$0xff]
    %v475 = vld [vmem:[#allocation2 + $0xc70] sm:$0xff]
    %v476 = vld [vmem:[#allocation2 + $0xc78] sm:$0xff]
    %v477 = vld [vmem:[#allocation2 + $0xc80] sm:$0xff]
    %v478 = vld [vmem:[#allocation2 + $0xc88] sm:$0xff]
    %v479 = vld [vmem:[#allocation2 + $0xc90] sm:$0xff]
    %v480 = vld [vmem:[#allocation2 + $0xc98] sm:$0xff]
    %v481 = vld [vmem:[#allocation2 + $0xca0] sm:$0xff]
    %v482 = vld [vmem:[#allocation2 + $0xca8] sm:$0xff]
    %v483 = vld [vmem:[#allocation2 + $0xcb0] sm:$0xff]
    %v484 = vld [vmem:[#allocation2 + $0xcb8] sm:$0xff]
    %v485 = vld [vmem:[#allocation2 + $0xcc0] sm:$0xff]
    %v486 = vld [vmem:[#allocation2 + $0xcc8] sm:$0xff]
    %v487 = vld [vmem:[#allocation2 + $0xcd0] sm:$0xff]
    %v488 = vld [vmem:[#allocation2 + $0xcd8] sm:$0xff]
    %v489 = vld [vmem:[#allocation2 + $0xce0] sm:$0xff]
    %v490 = vld [vmem:[#allocation2 + $0xce8] sm:$0xff]
    %v491 = vld [vmem:[#allocation2 + $0xcf0] sm:$0xff]
    %v492 = vld [vmem:[#allocation2 + $0xcf8] sm:$0xff]
    %v493 = vld [vmem:[#allocation2 + $0xd00] sm:$0xff]
    %v494 = vld [vmem:[#allocation2 + $0xd08] sm:$0xff]
    %v495 = vld [vmem:[#allocation2 + $0xd10] sm:$0xff]
    %v496 = vld [vmem:[#allocation2 + $0xd18] sm:$0xff]
    %v497 = vld [vmem:[#allocation2 + $0xd20] sm:$0xff]
    %v498 = vld [vmem:[#allocation2 + $0xd28] sm:$0xff]
    %v499 = vld [vmem:[#allocation2 + $0xd30] sm:$0xff]
    %v500 = vld [vmem:[#allocation2 + $0xd38] sm:$0xff]
    %v501 = vld [vmem:[#allocation2 + $0xd40] sm:$0xff]
    %v502 = vld [vmem:[#allocation2 + $0xd48] sm:$0xff]
    %v503 = vld [vmem:[#allocation2 + $0xd50] sm:$0xff]
    %v504 = vld [vmem:[#allocation2 + $0xd58] sm:$0xff]
    %v505 = vld [vmem:[#allocation2 + $0xd60] sm:$0xff]
    %v506 = vld [vmem:[#allocation2 + $0xd68] sm:$0xff]
    %v507 = vld [vmem:[#allocation2 + $0xd70] sm:$0xff]
    %v508 = vld [vmem:[#allocation2 + $0xd78] sm:$0xff]
    %v509 = vld [vmem:[#allocation2 + $0xd80] sm:$0xff]
    %v510 = vld [vmem:[#allocation2 + $0xd88] sm:$0xff]
    %v511 = vld [vmem:[#allocation2 + $0xd90] sm:$0xff]
    %v512 = vld [vmem:[#allocation2 + $0xd98] sm:$0xff]
    %v513 = vld [vmem:[#allocation2 + $0xda0] sm:$0xff]
    %v514 = vld [vmem:[#allocation2 + $0xda8] sm:$0xff]
    %v515 = vld [vmem:[#allocation2 + $0xdb0] sm:$0xff]
    %v516 = vld [vmem:[#allocation2 + $0xdb8] sm:$0xff]
    %v517 = vld [vmem:[#allocation2 + $0xdc0] sm:$0xff]
    %v518 = vld [vmem:[#allocation2 + $0xdc8] sm:$0xff]
    %v519 = vld [vmem:[#allocation2 + $0xdd0] sm:$0xff]
    %v520 = vld [vmem:[#allocation2 + $0xdd8] sm:$0xff]
    %v521 = vld [vmem:[#allocation2 + $0xde0] sm:$0xff]
    %v522 = vld [vmem:[#allocation2 + $0xde8] sm:$0xff]
    %v523 = vld [vmem:[#allocation2 + $0xdf0] sm:$0xff]
    %v524 = vld [vmem:[#allocation2 + $0xdf8] sm:$0xff]
    %v525 = vld [vmem:[#allocation2 + $0xe00] sm:$0xff]
    %v526 = vld [vmem:[#allocation2 + $0xe08] sm:$0xff]
    %v527 = vld [vmem:[#allocation2 + $0xe10] sm:$0xff]
    %v528 = vld [vmem:[#allocation2 + $0xe18] sm:$0xff]
    %v529 = vld [vmem:[#allocation2 + $0xe20] sm:$0xff]
    %v530 = vld [vmem:[#allocation2 + $0xe28] sm:$0xff]
    %v531 = vld [vmem:[#allocation2 + $0xe30] sm:$0xff]
    %v532 = vld [vmem:[#allocation2 + $0xe38] sm:$0xff]
    %v533 = vld [vmem:[#allocation2 + $0xe40] sm:$0xff]
    %v534 = vld [vmem:[#allocation2 + $0xe48] sm:$0xff]
    %v535 = vld [vmem:[#allocation2 + $0xe50] sm:$0xff]
    %v536 = vld [vmem:[#allocation2 + $0xe58] sm:$0xff]
    %v537 = vld [vmem:[#allocation2 + $0xe60] sm:$0xff]
    %v538 = vld [vmem:[#allocation2 + $0xe68] sm:$0xff]
    %v539 = vld [vmem:[#allocation2 + $0xe70] sm:$0xff]
    %v540 = vld [vmem:[#allocation2 + $0xe78] sm:$0xff]
    %v541 = vld [vmem:[#allocation2 + $0xe80] sm:$0xff]
    %v542 = vld [vmem:[#allocation2 + $0xe88] sm:$0xff]
    %v543 = vld [vmem:[#allocation2 + $0xe90] sm:$0xff]
    %v544 = vld [vmem:[#allocation2 + $0xe98] sm:$0xff]
    %v545 = vld [vmem:[#allocation2 + $0xea0] sm:$0xff]
    %v546 = vld [vmem:[#allocation2 + $0xea8] sm:$0xff]
    %v547 = vld [vmem:[#allocation2 + $0xeb0] sm:$0xff]
    %v548 = vld [vmem:[#allocation2 + $0xeb8] sm:$0xff]
    %v549 = vld [vmem:[#allocation2 + $0xec0] sm:$0xff]
    %v550 = vld [vmem:[#allocation2 + $0xec8] sm:$0xff]
    %v551 = vld [vmem:[#allocation2 + $0xed0] sm:$0xff]
    %v552 = vld [vmem:[#allocation2 + $0xed8] sm:$0xff]
    %v553 = vld [vmem:[#allocation2 + $0xee0] sm:$0xff]
    %v554 = vld [vmem:[#allocation2 + $0xee8] sm:$0xff]
    %v555 = vld [vmem:[#allocation2 + $0xef0] sm:$0xff]
    %v556 = vld [vmem:[#allocation2 + $0xef8] sm:$0xff]
    %v557 = vld [vmem:[#allocation2 + $0xf00] sm:$0xff]
    %v558 = vld [vmem:[#allocation2 + $0xf08] sm:$0xff]
    %v559 = vld [vmem:[#allocation2 + $0xf10] sm:$0xff]
    %v560 = vld [vmem:[#allocation2 + $0xf18] sm:$0xff]
    %v561 = vld [vmem:[#allocation2 + $0xf20] sm:$0xff]
    %v562 = vld [vmem:[#allocation2 + $0xf28] sm:$0xff]
    %v563 = vld [vmem:[#allocation2 + $0xf30] sm:$0xff]
    %v564 = vld [vmem:[#allocation2 + $0xf38] sm:$0xff]
    %v565 = vld [vmem:[#allocation2 + $0xf40] sm:$0xff]
    %v566 = vld [vmem:[#allocation2 + $0xf48] sm:$0xff]
    %v567 = vld [vmem:[#allocation2 + $0xf50] sm:$0xff]
    %v568 = vld [vmem:[#allocation2 + $0xf58] sm:$0xff]
    %v569 = vld [vmem:[#allocation2 + $0xf60] sm:$0xff]
    %v570 = vld [vmem:[#allocation2 + $0xf68] sm:$0xff]
    %v571 = vld [vmem:[#allocation2 + $0xf70] sm:$0xff]
    %v572 = vld [vmem:[#allocation2 + $0xf78] sm:$0xff]
    %v573 = vld [vmem:[#allocation2 + $0xf80] sm:$0xff]
    %v574 = vld [vmem:[#allocation2 + $0xf88] sm:$0xff]
    %v575 = vld [vmem:[#allocation2 + $0xf90] sm:$0xff]
    %v576 = vld [vmem:[#allocation2 + $0xf98] sm:$0xff]
    %v577 = vld [vmem:[#allocation2 + $0xfa0] sm:$0xff]
    %v578 = vld [vmem:[#allocation2 + $0xfa8] sm:$0xff]
    %v579 = vld [vmem:[#allocation2 + $0xfb0] sm:$0xff]
    %v580 = vld [vmem:[#allocation2 + $0xfb8] sm:$0xff]
    %v581 = vld [vmem:[#allocation2 + $0xfc0] sm:$0xff]
    %v582 = vld [vmem:[#allocation2 + $0xfc8] sm:$0xff]
    %v583 = vld [vmem:[#allocation2 + $0xfd0] sm:$0xff]
    %v584 = vld [vmem:[#allocation2 + $0xfd8] sm:$0xff]
    %v585 = vld [vmem:[#allocation2 + $0xfe0] sm:$0xff]
    %v586 = vld [vmem:[#allocation2 + $0xfe8] sm:$0xff]
    %v587 = vld [vmem:[#allocation2 + $0xff0] sm:$0xff]
    %v588 = vld [vmem:[#allocation2 + $0xff8] sm:$0xff]
    %v589 = vld [vmem:[#allocation5] sm:$0x3]
    %v591 = vlaneseq
    %v592 = vshrl.u32 %v591, 7
    %v593 = vsub.s32 0, %v592
    %v594 = vrot.slane %v589, %v593
    %v595 = vlaneseq
    %v596 = vshrl.u32 %v595, 7
    %v597 = vsub.s32 1, %v596
    %v598 = vrot.slane %v589, %v597
    %v605 = vcombine.high %v73, %v73
    %v607 = vunpack.c.l.s4 1966171168
    %v608 = vunpack.c.0.s8 %v607
    %v609 = vlaneseq
    %v610 = vshrl.u32 %v609, 7
    %v611 = vsub.s32 %v608, %v610
    %v612 = vrot.slane %v73, %v611
    %v614 = vunpack.c.l.s4 1966171168
    %v615 = vunpack.c.0.s8 %v614
    %v616 = vlaneseq
    %v617 = vshrl.u32 %v616, 7
    %v618 = vsub.s32 %v615, %v617
    %v619 = vrot.slane %v605, %v618
    %v620 = vcombine.high %v612, %v612
    %v621 = vcombine.high %v619, %v619
    %v623 = vunpack.c.l.s4 1966171168
    %v624 = vunpack.c.0.s8 %v623
    %v625 = vlaneseq
    %v626 = vshrl.u32 %v625, 7
    %v627 = vsub.s32 %v624, %v626
    %v628 = vrot.slane %v612, %v627
    %v630 = vunpack.c.l.s4 1966171168
    %v631 = vunpack.c.0.s8 %v630
    %v632 = vlaneseq
    %v633 = vshrl.u32 %v632, 7
    %v634 = vsub.s32 %v631, %v633
    %v635 = vrot.slane %v619, %v634
    %v637 = vunpack.c.l.s4 1966171168
    %v638 = vunpack.c.0.s8 %v637
    %v639 = vlaneseq
    %v640 = vshrl.u32 %v639, 7
    %v641 = vsub.s32 %v638, %v640
    %v642 = vrot.slane %v620, %v641
    %v644 = vunpack.c.l.s4 1966171168
    %v645 = vunpack.c.0.s8 %v644
    %v646 = vlaneseq
    %v647 = vshrl.u32 %v646, 7
    %v648 = vsub.s32 %v645, %v647
    %v649 = vrot.slane %v621, %v648
    %v650 = vcombine.high %v628, %v628
    %v651 = vcombine.high %v635, %v635
    %v652 = vcombine.high %v642, %v642
    %v653 = vcombine.high %v649, %v649
    %v654 = vcombine.high %v74, %v74
    %v656 = vunpack.c.l.s4 1966171168
    %v657 = vunpack.c.0.s8 %v656
    %v658 = vlaneseq
    %v659 = vshrl.u32 %v658, 7
    %v660 = vsub.s32 %v657, %v659
    %v661 = vrot.slane %v74, %v660
    %v663 = vunpack.c.l.s4 1966171168
    %v664 = vunpack.c.0.s8 %v663
    %v665 = vlaneseq
    %v666 = vshrl.u32 %v665, 7
    %v667 = vsub.s32 %v664, %v666
    %v668 = vrot.slane %v654, %v667
    %v669 = vcombine.high %v661, %v661
    %v670 = vcombine.high %v668, %v668
    %v672 = vunpack.c.l.s4 1966171168
    %v673 = vunpack.c.0.s8 %v672
    %v674 = vlaneseq
    %v675 = vshrl.u32 %v674, 7
    %v676 = vsub.s32 %v673, %v675
    %v677 = vrot.slane %v661, %v676
    %v679 = vunpack.c.l.s4 1966171168
    %v680 = vunpack.c.0.s8 %v679
    %v681 = vlaneseq
    %v682 = vshrl.u32 %v681, 7
    %v683 = vsub.s32 %v680, %v682
    %v684 = vrot.slane %v668, %v683
    %v686 = vunpack.c.l.s4 1966171168
    %v687 = vunpack.c.0.s8 %v686
    %v688 = vlaneseq
    %v689 = vshrl.u32 %v688, 7
    %v690 = vsub.s32 %v687, %v689
    %v691 = vrot.slane %v669, %v690
    %v693 = vunpack.c.l.s4 1966171168
    %v694 = vunpack.c.0.s8 %v693
    %v695 = vlaneseq
    %v696 = vshrl.u32 %v695, 7
    %v697 = vsub.s32 %v694, %v696
    %v698 = vrot.slane %v670, %v697
    %v699 = vcombine.high %v677, %v677
    %v700 = vcombine.high %v684, %v684
    %v701 = vcombine.high %v691, %v691
    %v702 = vcombine.high %v698, %v698
    %v703 = vcombine.high %v75, %v75
    %v705 = vunpack.c.l.s4 1966171168
    %v706 = vunpack.c.0.s8 %v705
    %v707 = vlaneseq
    %v708 = vshrl.u32 %v707, 7
    %v709 = vsub.s32 %v706, %v708
    %v710 = vrot.slane %v75, %v709
    %v712 = vunpack.c.l.s4 1966171168
    %v713 = vunpack.c.0.s8 %v712
    %v714 = vlaneseq
    %v715 = vshrl.u32 %v714, 7
    %v716 = vsub.s32 %v713, %v715
    %v717 = vrot.slane %v703, %v716
    %v718 = vcombine.high %v710, %v710
    %v719 = vcombine.high %v717, %v717
    %v721 = vunpack.c.l.s4 1966171168
    %v722 = vunpack.c.0.s8 %v721
    %v723 = vlaneseq
    %v724 = vshrl.u32 %v723, 7
    %v725 = vsub.s32 %v722, %v724
    %v726 = vrot.slane %v710, %v725
    %v728 = vunpack.c.l.s4 1966171168
    %v729 = vunpack.c.0.s8 %v728
    %v730 = vlaneseq
    %v731 = vshrl.u32 %v730, 7
    %v732 = vsub.s32 %v729, %v731
    %v733 = vrot.slane %v717, %v732
    %v735 = vunpack.c.l.s4 1966171168
    %v736 = vunpack.c.0.s8 %v735
    %v737 = vlaneseq
    %v738 = vshrl.u32 %v737, 7
    %v739 = vsub.s32 %v736, %v738
    %v740 = vrot.slane %v718, %v739
    %v742 = vunpack.c.l.s4 1966171168
    %v743 = vunpack.c.0.s8 %v742
    %v744 = vlaneseq
    %v745 = vshrl.u32 %v744, 7
    %v746 = vsub.s32 %v743, %v745
    %v747 = vrot.slane %v719, %v746
    %v748 = vcombine.high %v726, %v726
    %v749 = vcombine.high %v733, %v733
    %v750 = vcombine.high %v740, %v740
    %v751 = vcombine.high %v747, %v747
    %v752 = vcombine.high %v76, %v76
    %v754 = vunpack.c.l.s4 1966171168
    %v755 = vunpack.c.0.s8 %v754
    %v756 = vlaneseq
    %v757 = vshrl.u32 %v756, 7
    %v758 = vsub.s32 %v755, %v757
    %v759 = vrot.slane %v76, %v758
    %v761 = vunpack.c.l.s4 1966171168
    %v762 = vunpack.c.0.s8 %v761
    %v763 = vlaneseq
    %v764 = vshrl.u32 %v763, 7
    %v765 = vsub.s32 %v762, %v764
    %v766 = vrot.slane %v752, %v765
    %v767 = vcombine.high %v759, %v759
    %v768 = vcombine.high %v766, %v766
    %v770 = vunpack.c.l.s4 1966171168
    %v771 = vunpack.c.0.s8 %v770
    %v772 = vlaneseq
    %v773 = vshrl.u32 %v772, 7
    %v774 = vsub.s32 %v771, %v773
    %v775 = vrot.slane %v759, %v774
    %v777 = vunpack.c.l.s4 1966171168
    %v778 = vunpack.c.0.s8 %v777
    %v779 = vlaneseq
    %v780 = vshrl.u32 %v779, 7
    %v781 = vsub.s32 %v778, %v780
    %v782 = vrot.slane %v766, %v781
    %v784 = vunpack.c.l.s4 1966171168
    %v785 = vunpack.c.0.s8 %v784
    %v786 = vlaneseq
    %v787 = vshrl.u32 %v786, 7
    %v788 = vsub.s32 %v785, %v787
    %v789 = vrot.slane %v767, %v788
    %v791 = vunpack.c.l.s4 1966171168
    %v792 = vunpack.c.0.s8 %v791
    %v793 = vlaneseq
    %v794 = vshrl.u32 %v793, 7
    %v795 = vsub.s32 %v792, %v794
    %v796 = vrot.slane %v768, %v795
    %v797 = vcombine.high %v775, %v775
    %v798 = vcombine.high %v782, %v782
    %v799 = vcombine.high %v789, %v789
    %v800 = vcombine.high %v796, %v796
    %v1345 = vunpack.c.l.b16 %v77
    %v1346 = vunpack.c.h.b16 %v77
    %v1347 = vunpack.c.l.b16 %v78
    %v1348 = vunpack.c.h.b16 %v78
    %v1349 = vunpack.c.l.b16 %v79
    %v1350 = vunpack.c.h.b16 %v79
    %v1351 = vunpack.c.l.b16 %v80
    %v1352 = vunpack.c.h.b16 %v80
    %v1353 = vunpack.c.l.b16 %v81
    %v1354 = vunpack.c.h.b16 %v81
    %v1355 = vunpack.c.l.b16 %v82
    %v1356 = vunpack.c.h.b16 %v82
    %v1357 = vunpack.c.l.b16 %v83
    %v1358 = vunpack.c.h.b16 %v83
    %v1359 = vunpack.c.l.b16 %v84
    %v1360 = vunpack.c.h.b16 %v84
    %v1361 = vunpack.c.l.b16 %v85
    %v1362 = vunpack.c.h.b16 %v85
    %v1363 = vunpack.c.l.b16 %v86
    %v1364 = vunpack.c.h.b16 %v86
    %v1365 = vunpack.c.l.b16 %v87
    %v1366 = vunpack.c.h.b16 %v87
    %v1367 = vunpack.c.l.b16 %v88
    %v1368 = vunpack.c.h.b16 %v88
    %v1369 = vunpack.c.l.b16 %v89
    %v1370 = vunpack.c.h.b16 %v89
    %v1371 = vunpack.c.l.b16 %v90
    %v1372 = vunpack.c.h.b16 %v90
    %v1373 = vunpack.c.l.b16 %v91
    %v1374 = vunpack.c.h.b16 %v91
    %v1375 = vunpack.c.l.b16 %v92
    %v1376 = vunpack.c.h.b16 %v92
    %v1377 = vunpack.c.l.b16 %v93
    %v1378 = vunpack.c.h.b16 %v93
    %v1379 = vunpack.c.l.b16 %v94
    %v1380 = vunpack.c.h.b16 %v94
    %v1381 = vunpack.c.l.b16 %v95
    %v1382 = vunpack.c.h.b16 %v95
    %v1383 = vunpack.c.l.b16 %v96
    %v1384 = vunpack.c.h.b16 %v96
    %v1385 = vunpack.c.l.b16 %v97
    %v1386 = vunpack.c.h.b16 %v97
    %v1387 = vunpack.c.l.b16 %v98
    %v1388 = vunpack.c.h.b16 %v98
    %v1389 = vunpack.c.l.b16 %v99
    %v1390 = vunpack.c.h.b16 %v99
    %v1391 = vunpack.c.l.b16 %v100
    %v1392 = vunpack.c.h.b16 %v100
    %v1393 = vunpack.c.l.b16 %v101
    %v1394 = vunpack.c.h.b16 %v101
    %v1395 = vunpack.c.l.b16 %v102
    %v1396 = vunpack.c.h.b16 %v102
    %v1397 = vunpack.c.l.b16 %v103
    %v1398 = vunpack.c.h.b16 %v103
    %v1399 = vunpack.c.l.b16 %v104
    %v1400 = vunpack.c.h.b16 %v104
    %v1401 = vunpack.c.l.b16 %v105
    %v1402 = vunpack.c.h.b16 %v105
    %v1403 = vunpack.c.l.b16 %v106
    %v1404 = vunpack.c.h.b16 %v106
    %v1405 = vunpack.c.l.b16 %v107
    %v1406 = vunpack.c.h.b16 %v107
    %v1407 = vunpack.c.l.b16 %v108
    %v1408 = vunpack.c.h.b16 %v108
    %v1409 = vunpack.c.l.b16 %v109
    %v1410 = vunpack.c.h.b16 %v109
    %v1411 = vunpack.c.l.b16 %v110
    %v1412 = vunpack.c.h.b16 %v110
    %v1413 = vunpack.c.l.b16 %v111
    %v1414 = vunpack.c.h.b16 %v111
    %v1415 = vunpack.c.l.b16 %v112
    %v1416 = vunpack.c.h.b16 %v112
    %v1417 = vunpack.c.l.b16 %v113
    %v1418 = vunpack.c.h.b16 %v113
    %v1419 = vunpack.c.l.b16 %v114
    %v1420 = vunpack.c.h.b16 %v114
    %v1421 = vunpack.c.l.b16 %v115
    %v1422 = vunpack.c.h.b16 %v115
    %v1423 = vunpack.c.l.b16 %v116
    %v1424 = vunpack.c.h.b16 %v116
    %v1425 = vunpack.c.l.b16 %v117
    %v1426 = vunpack.c.h.b16 %v117
    %v1427 = vunpack.c.l.b16 %v118
    %v1428 = vunpack.c.h.b16 %v118
    %v1429 = vunpack.c.l.b16 %v119
    %v1430 = vunpack.c.h.b16 %v119
    %v1431 = vunpack.c.l.b16 %v120
    %v1432 = vunpack.c.h.b16 %v120
    %v1433 = vunpack.c.l.b16 %v121
    %v1434 = vunpack.c.h.b16 %v121
    %v1435 = vunpack.c.l.b16 %v122
    %v1436 = vunpack.c.h.b16 %v122
    %v1437 = vunpack.c.l.b16 %v123
    %v1438 = vunpack.c.h.b16 %v123
    %v1439 = vunpack.c.l.b16 %v124
    %v1440 = vunpack.c.h.b16 %v124
    %v1441 = vunpack.c.l.b16 %v125
    %v1442 = vunpack.c.h.b16 %v125
    %v1443 = vunpack.c.l.b16 %v126
    %v1444 = vunpack.c.h.b16 %v126
    %v1445 = vunpack.c.l.b16 %v127
    %v1446 = vunpack.c.h.b16 %v127
    %v1447 = vunpack.c.l.b16 %v128
    %v1448 = vunpack.c.h.b16 %v128
    %v1449 = vunpack.c.l.b16 %v129
    %v1450 = vunpack.c.h.b16 %v129
    %v1451 = vunpack.c.l.b16 %v130
    %v1452 = vunpack.c.h.b16 %v130
    %v1453 = vunpack.c.l.b16 %v131
    %v1454 = vunpack.c.h.b16 %v131
    %v1455 = vunpack.c.l.b16 %v132
    %v1456 = vunpack.c.h.b16 %v132
    %v1457 = vunpack.c.l.b16 %v133
    %v1458 = vunpack.c.h.b16 %v133
    %v1459 = vunpack.c.l.b16 %v134
    %v1460 = vunpack.c.h.b16 %v134
    %v1461 = vunpack.c.l.b16 %v135
    %v1462 = vunpack.c.h.b16 %v135
    %v1463 = vunpack.c.l.b16 %v136
    %v1464 = vunpack.c.h.b16 %v136
    %v1465 = vunpack.c.l.b16 %v137
    %v1466 = vunpack.c.h.b16 %v137
    %v1467 = vunpack.c.l.b16 %v138
    %v1468 = vunpack.c.h.b16 %v138
    %v1469 = vunpack.c.l.b16 %v139
    %v1470 = vunpack.c.h.b16 %v139
    %v1471 = vunpack.c.l.b16 %v140
    %v1472 = vunpack.c.h.b16 %v140
    %v1473 = vunpack.c.l.b16 %v141
    %v1474 = vunpack.c.h.b16 %v141
    %v1475 = vunpack.c.l.b16 %v142
    %v1476 = vunpack.c.h.b16 %v142
    %v1477 = vunpack.c.l.b16 %v143
    %v1478 = vunpack.c.h.b16 %v143
    %v1479 = vunpack.c.l.b16 %v144
    %v1480 = vunpack.c.h.b16 %v144
    %v1481 = vunpack.c.l.b16 %v145
    %v1482 = vunpack.c.h.b16 %v145
    %v1483 = vunpack.c.l.b16 %v146
    %v1484 = vunpack.c.h.b16 %v146
    %v1485 = vunpack.c.l.b16 %v147
    %v1486 = vunpack.c.h.b16 %v147
    %v1487 = vunpack.c.l.b16 %v148
    %v1488 = vunpack.c.h.b16 %v148
    %v1489 = vunpack.c.l.b16 %v149
    %v1490 = vunpack.c.h.b16 %v149
    %v1491 = vunpack.c.l.b16 %v150
    %v1492 = vunpack.c.h.b16 %v150
    %v1493 = vunpack.c.l.b16 %v151
    %v1494 = vunpack.c.h.b16 %v151
    %v1495 = vunpack.c.l.b16 %v152
    %v1496 = vunpack.c.h.b16 %v152
    %v1497 = vunpack.c.l.b16 %v153
    %v1498 = vunpack.c.h.b16 %v153
    %v1499 = vunpack.c.l.b16 %v154
    %v1500 = vunpack.c.h.b16 %v154
    %v1501 = vunpack.c.l.b16 %v155
    %v1502 = vunpack.c.h.b16 %v155
    %v1503 = vunpack.c.l.b16 %v156
    %v1504 = vunpack.c.h.b16 %v156
    %v1505 = vunpack.c.l.b16 %v157
    %v1506 = vunpack.c.h.b16 %v157
    %v1507 = vunpack.c.l.b16 %v158
    %v1508 = vunpack.c.h.b16 %v158
    %v1509 = vunpack.c.l.b16 %v159
    %v1510 = vunpack.c.h.b16 %v159
    %v1511 = vunpack.c.l.b16 %v160
    %v1512 = vunpack.c.h.b16 %v160
    %v1513 = vunpack.c.l.b16 %v161
    %v1514 = vunpack.c.h.b16 %v161
    %v1515 = vunpack.c.l.b16 %v162
    %v1516 = vunpack.c.h.b16 %v162
    %v1517 = vunpack.c.l.b16 %v163
    %v1518 = vunpack.c.h.b16 %v163
    %v1519 = vunpack.c.l.b16 %v164
    %v1520 = vunpack.c.h.b16 %v164
    %v1521 = vunpack.c.l.b16 %v165
    %v1522 = vunpack.c.h.b16 %v165
    %v1523 = vunpack.c.l.b16 %v166
    %v1524 = vunpack.c.h.b16 %v166
    %v1525 = vunpack.c.l.b16 %v167
    %v1526 = vunpack.c.h.b16 %v167
    %v1527 = vunpack.c.l.b16 %v168
    %v1528 = vunpack.c.h.b16 %v168
    %v1529 = vunpack.c.l.b16 %v169
    %v1530 = vunpack.c.h.b16 %v169
    %v1531 = vunpack.c.l.b16 %v170
    %v1532 = vunpack.c.h.b16 %v170
    %v1533 = vunpack.c.l.b16 %v171
    %v1534 = vunpack.c.h.b16 %v171
    %v1535 = vunpack.c.l.b16 %v172
    %v1536 = vunpack.c.h.b16 %v172
    %v1537 = vunpack.c.l.b16 %v173
    %v1538 = vunpack.c.h.b16 %v173
    %v1539 = vunpack.c.l.b16 %v174
    %v1540 = vunpack.c.h.b16 %v174
    %v1541 = vunpack.c.l.b16 %v175
    %v1542 = vunpack.c.h.b16 %v175
    %v1543 = vunpack.c.l.b16 %v176
    %v1544 = vunpack.c.h.b16 %v176
    %v1545 = vunpack.c.l.b16 %v177
    %v1546 = vunpack.c.h.b16 %v177
    %v1547 = vunpack.c.l.b16 %v178
    %v1548 = vunpack.c.h.b16 %v178
    %v1549 = vunpack.c.l.b16 %v179
    %v1550 = vunpack.c.h.b16 %v179
    %v1551 = vunpack.c.l.b16 %v180
    %v1552 = vunpack.c.h.b16 %v180
    %v1553 = vunpack.c.l.b16 %v181
    %v1554 = vunpack.c.h.b16 %v181
    %v1555 = vunpack.c.l.b16 %v182
    %v1556 = vunpack.c.h.b16 %v182
    %v1557 = vunpack.c.l.b16 %v183
    %v1558 = vunpack.c.h.b16 %v183
    %v1559 = vunpack.c.l.b16 %v184
    %v1560 = vunpack.c.h.b16 %v184
    %v1561 = vunpack.c.l.b16 %v185
    %v1562 = vunpack.c.h.b16 %v185
    %v1563 = vunpack.c.l.b16 %v186
    %v1564 = vunpack.c.h.b16 %v186
    %v1565 = vunpack.c.l.b16 %v187
    %v1566 = vunpack.c.h.b16 %v187
    %v1567 = vunpack.c.l.b16 %v188
    %v1568 = vunpack.c.h.b16 %v188
    %v1569 = vunpack.c.l.b16 %v189
    %v1570 = vunpack.c.h.b16 %v189
    %v1571 = vunpack.c.l.b16 %v190
    %v1572 = vunpack.c.h.b16 %v190
    %v1573 = vunpack.c.l.b16 %v191
    %v1574 = vunpack.c.h.b16 %v191
    %v1575 = vunpack.c.l.b16 %v192
    %v1576 = vunpack.c.h.b16 %v192
    %v1577 = vunpack.c.l.b16 %v193
    %v1578 = vunpack.c.h.b16 %v193
    %v1579 = vunpack.c.l.b16 %v194
    %v1580 = vunpack.c.h.b16 %v194
    %v1581 = vunpack.c.l.b16 %v195
    %v1582 = vunpack.c.h.b16 %v195
    %v1583 = vunpack.c.l.b16 %v196
    %v1584 = vunpack.c.h.b16 %v196
    %v1585 = vunpack.c.l.b16 %v197
    %v1586 = vunpack.c.h.b16 %v197
    %v1587 = vunpack.c.l.b16 %v198
    %v1588 = vunpack.c.h.b16 %v198
    %v1589 = vunpack.c.l.b16 %v199
    %v1590 = vunpack.c.h.b16 %v199
    %v1591 = vunpack.c.l.b16 %v200
    %v1592 = vunpack.c.h.b16 %v200
    %v1593 = vunpack.c.l.b16 %v201
    %v1594 = vunpack.c.h.b16 %v201
    %v1595 = vunpack.c.l.b16 %v202
    %v1596 = vunpack.c.h.b16 %v202
    %v1597 = vunpack.c.l.b16 %v203
    %v1598 = vunpack.c.h.b16 %v203
    %v1599 = vunpack.c.l.b16 %v204
    %v1600 = vunpack.c.h.b16 %v204
    %v1601 = vunpack.c.l.b16 %v205
    %v1602 = vunpack.c.h.b16 %v205
    %v1603 = vunpack.c.l.b16 %v206
    %v1604 = vunpack.c.h.b16 %v206
    %v1605 = vunpack.c.l.b16 %v207
    %v1606 = vunpack.c.h.b16 %v207
    %v1607 = vunpack.c.l.b16 %v208
    %v1608 = vunpack.c.h.b16 %v208
    %v1609 = vunpack.c.l.b16 %v209
    %v1610 = vunpack.c.h.b16 %v209
    %v1611 = vunpack.c.l.b16 %v210
    %v1612 = vunpack.c.h.b16 %v210
    %v1613 = vunpack.c.l.b16 %v211
    %v1614 = vunpack.c.h.b16 %v211
    %v1615 = vunpack.c.l.b16 %v212
    %v1616 = vunpack.c.h.b16 %v212
    %v1617 = vunpack.c.l.b16 %v213
    %v1618 = vunpack.c.h.b16 %v213
    %v1619 = vunpack.c.l.b16 %v214
    %v1620 = vunpack.c.h.b16 %v214
    %v1621 = vunpack.c.l.b16 %v215
    %v1622 = vunpack.c.h.b16 %v215
    %v1623 = vunpack.c.l.b16 %v216
    %v1624 = vunpack.c.h.b16 %v216
    %v1625 = vunpack.c.l.b16 %v217
    %v1626 = vunpack.c.h.b16 %v217
    %v1627 = vunpack.c.l.b16 %v218
    %v1628 = vunpack.c.h.b16 %v218
    %v1629 = vunpack.c.l.b16 %v219
    %v1630 = vunpack.c.h.b16 %v219
    %v1631 = vunpack.c.l.b16 %v220
    %v1632 = vunpack.c.h.b16 %v220
    %v1633 = vunpack.c.l.b16 %v221
    %v1634 = vunpack.c.h.b16 %v221
    %v1635 = vunpack.c.l.b16 %v222
    %v1636 = vunpack.c.h.b16 %v222
    %v1637 = vunpack.c.l.b16 %v223
    %v1638 = vunpack.c.h.b16 %v223
    %v1639 = vunpack.c.l.b16 %v224
    %v1640 = vunpack.c.h.b16 %v224
    %v1641 = vunpack.c.l.b16 %v225
    %v1642 = vunpack.c.h.b16 %v225
    %v1643 = vunpack.c.l.b16 %v226
    %v1644 = vunpack.c.h.b16 %v226
    %v1645 = vunpack.c.l.b16 %v227
    %v1646 = vunpack.c.h.b16 %v227
    %v1647 = vunpack.c.l.b16 %v228
    %v1648 = vunpack.c.h.b16 %v228
    %v1649 = vunpack.c.l.b16 %v229
    %v1650 = vunpack.c.h.b16 %v229
    %v1651 = vunpack.c.l.b16 %v230
    %v1652 = vunpack.c.h.b16 %v230
    %v1653 = vunpack.c.l.b16 %v231
    %v1654 = vunpack.c.h.b16 %v231
    %v1655 = vunpack.c.l.b16 %v232
    %v1656 = vunpack.c.h.b16 %v232
    %v1657 = vunpack.c.l.b16 %v233
    %v1658 = vunpack.c.h.b16 %v233
    %v1659 = vunpack.c.l.b16 %v234
    %v1660 = vunpack.c.h.b16 %v234
    %v1661 = vunpack.c.l.b16 %v235
    %v1662 = vunpack.c.h.b16 %v235
    %v1663 = vunpack.c.l.b16 %v236
    %v1664 = vunpack.c.h.b16 %v236
    %v1665 = vunpack.c.l.b16 %v237
    %v1666 = vunpack.c.h.b16 %v237
    %v1667 = vunpack.c.l.b16 %v238
    %v1668 = vunpack.c.h.b16 %v238
    %v1669 = vunpack.c.l.b16 %v239
    %v1670 = vunpack.c.h.b16 %v239
    %v1671 = vunpack.c.l.b16 %v240
    %v1672 = vunpack.c.h.b16 %v240
    %v1673 = vunpack.c.l.b16 %v241
    %v1674 = vunpack.c.h.b16 %v241
    %v1675 = vunpack.c.l.b16 %v242
    %v1676 = vunpack.c.h.b16 %v242
    %v1677 = vunpack.c.l.b16 %v243
    %v1678 = vunpack.c.h.b16 %v243
    %v1679 = vunpack.c.l.b16 %v244
    %v1680 = vunpack.c.h.b16 %v244
    %v1681 = vunpack.c.l.b16 %v245
    %v1682 = vunpack.c.h.b16 %v245
    %v1683 = vunpack.c.l.b16 %v246
    %v1684 = vunpack.c.h.b16 %v246
    %v1685 = vunpack.c.l.b16 %v247
    %v1686 = vunpack.c.h.b16 %v247
    %v1687 = vunpack.c.l.b16 %v248
    %v1688 = vunpack.c.h.b16 %v248
    %v1689 = vunpack.c.l.b16 %v249
    %v1690 = vunpack.c.h.b16 %v249
    %v1691 = vunpack.c.l.b16 %v250
    %v1692 = vunpack.c.h.b16 %v250
    %v1693 = vunpack.c.l.b16 %v251
    %v1694 = vunpack.c.h.b16 %v251
    %v1695 = vunpack.c.l.b16 %v252
    %v1696 = vunpack.c.h.b16 %v252
    %v1697 = vunpack.c.l.b16 %v253
    %v1698 = vunpack.c.h.b16 %v253
    %v1699 = vunpack.c.l.b16 %v254
    %v1700 = vunpack.c.h.b16 %v254
    %v1701 = vunpack.c.l.b16 %v255
    %v1702 = vunpack.c.h.b16 %v255
    %v1703 = vunpack.c.l.b16 %v256
    %v1704 = vunpack.c.h.b16 %v256
    %v1705 = vunpack.c.l.b16 %v257
    %v1706 = vunpack.c.h.b16 %v257
    %v1707 = vunpack.c.l.b16 %v258
    %v1708 = vunpack.c.h.b16 %v258
    %v1709 = vunpack.c.l.b16 %v259
    %v1710 = vunpack.c.h.b16 %v259
    %v1711 = vunpack.c.l.b16 %v260
    %v1712 = vunpack.c.h.b16 %v260
    %v1713 = vunpack.c.l.b16 %v261
    %v1714 = vunpack.c.h.b16 %v261
    %v1715 = vunpack.c.l.b16 %v262
    %v1716 = vunpack.c.h.b16 %v262
    %v1717 = vunpack.c.l.b16 %v263
    %v1718 = vunpack.c.h.b16 %v263
    %v1719 = vunpack.c.l.b16 %v264
    %v1720 = vunpack.c.h.b16 %v264
    %v1721 = vunpack.c.l.b16 %v265
    %v1722 = vunpack.c.h.b16 %v265
    %v1723 = vunpack.c.l.b16 %v266
    %v1724 = vunpack.c.h.b16 %v266
    %v1725 = vunpack.c.l.b16 %v267
    %v1726 = vunpack.c.h.b16 %v267
    %v1727 = vunpack.c.l.b16 %v268
    %v1728 = vunpack.c.h.b16 %v268
    %v1729 = vunpack.c.l.b16 %v269
    %v1730 = vunpack.c.h.b16 %v269
    %v1731 = vunpack.c.l.b16 %v270
    %v1732 = vunpack.c.h.b16 %v270
    %v1733 = vunpack.c.l.b16 %v271
    %v1734 = vunpack.c.h.b16 %v271
    %v1735 = vunpack.c.l.b16 %v272
    %v1736 = vunpack.c.h.b16 %v272
    %v1737 = vunpack.c.l.b16 %v273
    %v1738 = vunpack.c.h.b16 %v273
    %v1739 = vunpack.c.l.b16 %v274
    %v1740 = vunpack.c.h.b16 %v274
    %v1741 = vunpack.c.l.b16 %v275
    %v1742 = vunpack.c.h.b16 %v275
    %v1743 = vunpack.c.l.b16 %v276
    %v1744 = vunpack.c.h.b16 %v276
    %v1745 = vunpack.c.l.b16 %v277
    %v1746 = vunpack.c.h.b16 %v277
    %v1747 = vunpack.c.l.b16 %v278
    %v1748 = vunpack.c.h.b16 %v278
    %v1749 = vunpack.c.l.b16 %v279
    %v1750 = vunpack.c.h.b16 %v279
    %v1751 = vunpack.c.l.b16 %v280
    %v1752 = vunpack.c.h.b16 %v280
    %v1753 = vunpack.c.l.b16 %v281
    %v1754 = vunpack.c.h.b16 %v281
    %v1755 = vunpack.c.l.b16 %v282
    %v1756 = vunpack.c.h.b16 %v282
    %v1757 = vunpack.c.l.b16 %v283
    %v1758 = vunpack.c.h.b16 %v283
    %v1759 = vunpack.c.l.b16 %v284
    %v1760 = vunpack.c.h.b16 %v284
    %v1761 = vunpack.c.l.b16 %v285
    %v1762 = vunpack.c.h.b16 %v285
    %v1763 = vunpack.c.l.b16 %v286
    %v1764 = vunpack.c.h.b16 %v286
    %v1765 = vunpack.c.l.b16 %v287
    %v1766 = vunpack.c.h.b16 %v287
    %v1767 = vunpack.c.l.b16 %v288
    %v1768 = vunpack.c.h.b16 %v288
    %v1769 = vunpack.c.l.b16 %v289
    %v1770 = vunpack.c.h.b16 %v289
    %v1771 = vunpack.c.l.b16 %v290
    %v1772 = vunpack.c.h.b16 %v290
    %v1773 = vunpack.c.l.b16 %v291
    %v1774 = vunpack.c.h.b16 %v291
    %v1775 = vunpack.c.l.b16 %v292
    %v1776 = vunpack.c.h.b16 %v292
    %v1777 = vunpack.c.l.b16 %v293
    %v1778 = vunpack.c.h.b16 %v293
    %v1779 = vunpack.c.l.b16 %v294
    %v1780 = vunpack.c.h.b16 %v294
    %v1781 = vunpack.c.l.b16 %v295
    %v1782 = vunpack.c.h.b16 %v295
    %v1783 = vunpack.c.l.b16 %v296
    %v1784 = vunpack.c.h.b16 %v296
    %v1785 = vunpack.c.l.b16 %v297
    %v1786 = vunpack.c.h.b16 %v297
    %v1787 = vunpack.c.l.b16 %v298
    %v1788 = vunpack.c.h.b16 %v298
    %v1789 = vunpack.c.l.b16 %v299
    %v1790 = vunpack.c.h.b16 %v299
    %v1791 = vunpack.c.l.b16 %v300
    %v1792 = vunpack.c.h.b16 %v300
    %v1793 = vunpack.c.l.b16 %v301
    %v1794 = vunpack.c.h.b16 %v301
    %v1795 = vunpack.c.l.b16 %v302
    %v1796 = vunpack.c.h.b16 %v302
    %v1797 = vunpack.c.l.b16 %v303
    %v1798 = vunpack.c.h.b16 %v303
    %v1799 = vunpack.c.l.b16 %v304
    %v1800 = vunpack.c.h.b16 %v304
    %v1801 = vunpack.c.l.b16 %v305
    %v1802 = vunpack.c.h.b16 %v305
    %v1803 = vunpack.c.l.b16 %v306
    %v1804 = vunpack.c.h.b16 %v306
    %v1805 = vunpack.c.l.b16 %v307
    %v1806 = vunpack.c.h.b16 %v307
    %v1807 = vunpack.c.l.b16 %v308
    %v1808 = vunpack.c.h.b16 %v308
    %v1809 = vunpack.c.l.b16 %v309
    %v1810 = vunpack.c.h.b16 %v309
    %v1811 = vunpack.c.l.b16 %v310
    %v1812 = vunpack.c.h.b16 %v310
    %v1813 = vunpack.c.l.b16 %v311
    %v1814 = vunpack.c.h.b16 %v311
    %v1815 = vunpack.c.l.b16 %v312
    %v1816 = vunpack.c.h.b16 %v312
    %v1817 = vunpack.c.l.b16 %v313
    %v1818 = vunpack.c.h.b16 %v313
    %v1819 = vunpack.c.l.b16 %v314
    %v1820 = vunpack.c.h.b16 %v314
    %v1821 = vunpack.c.l.b16 %v315
    %v1822 = vunpack.c.h.b16 %v315
    %v1823 = vunpack.c.l.b16 %v316
    %v1824 = vunpack.c.h.b16 %v316
    %v1825 = vunpack.c.l.b16 %v317
    %v1826 = vunpack.c.h.b16 %v317
    %v1827 = vunpack.c.l.b16 %v318
    %v1828 = vunpack.c.h.b16 %v318
    %v1829 = vunpack.c.l.b16 %v319
    %v1830 = vunpack.c.h.b16 %v319
    %v1831 = vunpack.c.l.b16 %v320
    %v1832 = vunpack.c.h.b16 %v320
    %v1833 = vunpack.c.l.b16 %v321
    %v1834 = vunpack.c.h.b16 %v321
    %v1835 = vunpack.c.l.b16 %v322
    %v1836 = vunpack.c.h.b16 %v322
    %v1837 = vunpack.c.l.b16 %v323
    %v1838 = vunpack.c.h.b16 %v323
    %v1839 = vunpack.c.l.b16 %v324
    %v1840 = vunpack.c.h.b16 %v324
    %v1841 = vunpack.c.l.b16 %v325
    %v1842 = vunpack.c.h.b16 %v325
    %v1843 = vunpack.c.l.b16 %v326
    %v1844 = vunpack.c.h.b16 %v326
    %v1845 = vunpack.c.l.b16 %v327
    %v1846 = vunpack.c.h.b16 %v327
    %v1847 = vunpack.c.l.b16 %v328
    %v1848 = vunpack.c.h.b16 %v328
    %v1849 = vunpack.c.l.b16 %v329
    %v1850 = vunpack.c.h.b16 %v329
    %v1851 = vunpack.c.l.b16 %v330
    %v1852 = vunpack.c.h.b16 %v330
    %v1853 = vunpack.c.l.b16 %v331
    %v1854 = vunpack.c.h.b16 %v331
    %v1855 = vunpack.c.l.b16 %v332
    %v1856 = vunpack.c.h.b16 %v332
    %v1857 = vunpack.c.l.b16 %v333
    %v1858 = vunpack.c.h.b16 %v333
    %v1859 = vunpack.c.l.b16 %v334
    %v1860 = vunpack.c.h.b16 %v334
    %v1861 = vunpack.c.l.b16 %v335
    %v1862 = vunpack.c.h.b16 %v335
    %v1863 = vunpack.c.l.b16 %v336
    %v1864 = vunpack.c.h.b16 %v336
    %v1865 = vunpack.c.l.b16 %v337
    %v1866 = vunpack.c.h.b16 %v337
    %v1867 = vunpack.c.l.b16 %v338
    %v1868 = vunpack.c.h.b16 %v338
    %v1869 = vunpack.c.l.b16 %v339
    %v1870 = vunpack.c.h.b16 %v339
    %v1871 = vunpack.c.l.b16 %v340
    %v1872 = vunpack.c.h.b16 %v340
    %v1873 = vunpack.c.l.b16 %v341
    %v1874 = vunpack.c.h.b16 %v341
    %v1875 = vunpack.c.l.b16 %v342
    %v1876 = vunpack.c.h.b16 %v342
    %v1877 = vunpack.c.l.b16 %v343
    %v1878 = vunpack.c.h.b16 %v343
    %v1879 = vunpack.c.l.b16 %v344
    %v1880 = vunpack.c.h.b16 %v344
    %v1881 = vunpack.c.l.b16 %v345
    %v1882 = vunpack.c.h.b16 %v345
    %v1883 = vunpack.c.l.b16 %v346
    %v1884 = vunpack.c.h.b16 %v346
    %v1885 = vunpack.c.l.b16 %v347
    %v1886 = vunpack.c.h.b16 %v347
    %v1887 = vunpack.c.l.b16 %v348
    %v1888 = vunpack.c.h.b16 %v348
    %v1889 = vunpack.c.l.b16 %v349
    %v1890 = vunpack.c.h.b16 %v349
    %v1891 = vunpack.c.l.b16 %v350
    %v1892 = vunpack.c.h.b16 %v350
    %v1893 = vunpack.c.l.b16 %v351
    %v1894 = vunpack.c.h.b16 %v351
    %v1895 = vunpack.c.l.b16 %v352
    %v1896 = vunpack.c.h.b16 %v352
    %v1897 = vunpack.c.l.b16 %v353
    %v1898 = vunpack.c.h.b16 %v353
    %v1899 = vunpack.c.l.b16 %v354
    %v1900 = vunpack.c.h.b16 %v354
    %v1901 = vunpack.c.l.b16 %v355
    %v1902 = vunpack.c.h.b16 %v355
    %v1903 = vunpack.c.l.b16 %v356
    %v1904 = vunpack.c.h.b16 %v356
    %v1905 = vunpack.c.l.b16 %v357
    %v1906 = vunpack.c.h.b16 %v357
    %v1907 = vunpack.c.l.b16 %v358
    %v1908 = vunpack.c.h.b16 %v358
    %v1909 = vunpack.c.l.b16 %v359
    %v1910 = vunpack.c.h.b16 %v359
    %v1911 = vunpack.c.l.b16 %v360
    %v1912 = vunpack.c.h.b16 %v360
    %v1913 = vunpack.c.l.b16 %v361
    %v1914 = vunpack.c.h.b16 %v361
    %v1915 = vunpack.c.l.b16 %v362
    %v1916 = vunpack.c.h.b16 %v362
    %v1917 = vunpack.c.l.b16 %v363
    %v1918 = vunpack.c.h.b16 %v363
    %v1919 = vunpack.c.l.b16 %v364
    %v1920 = vunpack.c.h.b16 %v364
    %v1921 = vunpack.c.l.b16 %v365
    %v1922 = vunpack.c.h.b16 %v365
    %v1923 = vunpack.c.l.b16 %v366
    %v1924 = vunpack.c.h.b16 %v366
    %v1925 = vunpack.c.l.b16 %v367
    %v1926 = vunpack.c.h.b16 %v367
    %v1927 = vunpack.c.l.b16 %v368
    %v1928 = vunpack.c.h.b16 %v368
    %v1929 = vunpack.c.l.b16 %v369
    %v1930 = vunpack.c.h.b16 %v369
    %v1931 = vunpack.c.l.b16 %v370
    %v1932 = vunpack.c.h.b16 %v370
    %v1933 = vunpack.c.l.b16 %v371
    %v1934 = vunpack.c.h.b16 %v371
    %v1935 = vunpack.c.l.b16 %v372
    %v1936 = vunpack.c.h.b16 %v372
    %v1937 = vunpack.c.l.b16 %v373
    %v1938 = vunpack.c.h.b16 %v373
    %v1939 = vunpack.c.l.b16 %v374
    %v1940 = vunpack.c.h.b16 %v374
    %v1941 = vunpack.c.l.b16 %v375
    %v1942 = vunpack.c.h.b16 %v375
    %v1943 = vunpack.c.l.b16 %v376
    %v1944 = vunpack.c.h.b16 %v376
    %v1945 = vunpack.c.l.b16 %v377
    %v1946 = vunpack.c.h.b16 %v377
    %v1947 = vunpack.c.l.b16 %v378
    %v1948 = vunpack.c.h.b16 %v378
    %v1949 = vunpack.c.l.b16 %v379
    %v1950 = vunpack.c.h.b16 %v379
    %v1951 = vunpack.c.l.b16 %v380
    %v1952 = vunpack.c.h.b16 %v380
    %v1953 = vunpack.c.l.b16 %v381
    %v1954 = vunpack.c.h.b16 %v381
    %v1955 = vunpack.c.l.b16 %v382
    %v1956 = vunpack.c.h.b16 %v382
    %v1957 = vunpack.c.l.b16 %v383
    %v1958 = vunpack.c.h.b16 %v383
    %v1959 = vunpack.c.l.b16 %v384
    %v1960 = vunpack.c.h.b16 %v384
    %v1961 = vunpack.c.l.b16 %v385
    %v1962 = vunpack.c.h.b16 %v385
    %v1963 = vunpack.c.l.b16 %v386
    %v1964 = vunpack.c.h.b16 %v386
    %v1965 = vunpack.c.l.b16 %v387
    %v1966 = vunpack.c.h.b16 %v387
    %v1967 = vunpack.c.l.b16 %v388
    %v1968 = vunpack.c.h.b16 %v388
    %v1969 = vunpack.c.l.b16 %v389
    %v1970 = vunpack.c.h.b16 %v389
    %v1971 = vunpack.c.l.b16 %v390
    %v1972 = vunpack.c.h.b16 %v390
    %v1973 = vunpack.c.l.b16 %v391
    %v1974 = vunpack.c.h.b16 %v391
    %v1975 = vunpack.c.l.b16 %v392
    %v1976 = vunpack.c.h.b16 %v392
    %v1977 = vunpack.c.l.b16 %v393
    %v1978 = vunpack.c.h.b16 %v393
    %v1979 = vunpack.c.l.b16 %v394
    %v1980 = vunpack.c.h.b16 %v394
    %v1981 = vunpack.c.l.b16 %v395
    %v1982 = vunpack.c.h.b16 %v395
    %v1983 = vunpack.c.l.b16 %v396
    %v1984 = vunpack.c.h.b16 %v396
    %v1985 = vunpack.c.l.b16 %v397
    %v1986 = vunpack.c.h.b16 %v397
    %v1987 = vunpack.c.l.b16 %v398
    %v1988 = vunpack.c.h.b16 %v398
    %v1989 = vunpack.c.l.b16 %v399
    %v1990 = vunpack.c.h.b16 %v399
    %v1991 = vunpack.c.l.b16 %v400
    %v1992 = vunpack.c.h.b16 %v400
    %v1993 = vunpack.c.l.b16 %v401
    %v1994 = vunpack.c.h.b16 %v401
    %v1995 = vunpack.c.l.b16 %v402
    %v1996 = vunpack.c.h.b16 %v402
    %v1997 = vunpack.c.l.b16 %v403
    %v1998 = vunpack.c.h.b16 %v403
    %v1999 = vunpack.c.l.b16 %v404
    %v2000 = vunpack.c.h.b16 %v404
    %v2001 = vunpack.c.l.b16 %v405
    %v2002 = vunpack.c.h.b16 %v405
    %v2003 = vunpack.c.l.b16 %v406
    %v2004 = vunpack.c.h.b16 %v406
    %v2005 = vunpack.c.l.b16 %v407
    %v2006 = vunpack.c.h.b16 %v407
    %v2007 = vunpack.c.l.b16 %v408
    %v2008 = vunpack.c.h.b16 %v408
    %v2009 = vunpack.c.l.b16 %v409
    %v2010 = vunpack.c.h.b16 %v409
    %v2011 = vunpack.c.l.b16 %v410
    %v2012 = vunpack.c.h.b16 %v410
    %v2013 = vunpack.c.l.b16 %v411
    %v2014 = vunpack.c.h.b16 %v411
    %v2015 = vunpack.c.l.b16 %v412
    %v2016 = vunpack.c.h.b16 %v412
    %v2017 = vunpack.c.l.b16 %v413
    %v2018 = vunpack.c.h.b16 %v413
    %v2019 = vunpack.c.l.b16 %v414
    %v2020 = vunpack.c.h.b16 %v414
    %v2021 = vunpack.c.l.b16 %v415
    %v2022 = vunpack.c.h.b16 %v415
    %v2023 = vunpack.c.l.b16 %v416
    %v2024 = vunpack.c.h.b16 %v416
    %v2025 = vunpack.c.l.b16 %v417
    %v2026 = vunpack.c.h.b16 %v417
    %v2027 = vunpack.c.l.b16 %v418
    %v2028 = vunpack.c.h.b16 %v418
    %v2029 = vunpack.c.l.b16 %v419
    %v2030 = vunpack.c.h.b16 %v419
    %v2031 = vunpack.c.l.b16 %v420
    %v2032 = vunpack.c.h.b16 %v420
    %v2033 = vunpack.c.l.b16 %v421
    %v2034 = vunpack.c.h.b16 %v421
    %v2035 = vunpack.c.l.b16 %v422
    %v2036 = vunpack.c.h.b16 %v422
    %v2037 = vunpack.c.l.b16 %v423
    %v2038 = vunpack.c.h.b16 %v423
    %v2039 = vunpack.c.l.b16 %v424
    %v2040 = vunpack.c.h.b16 %v424
    %v2041 = vunpack.c.l.b16 %v425
    %v2042 = vunpack.c.h.b16 %v425
    %v2043 = vunpack.c.l.b16 %v426
    %v2044 = vunpack.c.h.b16 %v426
    %v2045 = vunpack.c.l.b16 %v427
    %v2046 = vunpack.c.h.b16 %v427
    %v2047 = vunpack.c.l.b16 %v428
    %v2048 = vunpack.c.h.b16 %v428
    %v2049 = vunpack.c.l.b16 %v429
    %v2050 = vunpack.c.h.b16 %v429
    %v2051 = vunpack.c.l.b16 %v430
    %v2052 = vunpack.c.h.b16 %v430
    %v2053 = vunpack.c.l.b16 %v431
    %v2054 = vunpack.c.h.b16 %v431
    %v2055 = vunpack.c.l.b16 %v432
    %v2056 = vunpack.c.h.b16 %v432
    %v2057 = vunpack.c.l.b16 %v433
    %v2058 = vunpack.c.h.b16 %v433
    %v2059 = vunpack.c.l.b16 %v434
    %v2060 = vunpack.c.h.b16 %v434
    %v2061 = vunpack.c.l.b16 %v435
    %v2062 = vunpack.c.h.b16 %v435
    %v2063 = vunpack.c.l.b16 %v436
    %v2064 = vunpack.c.h.b16 %v436
    %v2065 = vunpack.c.l.b16 %v437
    %v2066 = vunpack.c.h.b16 %v437
    %v2067 = vunpack.c.l.b16 %v438
    %v2068 = vunpack.c.h.b16 %v438
    %v2069 = vunpack.c.l.b16 %v439
    %v2070 = vunpack.c.h.b16 %v439
    %v2071 = vunpack.c.l.b16 %v440
    %v2072 = vunpack.c.h.b16 %v440
    %v2073 = vunpack.c.l.b16 %v441
    %v2074 = vunpack.c.h.b16 %v441
    %v2075 = vunpack.c.l.b16 %v442
    %v2076 = vunpack.c.h.b16 %v442
    %v2077 = vunpack.c.l.b16 %v443
    %v2078 = vunpack.c.h.b16 %v443
    %v2079 = vunpack.c.l.b16 %v444
    %v2080 = vunpack.c.h.b16 %v444
    %v2081 = vunpack.c.l.b16 %v445
    %v2082 = vunpack.c.h.b16 %v445
    %v2083 = vunpack.c.l.b16 %v446
    %v2084 = vunpack.c.h.b16 %v446
    %v2085 = vunpack.c.l.b16 %v447
    %v2086 = vunpack.c.h.b16 %v447
    %v2087 = vunpack.c.l.b16 %v448
    %v2088 = vunpack.c.h.b16 %v448
    %v2089 = vunpack.c.l.b16 %v449
    %v2090 = vunpack.c.h.b16 %v449
    %v2091 = vunpack.c.l.b16 %v450
    %v2092 = vunpack.c.h.b16 %v450
    %v2093 = vunpack.c.l.b16 %v451
    %v2094 = vunpack.c.h.b16 %v451
    %v2095 = vunpack.c.l.b16 %v452
    %v2096 = vunpack.c.h.b16 %v452
    %v2097 = vunpack.c.l.b16 %v453
    %v2098 = vunpack.c.h.b16 %v453
    %v2099 = vunpack.c.l.b16 %v454
    %v2100 = vunpack.c.h.b16 %v454
    %v2101 = vunpack.c.l.b16 %v455
    %v2102 = vunpack.c.h.b16 %v455
    %v2103 = vunpack.c.l.b16 %v456
    %v2104 = vunpack.c.h.b16 %v456
    %v2105 = vunpack.c.l.b16 %v457
    %v2106 = vunpack.c.h.b16 %v457
    %v2107 = vunpack.c.l.b16 %v458
    %v2108 = vunpack.c.h.b16 %v458
    %v2109 = vunpack.c.l.b16 %v459
    %v2110 = vunpack.c.h.b16 %v459
    %v2111 = vunpack.c.l.b16 %v460
    %v2112 = vunpack.c.h.b16 %v460
    %v2113 = vunpack.c.l.b16 %v461
    %v2114 = vunpack.c.h.b16 %v461
    %v2115 = vunpack.c.l.b16 %v462
    %v2116 = vunpack.c.h.b16 %v462
    %v2117 = vunpack.c.l.b16 %v463
    %v2118 = vunpack.c.h.b16 %v463
    %v2119 = vunpack.c.l.b16 %v464
    %v2120 = vunpack.c.h.b16 %v464
    %v2121 = vunpack.c.l.b16 %v465
    %v2122 = vunpack.c.h.b16 %v465
    %v2123 = vunpack.c.l.b16 %v466
    %v2124 = vunpack.c.h.b16 %v466
    %v2125 = vunpack.c.l.b16 %v467
    %v2126 = vunpack.c.h.b16 %v467
    %v2127 = vunpack.c.l.b16 %v468
    %v2128 = vunpack.c.h.b16 %v468
    %v2129 = vunpack.c.l.b16 %v469
    %v2130 = vunpack.c.h.b16 %v469
    %v2131 = vunpack.c.l.b16 %v470
    %v2132 = vunpack.c.h.b16 %v470
    %v2133 = vunpack.c.l.b16 %v471
    %v2134 = vunpack.c.h.b16 %v471
    %v2135 = vunpack.c.l.b16 %v472
    %v2136 = vunpack.c.h.b16 %v472
    %v2137 = vunpack.c.l.b16 %v473
    %v2138 = vunpack.c.h.b16 %v473
    %v2139 = vunpack.c.l.b16 %v474
    %v2140 = vunpack.c.h.b16 %v474
    %v2141 = vunpack.c.l.b16 %v475
    %v2142 = vunpack.c.h.b16 %v475
    %v2143 = vunpack.c.l.b16 %v476
    %v2144 = vunpack.c.h.b16 %v476
    %v2145 = vunpack.c.l.b16 %v477
    %v2146 = vunpack.c.h.b16 %v477
    %v2147 = vunpack.c.l.b16 %v478
    %v2148 = vunpack.c.h.b16 %v478
    %v2149 = vunpack.c.l.b16 %v479
    %v2150 = vunpack.c.h.b16 %v479
    %v2151 = vunpack.c.l.b16 %v480
    %v2152 = vunpack.c.h.b16 %v480
    %v2153 = vunpack.c.l.b16 %v481
    %v2154 = vunpack.c.h.b16 %v481
    %v2155 = vunpack.c.l.b16 %v482
    %v2156 = vunpack.c.h.b16 %v482
    %v2157 = vunpack.c.l.b16 %v483
    %v2158 = vunpack.c.h.b16 %v483
    %v2159 = vunpack.c.l.b16 %v484
    %v2160 = vunpack.c.h.b16 %v484
    %v2161 = vunpack.c.l.b16 %v485
    %v2162 = vunpack.c.h.b16 %v485
    %v2163 = vunpack.c.l.b16 %v486
    %v2164 = vunpack.c.h.b16 %v486
    %v2165 = vunpack.c.l.b16 %v487
    %v2166 = vunpack.c.h.b16 %v487
    %v2167 = vunpack.c.l.b16 %v488
    %v2168 = vunpack.c.h.b16 %v488
    %v2169 = vunpack.c.l.b16 %v489
    %v2170 = vunpack.c.h.b16 %v489
    %v2171 = vunpack.c.l.b16 %v490
    %v2172 = vunpack.c.h.b16 %v490
    %v2173 = vunpack.c.l.b16 %v491
    %v2174 = vunpack.c.h.b16 %v491
    %v2175 = vunpack.c.l.b16 %v492
    %v2176 = vunpack.c.h.b16 %v492
    %v2177 = vunpack.c.l.b16 %v493
    %v2178 = vunpack.c.h.b16 %v493
    %v2179 = vunpack.c.l.b16 %v494
    %v2180 = vunpack.c.h.b16 %v494
    %v2181 = vunpack.c.l.b16 %v495
    %v2182 = vunpack.c.h.b16 %v495
    %v2183 = vunpack.c.l.b16 %v496
    %v2184 = vunpack.c.h.b16 %v496
    %v2185 = vunpack.c.l.b16 %v497
    %v2186 = vunpack.c.h.b16 %v497
    %v2187 = vunpack.c.l.b16 %v498
    %v2188 = vunpack.c.h.b16 %v498
    %v2189 = vunpack.c.l.b16 %v499
    %v2190 = vunpack.c.h.b16 %v499
    %v2191 = vunpack.c.l.b16 %v500
    %v2192 = vunpack.c.h.b16 %v500
    %v2193 = vunpack.c.l.b16 %v501
    %v2194 = vunpack.c.h.b16 %v501
    %v2195 = vunpack.c.l.b16 %v502
    %v2196 = vunpack.c.h.b16 %v502
    %v2197 = vunpack.c.l.b16 %v503
    %v2198 = vunpack.c.h.b16 %v503
    %v2199 = vunpack.c.l.b16 %v504
    %v2200 = vunpack.c.h.b16 %v504
    %v2201 = vunpack.c.l.b16 %v505
    %v2202 = vunpack.c.h.b16 %v505
    %v2203 = vunpack.c.l.b16 %v506
    %v2204 = vunpack.c.h.b16 %v506
    %v2205 = vunpack.c.l.b16 %v507
    %v2206 = vunpack.c.h.b16 %v507
    %v2207 = vunpack.c.l.b16 %v508
    %v2208 = vunpack.c.h.b16 %v508
    %v2209 = vunpack.c.l.b16 %v509
    %v2210 = vunpack.c.h.b16 %v509
    %v2211 = vunpack.c.l.b16 %v510
    %v2212 = vunpack.c.h.b16 %v510
    %v2213 = vunpack.c.l.b16 %v511
    %v2214 = vunpack.c.h.b16 %v511
    %v2215 = vunpack.c.l.b16 %v512
    %v2216 = vunpack.c.h.b16 %v512
    %v2217 = vunpack.c.l.b16 %v513
    %v2218 = vunpack.c.h.b16 %v513
    %v2219 = vunpack.c.l.b16 %v514
    %v2220 = vunpack.c.h.b16 %v514
    %v2221 = vunpack.c.l.b16 %v515
    %v2222 = vunpack.c.h.b16 %v515
    %v2223 = vunpack.c.l.b16 %v516
    %v2224 = vunpack.c.h.b16 %v516
    %v2225 = vunpack.c.l.b16 %v517
    %v2226 = vunpack.c.h.b16 %v517
    %v2227 = vunpack.c.l.b16 %v518
    %v2228 = vunpack.c.h.b16 %v518
    %v2229 = vunpack.c.l.b16 %v519
    %v2230 = vunpack.c.h.b16 %v519
    %v2231 = vunpack.c.l.b16 %v520
    %v2232 = vunpack.c.h.b16 %v520
    %v2233 = vunpack.c.l.b16 %v521
    %v2234 = vunpack.c.h.b16 %v521
    %v2235 = vunpack.c.l.b16 %v522
    %v2236 = vunpack.c.h.b16 %v522
    %v2237 = vunpack.c.l.b16 %v523
    %v2238 = vunpack.c.h.b16 %v523
    %v2239 = vunpack.c.l.b16 %v524
    %v2240 = vunpack.c.h.b16 %v524
    %v2241 = vunpack.c.l.b16 %v525
    %v2242 = vunpack.c.h.b16 %v525
    %v2243 = vunpack.c.l.b16 %v526
    %v2244 = vunpack.c.h.b16 %v526
    %v2245 = vunpack.c.l.b16 %v527
    %v2246 = vunpack.c.h.b16 %v527
    %v2247 = vunpack.c.l.b16 %v528
    %v2248 = vunpack.c.h.b16 %v528
    %v2249 = vunpack.c.l.b16 %v529
    %v2250 = vunpack.c.h.b16 %v529
    %v2251 = vunpack.c.l.b16 %v530
    %v2252 = vunpack.c.h.b16 %v530
    %v2253 = vunpack.c.l.b16 %v531
    %v2254 = vunpack.c.h.b16 %v531
    %v2255 = vunpack.c.l.b16 %v532
    %v2256 = vunpack.c.h.b16 %v532
    %v2257 = vunpack.c.l.b16 %v533
    %v2258 = vunpack.c.h.b16 %v533
    %v2259 = vunpack.c.l.b16 %v534
    %v2260 = vunpack.c.h.b16 %v534
    %v2261 = vunpack.c.l.b16 %v535
    %v2262 = vunpack.c.h.b16 %v535
    %v2263 = vunpack.c.l.b16 %v536
    %v2264 = vunpack.c.h.b16 %v536
    %v2265 = vunpack.c.l.b16 %v537
    %v2266 = vunpack.c.h.b16 %v537
    %v2267 = vunpack.c.l.b16 %v538
    %v2268 = vunpack.c.h.b16 %v538
    %v2269 = vunpack.c.l.b16 %v539
    %v2270 = vunpack.c.h.b16 %v539
    %v2271 = vunpack.c.l.b16 %v540
    %v2272 = vunpack.c.h.b16 %v540
    %v2273 = vunpack.c.l.b16 %v541
    %v2274 = vunpack.c.h.b16 %v541
    %v2275 = vunpack.c.l.b16 %v542
    %v2276 = vunpack.c.h.b16 %v542
    %v2277 = vunpack.c.l.b16 %v543
    %v2278 = vunpack.c.h.b16 %v543
    %v2279 = vunpack.c.l.b16 %v544
    %v2280 = vunpack.c.h.b16 %v544
    %v2281 = vunpack.c.l.b16 %v545
    %v2282 = vunpack.c.h.b16 %v545
    %v2283 = vunpack.c.l.b16 %v546
    %v2284 = vunpack.c.h.b16 %v546
    %v2285 = vunpack.c.l.b16 %v547
    %v2286 = vunpack.c.h.b16 %v547
    %v2287 = vunpack.c.l.b16 %v548
    %v2288 = vunpack.c.h.b16 %v548
    %v2289 = vunpack.c.l.b16 %v549
    %v2290 = vunpack.c.h.b16 %v549
    %v2291 = vunpack.c.l.b16 %v550
    %v2292 = vunpack.c.h.b16 %v550
    %v2293 = vunpack.c.l.b16 %v551
    %v2294 = vunpack.c.h.b16 %v551
    %v2295 = vunpack.c.l.b16 %v552
    %v2296 = vunpack.c.h.b16 %v552
    %v2297 = vunpack.c.l.b16 %v553
    %v2298 = vunpack.c.h.b16 %v553
    %v2299 = vunpack.c.l.b16 %v554
    %v2300 = vunpack.c.h.b16 %v554
    %v2301 = vunpack.c.l.b16 %v555
    %v2302 = vunpack.c.h.b16 %v555
    %v2303 = vunpack.c.l.b16 %v556
    %v2304 = vunpack.c.h.b16 %v556
    %v2305 = vunpack.c.l.b16 %v557
    %v2306 = vunpack.c.h.b16 %v557
    %v2307 = vunpack.c.l.b16 %v558
    %v2308 = vunpack.c.h.b16 %v558
    %v2309 = vunpack.c.l.b16 %v559
    %v2310 = vunpack.c.h.b16 %v559
    %v2311 = vunpack.c.l.b16 %v560
    %v2312 = vunpack.c.h.b16 %v560
    %v2313 = vunpack.c.l.b16 %v561
    %v2314 = vunpack.c.h.b16 %v561
    %v2315 = vunpack.c.l.b16 %v562
    %v2316 = vunpack.c.h.b16 %v562
    %v2317 = vunpack.c.l.b16 %v563
    %v2318 = vunpack.c.h.b16 %v563
    %v2319 = vunpack.c.l.b16 %v564
    %v2320 = vunpack.c.h.b16 %v564
    %v2321 = vunpack.c.l.b16 %v565
    %v2322 = vunpack.c.h.b16 %v565
    %v2323 = vunpack.c.l.b16 %v566
    %v2324 = vunpack.c.h.b16 %v566
    %v2325 = vunpack.c.l.b16 %v567
    %v2326 = vunpack.c.h.b16 %v567
    %v2327 = vunpack.c.l.b16 %v568
    %v2328 = vunpack.c.h.b16 %v568
    %v2329 = vunpack.c.l.b16 %v569
    %v2330 = vunpack.c.h.b16 %v569
    %v2331 = vunpack.c.l.b16 %v570
    %v2332 = vunpack.c.h.b16 %v570
    %v2333 = vunpack.c.l.b16 %v571
    %v2334 = vunpack.c.h.b16 %v571
    %v2335 = vunpack.c.l.b16 %v572
    %v2336 = vunpack.c.h.b16 %v572
    %v2337 = vunpack.c.l.b16 %v573
    %v2338 = vunpack.c.h.b16 %v573
    %v2339 = vunpack.c.l.b16 %v574
    %v2340 = vunpack.c.h.b16 %v574
    %v2341 = vunpack.c.l.b16 %v575
    %v2342 = vunpack.c.h.b16 %v575
    %v2343 = vunpack.c.l.b16 %v576
    %v2344 = vunpack.c.h.b16 %v576
    %v2345 = vunpack.c.l.b16 %v577
    %v2346 = vunpack.c.h.b16 %v577
    %v2347 = vunpack.c.l.b16 %v578
    %v2348 = vunpack.c.h.b16 %v578
    %v2349 = vunpack.c.l.b16 %v579
    %v2350 = vunpack.c.h.b16 %v579
    %v2351 = vunpack.c.l.b16 %v580
    %v2352 = vunpack.c.h.b16 %v580
    %v2353 = vunpack.c.l.b16 %v581
    %v2354 = vunpack.c.h.b16 %v581
    %v2355 = vunpack.c.l.b16 %v582
    %v2356 = vunpack.c.h.b16 %v582
    %v2357 = vunpack.c.l.b16 %v583
    %v2358 = vunpack.c.h.b16 %v583
    %v2359 = vunpack.c.l.b16 %v584
    %v2360 = vunpack.c.h.b16 %v584
    %v2361 = vunpack.c.l.b16 %v585
    %v2362 = vunpack.c.h.b16 %v585
    %v2363 = vunpack.c.l.b16 %v586
    %v2364 = vunpack.c.h.b16 %v586
    %v2365 = vunpack.c.l.b16 %v587
    %v2366 = vunpack.c.h.b16 %v587
    %v2367 = vunpack.c.l.b16 %v588
    %v2368 = vunpack.c.h.b16 %v588
    %v2369 = vpack.c.b16 %v1347, %v1345
    %v2370 = vpack.c.b16 %v1348, %v1346
    %v2371 = vpack.c.b16 %v1351, %v1349
    %v2372 = vpack.c.b16 %v1352, %v1350
    %v2373 = vpack.c.b16 %v1355, %v1353
    %v2374 = vpack.c.b16 %v1356, %v1354
    %v2375 = vpack.c.b16 %v1359, %v1357
    %v2376 = vpack.c.b16 %v1360, %v1358
    %v2377 = vpack.c.b16 %v1363, %v1361
    %v2378 = vpack.c.b16 %v1364, %v1362
    %v2379 = vpack.c.b16 %v1367, %v1365
    %v2380 = vpack.c.b16 %v1368, %v1366
    %v2381 = vpack.c.b16 %v1371, %v1369
    %v2382 = vpack.c.b16 %v1372, %v1370
    %v2383 = vpack.c.b16 %v1375, %v1373
    %v2384 = vpack.c.b16 %v1376, %v1374
    %v2385 = vpack.c.b16 %v1379, %v1377
    %v2386 = vpack.c.b16 %v1380, %v1378
    %v2387 = vpack.c.b16 %v1383, %v1381
    %v2388 = vpack.c.b16 %v1384, %v1382
    %v2389 = vpack.c.b16 %v1387, %v1385
    %v2390 = vpack.c.b16 %v1388, %v1386
    %v2391 = vpack.c.b16 %v1391, %v1389
    %v2392 = vpack.c.b16 %v1392, %v1390
    %v2393 = vpack.c.b16 %v1395, %v1393
    %v2394 = vpack.c.b16 %v1396, %v1394
    %v2395 = vpack.c.b16 %v1399, %v1397
    %v2396 = vpack.c.b16 %v1400, %v1398
    %v2397 = vpack.c.b16 %v1403, %v1401
    %v2398 = vpack.c.b16 %v1404, %v1402
    %v2399 = vpack.c.b16 %v1407, %v1405
    %v2400 = vpack.c.b16 %v1408, %v1406
    %v2401 = vpack.c.b16 %v1411, %v1409
    %v2402 = vpack.c.b16 %v1412, %v1410
    %v2403 = vpack.c.b16 %v1415, %v1413
    %v2404 = vpack.c.b16 %v1416, %v1414
    %v2405 = vpack.c.b16 %v1419, %v1417
    %v2406 = vpack.c.b16 %v1420, %v1418
    %v2407 = vpack.c.b16 %v1423, %v1421
    %v2408 = vpack.c.b16 %v1424, %v1422
    %v2409 = vpack.c.b16 %v1427, %v1425
    %v2410 = vpack.c.b16 %v1428, %v1426
    %v2411 = vpack.c.b16 %v1431, %v1429
    %v2412 = vpack.c.b16 %v1432, %v1430
    %v2413 = vpack.c.b16 %v1435, %v1433
    %v2414 = vpack.c.b16 %v1436, %v1434
    %v2415 = vpack.c.b16 %v1439, %v1437
    %v2416 = vpack.c.b16 %v1440, %v1438
    %v2417 = vpack.c.b16 %v1443, %v1441
    %v2418 = vpack.c.b16 %v1444, %v1442
    %v2419 = vpack.c.b16 %v1447, %v1445
    %v2420 = vpack.c.b16 %v1448, %v1446
    %v2421 = vpack.c.b16 %v1451, %v1449
    %v2422 = vpack.c.b16 %v1452, %v1450
    %v2423 = vpack.c.b16 %v1455, %v1453
    %v2424 = vpack.c.b16 %v1456, %v1454
    %v2425 = vpack.c.b16 %v1459, %v1457
    %v2426 = vpack.c.b16 %v1460, %v1458
    %v2427 = vpack.c.b16 %v1463, %v1461
    %v2428 = vpack.c.b16 %v1464, %v1462
    %v2429 = vpack.c.b16 %v1467, %v1465
    %v2430 = vpack.c.b16 %v1468, %v1466
    %v2431 = vpack.c.b16 %v1471, %v1469
    %v2432 = vpack.c.b16 %v1472, %v1470
    %v2433 = vpack.c.b16 %v1475, %v1473
    %v2434 = vpack.c.b16 %v1476, %v1474
    %v2435 = vpack.c.b16 %v1479, %v1477
    %v2436 = vpack.c.b16 %v1480, %v1478
    %v2437 = vpack.c.b16 %v1483, %v1481
    %v2438 = vpack.c.b16 %v1484, %v1482
    %v2439 = vpack.c.b16 %v1487, %v1485
    %v2440 = vpack.c.b16 %v1488, %v1486
    %v2441 = vpack.c.b16 %v1491, %v1489
    %v2442 = vpack.c.b16 %v1492, %v1490
    %v2443 = vpack.c.b16 %v1495, %v1493
    %v2444 = vpack.c.b16 %v1496, %v1494
    %v2445 = vpack.c.b16 %v1499, %v1497
    %v2446 = vpack.c.b16 %v1500, %v1498
    %v2447 = vpack.c.b16 %v1503, %v1501
    %v2448 = vpack.c.b16 %v1504, %v1502
    %v2449 = vpack.c.b16 %v1507, %v1505
    %v2450 = vpack.c.b16 %v1508, %v1506
    %v2451 = vpack.c.b16 %v1511, %v1509
    %v2452 = vpack.c.b16 %v1512, %v1510
    %v2453 = vpack.c.b16 %v1515, %v1513
    %v2454 = vpack.c.b16 %v1516, %v1514
    %v2455 = vpack.c.b16 %v1519, %v1517
    %v2456 = vpack.c.b16 %v1520, %v1518
    %v2457 = vpack.c.b16 %v1523, %v1521
    %v2458 = vpack.c.b16 %v1524, %v1522
    %v2459 = vpack.c.b16 %v1527, %v1525
    %v2460 = vpack.c.b16 %v1528, %v1526
    %v2461 = vpack.c.b16 %v1531, %v1529
    %v2462 = vpack.c.b16 %v1532, %v1530
    %v2463 = vpack.c.b16 %v1535, %v1533
    %v2464 = vpack.c.b16 %v1536, %v1534
    %v2465 = vpack.c.b16 %v1539, %v1537
    %v2466 = vpack.c.b16 %v1540, %v1538
    %v2467 = vpack.c.b16 %v1543, %v1541
    %v2468 = vpack.c.b16 %v1544, %v1542
    %v2469 = vpack.c.b16 %v1547, %v1545
    %v2470 = vpack.c.b16 %v1548, %v1546
    %v2471 = vpack.c.b16 %v1551, %v1549
    %v2472 = vpack.c.b16 %v1552, %v1550
    %v2473 = vpack.c.b16 %v1555, %v1553
    %v2474 = vpack.c.b16 %v1556, %v1554
    %v2475 = vpack.c.b16 %v1559, %v1557
    %v2476 = vpack.c.b16 %v1560, %v1558
    %v2477 = vpack.c.b16 %v1563, %v1561
    %v2478 = vpack.c.b16 %v1564, %v1562
    %v2479 = vpack.c.b16 %v1567, %v1565
    %v2480 = vpack.c.b16 %v1568, %v1566
    %v2481 = vpack.c.b16 %v1571, %v1569
    %v2482 = vpack.c.b16 %v1572, %v1570
    %v2483 = vpack.c.b16 %v1575, %v1573
    %v2484 = vpack.c.b16 %v1576, %v1574
    %v2485 = vpack.c.b16 %v1579, %v1577
    %v2486 = vpack.c.b16 %v1580, %v1578
    %v2487 = vpack.c.b16 %v1583, %v1581
    %v2488 = vpack.c.b16 %v1584, %v1582
    %v2489 = vpack.c.b16 %v1587, %v1585
    %v2490 = vpack.c.b16 %v1588, %v1586
    %v2491 = vpack.c.b16 %v1591, %v1589
    %v2492 = vpack.c.b16 %v1592, %v1590
    %v2493 = vpack.c.b16 %v1595, %v1593
    %v2494 = vpack.c.b16 %v1596, %v1594
    %v2495 = vpack.c.b16 %v1599, %v1597
    %v2496 = vpack.c.b16 %v1600, %v1598
    %v2497 = vpack.c.b16 %v1603, %v1601
    %v2498 = vpack.c.b16 %v1604, %v1602
    %v2499 = vpack.c.b16 %v1607, %v1605
    %v2500 = vpack.c.b16 %v1608, %v1606
    %v2501 = vpack.c.b16 %v1611, %v1609
    %v2502 = vpack.c.b16 %v1612, %v1610
    %v2503 = vpack.c.b16 %v1615, %v1613
    %v2504 = vpack.c.b16 %v1616, %v1614
    %v2505 = vpack.c.b16 %v1619, %v1617
    %v2506 = vpack.c.b16 %v1620, %v1618
    %v2507 = vpack.c.b16 %v1623, %v1621
    %v2508 = vpack.c.b16 %v1624, %v1622
    %v2509 = vpack.c.b16 %v1627, %v1625
    %v2510 = vpack.c.b16 %v1628, %v1626
    %v2511 = vpack.c.b16 %v1631, %v1629
    %v2512 = vpack.c.b16 %v1632, %v1630
    %v2513 = vpack.c.b16 %v1635, %v1633
    %v2514 = vpack.c.b16 %v1636, %v1634
    %v2515 = vpack.c.b16 %v1639, %v1637
    %v2516 = vpack.c.b16 %v1640, %v1638
    %v2517 = vpack.c.b16 %v1643, %v1641
    %v2518 = vpack.c.b16 %v1644, %v1642
    %v2519 = vpack.c.b16 %v1647, %v1645
    %v2520 = vpack.c.b16 %v1648, %v1646
    %v2521 = vpack.c.b16 %v1651, %v1649
    %v2522 = vpack.c.b16 %v1652, %v1650
    %v2523 = vpack.c.b16 %v1655, %v1653
    %v2524 = vpack.c.b16 %v1656, %v1654
    %v2525 = vpack.c.b16 %v1659, %v1657
    %v2526 = vpack.c.b16 %v1660, %v1658
    %v2527 = vpack.c.b16 %v1663, %v1661
    %v2528 = vpack.c.b16 %v1664, %v1662
    %v2529 = vpack.c.b16 %v1667, %v1665
    %v2530 = vpack.c.b16 %v1668, %v1666
    %v2531 = vpack.c.b16 %v1671, %v1669
    %v2532 = vpack.c.b16 %v1672, %v1670
    %v2533 = vpack.c.b16 %v1675, %v1673
    %v2534 = vpack.c.b16 %v1676, %v1674
    %v2535 = vpack.c.b16 %v1679, %v1677
    %v2536 = vpack.c.b16 %v1680, %v1678
    %v2537 = vpack.c.b16 %v1683, %v1681
    %v2538 = vpack.c.b16 %v1684, %v1682
    %v2539 = vpack.c.b16 %v1687, %v1685
    %v2540 = vpack.c.b16 %v1688, %v1686
    %v2541 = vpack.c.b16 %v1691, %v1689
    %v2542 = vpack.c.b16 %v1692, %v1690
    %v2543 = vpack.c.b16 %v1695, %v1693
    %v2544 = vpack.c.b16 %v1696, %v1694
    %v2545 = vpack.c.b16 %v1699, %v1697
    %v2546 = vpack.c.b16 %v1700, %v1698
    %v2547 = vpack.c.b16 %v1703, %v1701
    %v2548 = vpack.c.b16 %v1704, %v1702
    %v2549 = vpack.c.b16 %v1707, %v1705
    %v2550 = vpack.c.b16 %v1708, %v1706
    %v2551 = vpack.c.b16 %v1711, %v1709
    %v2552 = vpack.c.b16 %v1712, %v1710
    %v2553 = vpack.c.b16 %v1715, %v1713
    %v2554 = vpack.c.b16 %v1716, %v1714
    %v2555 = vpack.c.b16 %v1719, %v1717
    %v2556 = vpack.c.b16 %v1720, %v1718
    %v2557 = vpack.c.b16 %v1723, %v1721
    %v2558 = vpack.c.b16 %v1724, %v1722
    %v2559 = vpack.c.b16 %v1727, %v1725
    %v2560 = vpack.c.b16 %v1728, %v1726
    %v2561 = vpack.c.b16 %v1731, %v1729
    %v2562 = vpack.c.b16 %v1732, %v1730
    %v2563 = vpack.c.b16 %v1735, %v1733
    %v2564 = vpack.c.b16 %v1736, %v1734
    %v2565 = vpack.c.b16 %v1739, %v1737
    %v2566 = vpack.c.b16 %v1740, %v1738
    %v2567 = vpack.c.b16 %v1743, %v1741
    %v2568 = vpack.c.b16 %v1744, %v1742
    %v2569 = vpack.c.b16 %v1747, %v1745
    %v2570 = vpack.c.b16 %v1748, %v1746
    %v2571 = vpack.c.b16 %v1751, %v1749
    %v2572 = vpack.c.b16 %v1752, %v1750
    %v2573 = vpack.c.b16 %v1755, %v1753
    %v2574 = vpack.c.b16 %v1756, %v1754
    %v2575 = vpack.c.b16 %v1759, %v1757
    %v2576 = vpack.c.b16 %v1760, %v1758
    %v2577 = vpack.c.b16 %v1763, %v1761
    %v2578 = vpack.c.b16 %v1764, %v1762
    %v2579 = vpack.c.b16 %v1767, %v1765
    %v2580 = vpack.c.b16 %v1768, %v1766
    %v2581 = vpack.c.b16 %v1771, %v1769
    %v2582 = vpack.c.b16 %v1772, %v1770
    %v2583 = vpack.c.b16 %v1775, %v1773
    %v2584 = vpack.c.b16 %v1776, %v1774
    %v2585 = vpack.c.b16 %v1779, %v1777
    %v2586 = vpack.c.b16 %v1780, %v1778
    %v2587 = vpack.c.b16 %v1783, %v1781
    %v2588 = vpack.c.b16 %v1784, %v1782
    %v2589 = vpack.c.b16 %v1787, %v1785
    %v2590 = vpack.c.b16 %v1788, %v1786
    %v2591 = vpack.c.b16 %v1791, %v1789
    %v2592 = vpack.c.b16 %v1792, %v1790
    %v2593 = vpack.c.b16 %v1795, %v1793
    %v2594 = vpack.c.b16 %v1796, %v1794
    %v2595 = vpack.c.b16 %v1799, %v1797
    %v2596 = vpack.c.b16 %v1800, %v1798
    %v2597 = vpack.c.b16 %v1803, %v1801
    %v2598 = vpack.c.b16 %v1804, %v1802
    %v2599 = vpack.c.b16 %v1807, %v1805
    %v2600 = vpack.c.b16 %v1808, %v1806
    %v2601 = vpack.c.b16 %v1811, %v1809
    %v2602 = vpack.c.b16 %v1812, %v1810
    %v2603 = vpack.c.b16 %v1815, %v1813
    %v2604 = vpack.c.b16 %v1816, %v1814
    %v2605 = vpack.c.b16 %v1819, %v1817
    %v2606 = vpack.c.b16 %v1820, %v1818
    %v2607 = vpack.c.b16 %v1823, %v1821
    %v2608 = vpack.c.b16 %v1824, %v1822
    %v2609 = vpack.c.b16 %v1827, %v1825
    %v2610 = vpack.c.b16 %v1828, %v1826
    %v2611 = vpack.c.b16 %v1831, %v1829
    %v2612 = vpack.c.b16 %v1832, %v1830
    %v2613 = vpack.c.b16 %v1835, %v1833
    %v2614 = vpack.c.b16 %v1836, %v1834
    %v2615 = vpack.c.b16 %v1839, %v1837
    %v2616 = vpack.c.b16 %v1840, %v1838
    %v2617 = vpack.c.b16 %v1843, %v1841
    %v2618 = vpack.c.b16 %v1844, %v1842
    %v2619 = vpack.c.b16 %v1847, %v1845
    %v2620 = vpack.c.b16 %v1848, %v1846
    %v2621 = vpack.c.b16 %v1851, %v1849
    %v2622 = vpack.c.b16 %v1852, %v1850
    %v2623 = vpack.c.b16 %v1855, %v1853
    %v2624 = vpack.c.b16 %v1856, %v1854
    %v2625 = vpack.c.b16 %v1859, %v1857
    %v2626 = vpack.c.b16 %v1860, %v1858
    %v2627 = vpack.c.b16 %v1863, %v1861
    %v2628 = vpack.c.b16 %v1864, %v1862
    %v2629 = vpack.c.b16 %v1867, %v1865
    %v2630 = vpack.c.b16 %v1868, %v1866
    %v2631 = vpack.c.b16 %v1871, %v1869
    %v2632 = vpack.c.b16 %v1872, %v1870
    %v2633 = vpack.c.b16 %v1875, %v1873
    %v2634 = vpack.c.b16 %v1876, %v1874
    %v2635 = vpack.c.b16 %v1879, %v1877
    %v2636 = vpack.c.b16 %v1880, %v1878
    %v2637 = vpack.c.b16 %v1883, %v1881
    %v2638 = vpack.c.b16 %v1884, %v1882
    %v2639 = vpack.c.b16 %v1887, %v1885
    %v2640 = vpack.c.b16 %v1888, %v1886
    %v2641 = vpack.c.b16 %v1891, %v1889
    %v2642 = vpack.c.b16 %v1892, %v1890
    %v2643 = vpack.c.b16 %v1895, %v1893
    %v2644 = vpack.c.b16 %v1896, %v1894
    %v2645 = vpack.c.b16 %v1899, %v1897
    %v2646 = vpack.c.b16 %v1900, %v1898
    %v2647 = vpack.c.b16 %v1903, %v1901
    %v2648 = vpack.c.b16 %v1904, %v1902
    %v2649 = vpack.c.b16 %v1907, %v1905
    %v2650 = vpack.c.b16 %v1908, %v1906
    %v2651 = vpack.c.b16 %v1911, %v1909
    %v2652 = vpack.c.b16 %v1912, %v1910
    %v2653 = vpack.c.b16 %v1915, %v1913
    %v2654 = vpack.c.b16 %v1916, %v1914
    %v2655 = vpack.c.b16 %v1919, %v1917
    %v2656 = vpack.c.b16 %v1920, %v1918
    %v2657 = vpack.c.b16 %v1923, %v1921
    %v2658 = vpack.c.b16 %v1924, %v1922
    %v2659 = vpack.c.b16 %v1927, %v1925
    %v2660 = vpack.c.b16 %v1928, %v1926
    %v2661 = vpack.c.b16 %v1931, %v1929
    %v2662 = vpack.c.b16 %v1932, %v1930
    %v2663 = vpack.c.b16 %v1935, %v1933
    %v2664 = vpack.c.b16 %v1936, %v1934
    %v2665 = vpack.c.b16 %v1939, %v1937
    %v2666 = vpack.c.b16 %v1940, %v1938
    %v2667 = vpack.c.b16 %v1943, %v1941
    %v2668 = vpack.c.b16 %v1944, %v1942
    %v2669 = vpack.c.b16 %v1947, %v1945
    %v2670 = vpack.c.b16 %v1948, %v1946
    %v2671 = vpack.c.b16 %v1951, %v1949
    %v2672 = vpack.c.b16 %v1952, %v1950
    %v2673 = vpack.c.b16 %v1955, %v1953
    %v2674 = vpack.c.b16 %v1956, %v1954
    %v2675 = vpack.c.b16 %v1959, %v1957
    %v2676 = vpack.c.b16 %v1960, %v1958
    %v2677 = vpack.c.b16 %v1963, %v1961
    %v2678 = vpack.c.b16 %v1964, %v1962
    %v2679 = vpack.c.b16 %v1967, %v1965
    %v2680 = vpack.c.b16 %v1968, %v1966
    %v2681 = vpack.c.b16 %v1971, %v1969
    %v2682 = vpack.c.b16 %v1972, %v1970
    %v2683 = vpack.c.b16 %v1975, %v1973
    %v2684 = vpack.c.b16 %v1976, %v1974
    %v2685 = vpack.c.b16 %v1979, %v1977
    %v2686 = vpack.c.b16 %v1980, %v1978
    %v2687 = vpack.c.b16 %v1983, %v1981
    %v2688 = vpack.c.b16 %v1984, %v1982
    %v2689 = vpack.c.b16 %v1987, %v1985
    %v2690 = vpack.c.b16 %v1988, %v1986
    %v2691 = vpack.c.b16 %v1991, %v1989
    %v2692 = vpack.c.b16 %v1992, %v1990
    %v2693 = vpack.c.b16 %v1995, %v1993
    %v2694 = vpack.c.b16 %v1996, %v1994
    %v2695 = vpack.c.b16 %v1999, %v1997
    %v2696 = vpack.c.b16 %v2000, %v1998
    %v2697 = vpack.c.b16 %v2003, %v2001
    %v2698 = vpack.c.b16 %v2004, %v2002
    %v2699 = vpack.c.b16 %v2007, %v2005
    %v2700 = vpack.c.b16 %v2008, %v2006
    %v2701 = vpack.c.b16 %v2011, %v2009
    %v2702 = vpack.c.b16 %v2012, %v2010
    %v2703 = vpack.c.b16 %v2015, %v2013
    %v2704 = vpack.c.b16 %v2016, %v2014
    %v2705 = vpack.c.b16 %v2019, %v2017
    %v2706 = vpack.c.b16 %v2020, %v2018
    %v2707 = vpack.c.b16 %v2023, %v2021
    %v2708 = vpack.c.b16 %v2024, %v2022
    %v2709 = vpack.c.b16 %v2027, %v2025
    %v2710 = vpack.c.b16 %v2028, %v2026
    %v2711 = vpack.c.b16 %v2031, %v2029
    %v2712 = vpack.c.b16 %v2032, %v2030
    %v2713 = vpack.c.b16 %v2035, %v2033
    %v2714 = vpack.c.b16 %v2036, %v2034
    %v2715 = vpack.c.b16 %v2039, %v2037
    %v2716 = vpack.c.b16 %v2040, %v2038
    %v2717 = vpack.c.b16 %v2043, %v2041
    %v2718 = vpack.c.b16 %v2044, %v2042
    %v2719 = vpack.c.b16 %v2047, %v2045
    %v2720 = vpack.c.b16 %v2048, %v2046
    %v2721 = vpack.c.b16 %v2051, %v2049
    %v2722 = vpack.c.b16 %v2052, %v2050
    %v2723 = vpack.c.b16 %v2055, %v2053
    %v2724 = vpack.c.b16 %v2056, %v2054
    %v2725 = vpack.c.b16 %v2059, %v2057
    %v2726 = vpack.c.b16 %v2060, %v2058
    %v2727 = vpack.c.b16 %v2063, %v2061
    %v2728 = vpack.c.b16 %v2064, %v2062
    %v2729 = vpack.c.b16 %v2067, %v2065
    %v2730 = vpack.c.b16 %v2068, %v2066
    %v2731 = vpack.c.b16 %v2071, %v2069
    %v2732 = vpack.c.b16 %v2072, %v2070
    %v2733 = vpack.c.b16 %v2075, %v2073
    %v2734 = vpack.c.b16 %v2076, %v2074
    %v2735 = vpack.c.b16 %v2079, %v2077
    %v2736 = vpack.c.b16 %v2080, %v2078
    %v2737 = vpack.c.b16 %v2083, %v2081
    %v2738 = vpack.c.b16 %v2084, %v2082
    %v2739 = vpack.c.b16 %v2087, %v2085
    %v2740 = vpack.c.b16 %v2088, %v2086
    %v2741 = vpack.c.b16 %v2091, %v2089
    %v2742 = vpack.c.b16 %v2092, %v2090
    %v2743 = vpack.c.b16 %v2095, %v2093
    %v2744 = vpack.c.b16 %v2096, %v2094
    %v2745 = vpack.c.b16 %v2099, %v2097
    %v2746 = vpack.c.b16 %v2100, %v2098
    %v2747 = vpack.c.b16 %v2103, %v2101
    %v2748 = vpack.c.b16 %v2104, %v2102
    %v2749 = vpack.c.b16 %v2107, %v2105
    %v2750 = vpack.c.b16 %v2108, %v2106
    %v2751 = vpack.c.b16 %v2111, %v2109
    %v2752 = vpack.c.b16 %v2112, %v2110
    %v2753 = vpack.c.b16 %v2115, %v2113
    %v2754 = vpack.c.b16 %v2116, %v2114
    %v2755 = vpack.c.b16 %v2119, %v2117
    %v2756 = vpack.c.b16 %v2120, %v2118
    %v2757 = vpack.c.b16 %v2123, %v2121
    %v2758 = vpack.c.b16 %v2124, %v2122
    %v2759 = vpack.c.b16 %v2127, %v2125
    %v2760 = vpack.c.b16 %v2128, %v2126
    %v2761 = vpack.c.b16 %v2131, %v2129
    %v2762 = vpack.c.b16 %v2132, %v2130
    %v2763 = vpack.c.b16 %v2135, %v2133
    %v2764 = vpack.c.b16 %v2136, %v2134
    %v2765 = vpack.c.b16 %v2139, %v2137
    %v2766 = vpack.c.b16 %v2140, %v2138
    %v2767 = vpack.c.b16 %v2143, %v2141
    %v2768 = vpack.c.b16 %v2144, %v2142
    %v2769 = vpack.c.b16 %v2147, %v2145
    %v2770 = vpack.c.b16 %v2148, %v2146
    %v2771 = vpack.c.b16 %v2151, %v2149
    %v2772 = vpack.c.b16 %v2152, %v2150
    %v2773 = vpack.c.b16 %v2155, %v2153
    %v2774 = vpack.c.b16 %v2156, %v2154
    %v2775 = vpack.c.b16 %v2159, %v2157
    %v2776 = vpack.c.b16 %v2160, %v2158
    %v2777 = vpack.c.b16 %v2163, %v2161
    %v2778 = vpack.c.b16 %v2164, %v2162
    %v2779 = vpack.c.b16 %v2167, %v2165
    %v2780 = vpack.c.b16 %v2168, %v2166
    %v2781 = vpack.c.b16 %v2171, %v2169
    %v2782 = vpack.c.b16 %v2172, %v2170
    %v2783 = vpack.c.b16 %v2175, %v2173
    %v2784 = vpack.c.b16 %v2176, %v2174
    %v2785 = vpack.c.b16 %v2179, %v2177
    %v2786 = vpack.c.b16 %v2180, %v2178
    %v2787 = vpack.c.b16 %v2183, %v2181
    %v2788 = vpack.c.b16 %v2184, %v2182
    %v2789 = vpack.c.b16 %v2187, %v2185
    %v2790 = vpack.c.b16 %v2188, %v2186
    %v2791 = vpack.c.b16 %v2191, %v2189
    %v2792 = vpack.c.b16 %v2192, %v2190
    %v2793 = vpack.c.b16 %v2195, %v2193
    %v2794 = vpack.c.b16 %v2196, %v2194
    %v2795 = vpack.c.b16 %v2199, %v2197
    %v2796 = vpack.c.b16 %v2200, %v2198
    %v2797 = vpack.c.b16 %v2203, %v2201
    %v2798 = vpack.c.b16 %v2204, %v2202
    %v2799 = vpack.c.b16 %v2207, %v2205
    %v2800 = vpack.c.b16 %v2208, %v2206
    %v2801 = vpack.c.b16 %v2211, %v2209
    %v2802 = vpack.c.b16 %v2212, %v2210
    %v2803 = vpack.c.b16 %v2215, %v2213
    %v2804 = vpack.c.b16 %v2216, %v2214
    %v2805 = vpack.c.b16 %v2219, %v2217
    %v2806 = vpack.c.b16 %v2220, %v2218
    %v2807 = vpack.c.b16 %v2223, %v2221
    %v2808 = vpack.c.b16 %v2224, %v2222
    %v2809 = vpack.c.b16 %v2227, %v2225
    %v2810 = vpack.c.b16 %v2228, %v2226
    %v2811 = vpack.c.b16 %v2231, %v2229
    %v2812 = vpack.c.b16 %v2232, %v2230
    %v2813 = vpack.c.b16 %v2235, %v2233
    %v2814 = vpack.c.b16 %v2236, %v2234
    %v2815 = vpack.c.b16 %v2239, %v2237
    %v2816 = vpack.c.b16 %v2240, %v2238
    %v2817 = vpack.c.b16 %v2243, %v2241
    %v2818 = vpack.c.b16 %v2244, %v2242
    %v2819 = vpack.c.b16 %v2247, %v2245
    %v2820 = vpack.c.b16 %v2248, %v2246
    %v2821 = vpack.c.b16 %v2251, %v2249
    %v2822 = vpack.c.b16 %v2252, %v2250
    %v2823 = vpack.c.b16 %v2255, %v2253
    %v2824 = vpack.c.b16 %v2256, %v2254
    %v2825 = vpack.c.b16 %v2259, %v2257
    %v2826 = vpack.c.b16 %v2260, %v2258
    %v2827 = vpack.c.b16 %v2263, %v2261
    %v2828 = vpack.c.b16 %v2264, %v2262
    %v2829 = vpack.c.b16 %v2267, %v2265
    %v2830 = vpack.c.b16 %v2268, %v2266
    %v2831 = vpack.c.b16 %v2271, %v2269
    %v2832 = vpack.c.b16 %v2272, %v2270
    %v2833 = vpack.c.b16 %v2275, %v2273
    %v2834 = vpack.c.b16 %v2276, %v2274
    %v2835 = vpack.c.b16 %v2279, %v2277
    %v2836 = vpack.c.b16 %v2280, %v2278
    %v2837 = vpack.c.b16 %v2283, %v2281
    %v2838 = vpack.c.b16 %v2284, %v2282
    %v2839 = vpack.c.b16 %v2287, %v2285
    %v2840 = vpack.c.b16 %v2288, %v2286
    %v2841 = vpack.c.b16 %v2291, %v2289
    %v2842 = vpack.c.b16 %v2292, %v2290
    %v2843 = vpack.c.b16 %v2295, %v2293
    %v2844 = vpack.c.b16 %v2296, %v2294
    %v2845 = vpack.c.b16 %v2299, %v2297
    %v2846 = vpack.c.b16 %v2300, %v2298
    %v2847 = vpack.c.b16 %v2303, %v2301
    %v2848 = vpack.c.b16 %v2304, %v2302
    %v2849 = vpack.c.b16 %v2307, %v2305
    %v2850 = vpack.c.b16 %v2308, %v2306
    %v2851 = vpack.c.b16 %v2311, %v2309
    %v2852 = vpack.c.b16 %v2312, %v2310
    %v2853 = vpack.c.b16 %v2315, %v2313
    %v2854 = vpack.c.b16 %v2316, %v2314
    %v2855 = vpack.c.b16 %v2319, %v2317
    %v2856 = vpack.c.b16 %v2320, %v2318
    %v2857 = vpack.c.b16 %v2323, %v2321
    %v2858 = vpack.c.b16 %v2324, %v2322
    %v2859 = vpack.c.b16 %v2327, %v2325
    %v2860 = vpack.c.b16 %v2328, %v2326
    %v2861 = vpack.c.b16 %v2331, %v2329
    %v2862 = vpack.c.b16 %v2332, %v2330
    %v2863 = vpack.c.b16 %v2335, %v2333
    %v2864 = vpack.c.b16 %v2336, %v2334
    %v2865 = vpack.c.b16 %v2339, %v2337
    %v2866 = vpack.c.b16 %v2340, %v2338
    %v2867 = vpack.c.b16 %v2343, %v2341
    %v2868 = vpack.c.b16 %v2344, %v2342
    %v2869 = vpack.c.b16 %v2347, %v2345
    %v2870 = vpack.c.b16 %v2348, %v2346
    %v2871 = vpack.c.b16 %v2351, %v2349
    %v2872 = vpack.c.b16 %v2352, %v2350
    %v2873 = vpack.c.b16 %v2355, %v2353
    %v2874 = vpack.c.b16 %v2356, %v2354
    %v2875 = vpack.c.b16 %v2359, %v2357
    %v2876 = vpack.c.b16 %v2360, %v2358
    %v2877 = vpack.c.b16 %v2363, %v2361
    %v2878 = vpack.c.b16 %v2364, %v2362
    %v2879 = vpack.c.b16 %v2367, %v2365
    %v2880 = vpack.c.b16 %v2368, %v2366
    %3393 = vmatprep.subr.bf16.mxu0 %v2370
    %3394 = vmatpush1.bf16.msra.mxu0 %v2369
    %3395 = vmatprep.subr.bf16.mxu0 %v2372
    %3396 = vmatpush1.bf16.msra.mxu0 %v2371
    %3397 = vmatprep.subr.bf16.mxu0 %v2374
    %3398 = vmatpush1.bf16.msra.mxu0 %v2373
    %3399 = vmatprep.subr.bf16.mxu0 %v2376
    %3400 = vmatpush1.bf16.msra.mxu0 %v2375
    %3401 = vmatprep.subr.bf16.mxu0 %v2378
    %3402 = vmatpush1.bf16.msra.mxu0 %v2377
    %3403 = vmatprep.subr.bf16.mxu0 %v2380
    %3404 = vmatpush1.bf16.msra.mxu0 %v2379
    %3405 = vmatprep.subr.bf16.mxu0 %v2382
    %3406 = vmatpush1.bf16.msra.mxu0 %v2381
    %3407 = vmatprep.subr.bf16.mxu0 %v2384
    %3408 = vmatpush1.bf16.msra.mxu0 %v2383
    %3409 = vmatprep.subr.bf16.mxu0 %v2386
    %3410 = vmatpush1.bf16.msra.mxu0 %v2385
    %3411 = vmatprep.subr.bf16.mxu0 %v2388
    %3412 = vmatpush1.bf16.msra.mxu0 %v2387
    %3413 = vmatprep.subr.bf16.mxu0 %v2390
    %3414 = vmatpush1.bf16.msra.mxu0 %v2389
    %3415 = vmatprep.subr.bf16.mxu0 %v2392
    %3416 = vmatpush1.bf16.msra.mxu0 %v2391
    %3417 = vmatprep.subr.bf16.mxu0 %v2394
    %3418 = vmatpush1.bf16.msra.mxu0 %v2393
    %3419 = vmatprep.subr.bf16.mxu0 %v2396
    %3420 = vmatpush1.bf16.msra.mxu0 %v2395
    %3421 = vmatprep.subr.bf16.mxu0 %v2398
    %3422 = vmatpush1.bf16.msra.mxu0 %v2397
    %3423 = vmatprep.subr.bf16.mxu0 %v2400
    %3424 = vmatpush1.bf16.msra.mxu0 %v2399
    %3425 = vmatprep.mubr.bf16.mxu0 %v642
    %3426 = vmatmul.mubr.bf16.gmra.mrb[0].mxu0 %v628
    %v3427 = vpop.f32.mrb[0].mxu0
    %v3428 = vadd.f32 %v594, %v3427
    %v3429 = vpop.f32.mrb[0].mxu0
    %v3430 = vadd.f32 %v598, %v3429
    %v3431 = vpop.f32.mrb[0].mxu0
    %v3432 = vpop.f32.mrb[0].mxu0
    %3433 = vdwg.mxu0
    %3434 = vmatprep.subr.bf16.mxu0 %v2402
    %3435 = vmatpush1.bf16.msra.mxu0 %v2401
    %3436 = vmatprep.subr.bf16.mxu0 %v2404
    %3437 = vmatpush1.bf16.msra.mxu0 %v2403
    %3438 = vmatprep.subr.bf16.mxu0 %v2406
    %3439 = vmatpush1.bf16.msra.mxu0 %v2405
    %3440 = vmatprep.subr.bf16.mxu0 %v2408
    %3441 = vmatpush1.bf16.msra.mxu0 %v2407
    %3442 = vmatprep.subr.bf16.mxu0 %v2410
    %3443 = vmatpush1.bf16.msra.mxu0 %v2409
    %3444 = vmatprep.subr.bf16.mxu0 %v2412
    %3445 = vmatpush1.bf16.msra.mxu0 %v2411
    %3446 = vmatprep.subr.bf16.mxu0 %v2414
    %3447 = vmatpush1.bf16.msra.mxu0 %v2413
    %3448 = vmatprep.subr.bf16.mxu0 %v2416
    %3449 = vmatpush1.bf16.msra.mxu0 %v2415
    %3450 = vmatprep.subr.bf16.mxu0 %v2418
    %3451 = vmatpush1.bf16.msra.mxu0 %v2417
    %3452 = vmatprep.subr.bf16.mxu0 %v2420
    %3453 = vmatpush1.bf16.msra.mxu0 %v2419
    %3454 = vmatprep.subr.bf16.mxu0 %v2422
    %3455 = vmatpush1.bf16.msra.mxu0 %v2421
    %3456 = vmatprep.subr.bf16.mxu0 %v2424
    %3457 = vmatpush1.bf16.msra.mxu0 %v2423
    %3458 = vmatprep.subr.bf16.mxu0 %v2426
    %3459 = vmatpush1.bf16.msra.mxu0 %v2425
    %3460 = vmatprep.subr.bf16.mxu0 %v2428
    %3461 = vmatpush1.bf16.msra.mxu0 %v2427
    %3462 = vmatprep.subr.bf16.mxu0 %v2430
    %3463 = vmatpush1.bf16.msra.mxu0 %v2429
    %3464 = vmatprep.subr.bf16.mxu0 %v2432
    %3465 = vmatpush1.bf16.msra.mxu0 %v2431
    %3466 = vmatprep.mubr.bf16.mxu0 %v652
    %3467 = vmatmul.mubr.bf16.gmra.mrb[0].mxu0 %v650
    %v3468 = vpop.f32.mrb[0].mxu0
    %v3469 = vadd.f32 %v3428, %v3468
    %v3470 = vpop.f32.mrb[0].mxu0
    %v3471 = vadd.f32 %v3430, %v3470
    %v3472 = vpop.f32.mrb[0].mxu0
    %v3473 = vpop.f32.mrb[0].mxu0
    %3474 = vdwg.mxu0
    %3475 = vmatprep.subr.bf16.mxu0 %v2434
    %3476 = vmatpush1.bf16.msra.mxu0 %v2433
    %3477 = vmatprep.subr.bf16.mxu0 %v2436
    %3478 = vmatpush1.bf16.msra.mxu0 %v2435
    %3479 = vmatprep.subr.bf16.mxu0 %v2438
    %3480 = vmatpush1.bf16.msra.mxu0 %v2437
    %3481 = vmatprep.subr.bf16.mxu0 %v2440
    %3482 = vmatpush1.bf16.msra.mxu0 %v2439
    %3483 = vmatprep.subr.bf16.mxu0 %v2442
    %3484 = vmatpush1.bf16.msra.mxu0 %v2441
    %3485 = vmatprep.subr.bf16.mxu0 %v2444
    %3486 = vmatpush1.bf16.msra.mxu0 %v2443
    %3487 = vmatprep.subr.bf16.mxu0 %v2446
    %3488 = vmatpush1.bf16.msra.mxu0 %v2445
    %3489 = vmatprep.subr.bf16.mxu0 %v2448
    %3490 = vmatpush1.bf16.msra.mxu0 %v2447
    %3491 = vmatprep.subr.bf16.mxu0 %v2450
    %3492 = vmatpush1.bf16.msra.mxu0 %v2449
    %3493 = vmatprep.subr.bf16.mxu0 %v2452
    %3494 = vmatpush1.bf16.msra.mxu0 %v2451
    %3495 = vmatprep.subr.bf16.mxu0 %v2454
    %3496 = vmatpush1.bf16.msra.mxu0 %v2453
    %3497 = vmatprep.subr.bf16.mxu0 %v2456
    %3498 = vmatpush1.bf16.msra.mxu0 %v2455
    %3499 = vmatprep.subr.bf16.mxu0 %v2458
    %3500 = vmatpush1.bf16.msra.mxu0 %v2457
    %3501 = vmatprep.subr.bf16.mxu0 %v2460
    %3502 = vmatpush1.bf16.msra.mxu0 %v2459
    %3503 = vmatprep.subr.bf16.mxu0 %v2462
    %3504 = vmatpush1.bf16.msra.mxu0 %v2461
    %3505 = vmatprep.subr.bf16.mxu0 %v2464
    %3506 = vmatpush1.bf16.msra.mxu0 %v2463
    %3507 = vmatprep.mubr.bf16.mxu0 %v649
    %3508 = vmatmul.mubr.bf16.gmra.mrb[0].mxu0 %v635
    %v3509 = vpop.f32.mrb[0].mxu0
    %v3510 = vadd.f32 %v3469, %v3509
    %v3511 = vpop.f32.mrb[0].mxu0
    %v3512 = vadd.f32 %v3471, %v3511
    %v3513 = vpop.f32.mrb[0].mxu0
    %v3514 = vpop.f32.mrb[0].mxu0
    %3515 = vdwg.mxu0
    %3516 = vmatprep.subr.bf16.mxu0 %v2466
    %3517 = vmatpush1.bf16.msra.mxu0 %v2465
    %3518 = vmatprep.subr.bf16.mxu0 %v2468
    %3519 = vmatpush1.bf16.msra.mxu0 %v2467
    %3520 = vmatprep.subr.bf16.mxu0 %v2470
    %3521 = vmatpush1.bf16.msra.mxu0 %v2469
    %3522 = vmatprep.subr.bf16.mxu0 %v2472
    %3523 = vmatpush1.bf16.msra.mxu0 %v2471
    %3524 = vmatprep.subr.bf16.mxu0 %v2474
    %3525 = vmatpush1.bf16.msra.mxu0 %v2473
    %3526 = vmatprep.subr.bf16.mxu0 %v2476
    %3527 = vmatpush1.bf16.msra.mxu0 %v2475
    %3528 = vmatprep.subr.bf16.mxu0 %v2478
    %3529 = vmatpush1.bf16.msra.mxu0 %v2477
    %3530 = vmatprep.subr.bf16.mxu0 %v2480
    %3531 = vmatpush1.bf16.msra.mxu0 %v2479
    %3532 = vmatprep.subr.bf16.mxu0 %v2482
    %3533 = vmatpush1.bf16.msra.mxu0 %v2481
    %3534 = vmatprep.subr.bf16.mxu0 %v2484
    %3535 = vmatpush1.bf16.msra.mxu0 %v2483
    %3536 = vmatprep.subr.bf16.mxu0 %v2486
    %3537 = vmatpush1.bf16.msra.mxu0 %v2485
    %3538 = vmatprep.subr.bf16.mxu0 %v2488
    %3539 = vmatpush1.bf16.msra.mxu0 %v2487
    %3540 = vmatprep.subr.bf16.mxu0 %v2490
    %3541 = vmatpush1.bf16.msra.mxu0 %v2489
    %3542 = vmatprep.subr.bf16.mxu0 %v2492
    %3543 = vmatpush1.bf16.msra.mxu0 %v2491
    %3544 = vmatprep.subr.bf16.mxu0 %v2494
    %3545 = vmatpush1.bf16.msra.mxu0 %v2493
    %3546 = vmatprep.subr.bf16.mxu0 %v2496
    %3547 = vmatpush1.bf16.msra.mxu0 %v2495
    %3548 = vmatprep.mubr.bf16.mxu0 %v653
    %3549 = vmatmul.mubr.bf16.gmra.mrb[0].mxu0 %v651
    %v3550 = vpop.f32.mrb[0].mxu0
    %v3551 = vadd.f32 %v3510, %v3550
    %v3552 = vpop.f32.mrb[0].mxu0
    %v3553 = vadd.f32 %v3512, %v3552
    %v3554 = vpop.f32.mrb[0].mxu0
    %v3555 = vpop.f32.mrb[0].mxu0
    %3556 = vdwg.mxu0
    %3557 = vmatprep.subr.bf16.mxu0 %v2498
    %3558 = vmatpush1.bf16.msra.mxu0 %v2497
    %3559 = vmatprep.subr.bf16.mxu0 %v2500
    %3560 = vmatpush1.bf16.msra.mxu0 %v2499
    %3561 = vmatprep.subr.bf16.mxu0 %v2502
    %3562 = vmatpush1.bf16.msra.mxu0 %v2501
    %3563 = vmatprep.subr.bf16.mxu0 %v2504
    %3564 = vmatpush1.bf16.msra.mxu0 %v2503
    %3565 = vmatprep.subr.bf16.mxu0 %v2506
    %3566 = vmatpush1.bf16.msra.mxu0 %v2505
    %3567 = vmatprep.subr.bf16.mxu0 %v2508
    %3568 = vmatpush1.bf16.msra.mxu0 %v2507
    %3569 = vmatprep.subr.bf16.mxu0 %v2510
    %3570 = vmatpush1.bf16.msra.mxu0 %v2509
    %3571 = vmatprep.subr.bf16.mxu0 %v2512
    %3572 = vmatpush1.bf16.msra.mxu0 %v2511
    %3573 = vmatprep.subr.bf16.mxu0 %v2514
    %3574 = vmatpush1.bf16.msra.mxu0 %v2513
    %3575 = vmatprep.subr.bf16.mxu0 %v2516
    %3576 = vmatpush1.bf16.msra.mxu0 %v2515
    %3577 = vmatprep.subr.bf16.mxu0 %v2518
    %3578 = vmatpush1.bf16.msra.mxu0 %v2517
    %3579 = vmatprep.subr.bf16.mxu0 %v2520
    %3580 = vmatpush1.bf16.msra.mxu0 %v2519
    %3581 = vmatprep.subr.bf16.mxu0 %v2522
    %3582 = vmatpush1.bf16.msra.mxu0 %v2521
    %3583 = vmatprep.subr.bf16.mxu0 %v2524
    %3584 = vmatpush1.bf16.msra.mxu0 %v2523
    %3585 = vmatprep.subr.bf16.mxu0 %v2526
    %3586 = vmatpush1.bf16.msra.mxu0 %v2525
    %3587 = vmatprep.subr.bf16.mxu0 %v2528
    %3588 = vmatpush1.bf16.msra.mxu0 %v2527
    %3589 = vmatprep.mubr.bf16.mxu0 %v691
    %3590 = vmatmul.mubr.bf16.gmra.mrb[0].mxu0 %v677
    %v3591 = vpop.f32.mrb[0].mxu0
    %v3592 = vadd.f32 %v3551, %v3591
    %v3593 = vpop.f32.mrb[0].mxu0
    %v3594 = vadd.f32 %v3553, %v3593
    %v3595 = vpop.f32.mrb[0].mxu0
    %v3596 = vpop.f32.mrb[0].mxu0
    %3597 = vdwg.mxu0
    %3598 = vmatprep.subr.bf16.mxu0 %v2530
    %3599 = vmatpush1.bf16.msra.mxu0 %v2529
    %3600 = vmatprep.subr.bf16.mxu0 %v2532
    %3601 = vmatpush1.bf16.msra.mxu0 %v2531
    %3602 = vmatprep.subr.bf16.mxu0 %v2534
    %3603 = vmatpush1.bf16.msra.mxu0 %v2533
    %3604 = vmatprep.subr.bf16.mxu0 %v2536
    %3605 = vmatpush1.bf16.msra.mxu0 %v2535
    %3606 = vmatprep.subr.bf16.mxu0 %v2538
    %3607 = vmatpush1.bf16.msra.mxu0 %v2537
    %3608 = vmatprep.subr.bf16.mxu0 %v2540
    %3609 = vmatpush1.bf16.msra.mxu0 %v2539
    %3610 = vmatprep.subr.bf16.mxu0 %v2542
    %3611 = vmatpush1.bf16.msra.mxu0 %v2541
    %3612 = vmatprep.subr.bf16.mxu0 %v2544
    %3613 = vmatpush1.bf16.msra.mxu0 %v2543
    %3614 = vmatprep.subr.bf16.mxu0 %v2546
    %3615 = vmatpush1.bf16.msra.mxu0 %v2545
    %3616 = vmatprep.subr.bf16.mxu0 %v2548
    %3617 = vmatpush1.bf16.msra.mxu0 %v2547
    %3618 = vmatprep.subr.bf16.mxu0 %v2550
    %3619 = vmatpush1.bf16.msra.mxu0 %v2549
    %3620 = vmatprep.subr.bf16.mxu0 %v2552
    %3621 = vmatpush1.bf16.msra.mxu0 %v2551
    %3622 = vmatprep.subr.bf16.mxu0 %v2554
    %3623 = vmatpush1.bf16.msra.mxu0 %v2553
    %3624 = vmatprep.subr.bf16.mxu0 %v2556
    %3625 = vmatpush1.bf16.msra.mxu0 %v2555
    %3626 = vmatprep.subr.bf16.mxu0 %v2558
    %3627 = vmatpush1.bf16.msra.mxu0 %v2557
    %3628 = vmatprep.subr.bf16.mxu0 %v2560
    %3629 = vmatpush1.bf16.msra.mxu0 %v2559
    %3630 = vmatprep.mubr.bf16.mxu0 %v701
    %3631 = vmatmul.mubr.bf16.gmra.mrb[0].mxu0 %v699
    %v3632 = vpop.f32.mrb[0].mxu0
    %v3633 = vadd.f32 %v3592, %v3632
    %v3634 = vpop.f32.mrb[0].mxu0
    %v3635 = vadd.f32 %v3594, %v3634
    %v3636 = vpop.f32.mrb[0].mxu0
    %v3637 = vpop.f32.mrb[0].mxu0
    %3638 = vdwg.mxu0
    %3639 = vmatprep.subr.bf16.mxu0 %v2562
    %3640 = vmatpush1.bf16.msra.mxu0 %v2561
    %3641 = vmatprep.subr.bf16.mxu0 %v2564
    %3642 = vmatpush1.bf16.msra.mxu0 %v2563
    %3643 = vmatprep.subr.bf16.mxu0 %v2566
    %3644 = vmatpush1.bf16.msra.mxu0 %v2565
    %3645 = vmatprep.subr.bf16.mxu0 %v2568
    %3646 = vmatpush1.bf16.msra.mxu0 %v2567
    %3647 = vmatprep.subr.bf16.mxu0 %v2570
    %3648 = vmatpush1.bf16.msra.mxu0 %v2569
    %3649 = vmatprep.subr.bf16.mxu0 %v2572
    %3650 = vmatpush1.bf16.msra.mxu0 %v2571
    %3651 = vmatprep.subr.bf16.mxu0 %v2574
    %3652 = vmatpush1.bf16.msra.mxu0 %v2573
    %3653 = vmatprep.subr.bf16.mxu0 %v2576
    %3654 = vmatpush1.bf16.msra.mxu0 %v2575
    %3655 = vmatprep.subr.bf16.mxu0 %v2578
    %3656 = vmatpush1.bf16.msra.mxu0 %v2577
    %3657 = vmatprep.subr.bf16.mxu0 %v2580
    %3658 = vmatpush1.bf16.msra.mxu0 %v2579
    %3659 = vmatprep.subr.bf16.mxu0 %v2582
    %3660 = vmatpush1.bf16.msra.mxu0 %v2581
    %3661 = vmatprep.subr.bf16.mxu0 %v2584
    %3662 = vmatpush1.bf16.msra.mxu0 %v2583
    %3663 = vmatprep.subr.bf16.mxu0 %v2586
    %3664 = vmatpush1.bf16.msra.mxu0 %v2585
    %3665 = vmatprep.subr.bf16.mxu0 %v2588
    %3666 = vmatpush1.bf16.msra.mxu0 %v2587
    %3667 = vmatprep.subr.bf16.mxu0 %v2590
    %3668 = vmatpush1.bf16.msra.mxu0 %v2589
    %3669 = vmatprep.subr.bf16.mxu0 %v2592
    %3670 = vmatpush1.bf16.msra.mxu0 %v2591
    %3671 = vmatprep.mubr.bf16.mxu0 %v698
    %3672 = vmatmul.mubr.bf16.gmra.mrb[0].mxu0 %v684
    %v3673 = vpop.f32.mrb[0].mxu0
    %v3674 = vadd.f32 %v3633, %v3673
    %v3675 = vpop.f32.mrb[0].mxu0
    %v3676 = vadd.f32 %v3635, %v3675
    %v3677 = vpop.f32.mrb[0].mxu0
    %v3678 = vpop.f32.mrb[0].mxu0
    %3679 = vdwg.mxu0
    %3680 = vmatprep.subr.bf16.mxu0 %v2594
    %3681 = vmatpush1.bf16.msra.mxu0 %v2593
    %3682 = vmatprep.subr.bf16.mxu0 %v2596
    %3683 = vmatpush1.bf16.msra.mxu0 %v2595
    %3684 = vmatprep.subr.bf16.mxu0 %v2598
    %3685 = vmatpush1.bf16.msra.mxu0 %v2597
    %3686 = vmatprep.subr.bf16.mxu0 %v2600
    %3687 = vmatpush1.bf16.msra.mxu0 %v2599
    %3688 = vmatprep.subr.bf16.mxu0 %v2602
    %3689 = vmatpush1.bf16.msra.mxu0 %v2601
    %3690 = vmatprep.subr.bf16.mxu0 %v2604
    %3691 = vmatpush1.bf16.msra.mxu0 %v2603
    %3692 = vmatprep.subr.bf16.mxu0 %v2606
    %3693 = vmatpush1.bf16.msra.mxu0 %v2605
    %3694 = vmatprep.subr.bf16.mxu0 %v2608
    %3695 = vmatpush1.bf16.msra.mxu0 %v2607
    %3696 = vmatprep.subr.bf16.mxu0 %v2610
    %3697 = vmatpush1.bf16.msra.mxu0 %v2609
    %3698 = vmatprep.subr.bf16.mxu0 %v2612
    %3699 = vmatpush1.bf16.msra.mxu0 %v2611
    %3700 = vmatprep.subr.bf16.mxu0 %v2614
    %3701 = vmatpush1.bf16.msra.mxu0 %v2613
    %3702 = vmatprep.subr.bf16.mxu0 %v2616
    %3703 = vmatpush1.bf16.msra.mxu0 %v2615
    %3704 = vmatprep.subr.bf16.mxu0 %v2618
    %3705 = vmatpush1.bf16.msra.mxu0 %v2617
    %3706 = vmatprep.subr.bf16.mxu0 %v2620
    %3707 = vmatpush1.bf16.msra.mxu0 %v2619
    %3708 = vmatprep.subr.bf16.mxu0 %v2622
    %3709 = vmatpush1.bf16.msra.mxu0 %v2621
    %3710 = vmatprep.subr.bf16.mxu0 %v2624
    %3711 = vmatpush1.bf16.msra.mxu0 %v2623
    %3712 = vmatprep.mubr.bf16.mxu0 %v702
    %3713 = vmatmul.mubr.bf16.gmra.mrb[0].mxu0 %v700
    %v3714 = vpop.f32.mrb[0].mxu0
    %v3715 = vadd.f32 %v3674, %v3714
    %v3716 = vpop.f32.mrb[0].mxu0
    %v3717 = vadd.f32 %v3676, %v3716
    %v3718 = vpop.f32.mrb[0].mxu0
    %v3719 = vpop.f32.mrb[0].mxu0
    %3720 = vdwg.mxu0
    %3721 = vmatprep.subr.bf16.mxu0 %v2626
    %3722 = vmatpush1.bf16.msra.mxu0 %v2625
    %3723 = vmatprep.subr.bf16.mxu0 %v2628
    %3724 = vmatpush1.bf16.msra.mxu0 %v2627
    %3725 = vmatprep.subr.bf16.mxu0 %v2630
    %3726 = vmatpush1.bf16.msra.mxu0 %v2629
    %3727 = vmatprep.subr.bf16.mxu0 %v2632
    %3728 = vmatpush1.bf16.msra.mxu0 %v2631
    %3729 = vmatprep.subr.bf16.mxu0 %v2634
    %3730 = vmatpush1.bf16.msra.mxu0 %v2633
    %3731 = vmatprep.subr.bf16.mxu0 %v2636
    %3732 = vmatpush1.bf16.msra.mxu0 %v2635
    %3733 = vmatprep.subr.bf16.mxu0 %v2638
    %3734 = vmatpush1.bf16.msra.mxu0 %v2637
    %3735 = vmatprep.subr.bf16.mxu0 %v2640
    %3736 = vmatpush1.bf16.msra.mxu0 %v2639
    %3737 = vmatprep.subr.bf16.mxu0 %v2642
    %3738 = vmatpush1.bf16.msra.mxu0 %v2641
    %3739 = vmatprep.subr.bf16.mxu0 %v2644
    %3740 = vmatpush1.bf16.msra.mxu0 %v2643
    %3741 = vmatprep.subr.bf16.mxu0 %v2646
    %3742 = vmatpush1.bf16.msra.mxu0 %v2645
    %3743 = vmatprep.subr.bf16.mxu0 %v2648
    %3744 = vmatpush1.bf16.msra.mxu0 %v2647
    %3745 = vmatprep.subr.bf16.mxu0 %v2650
    %3746 = vmatpush1.bf16.msra.mxu0 %v2649
    %3747 = vmatprep.subr.bf16.mxu0 %v2652
    %3748 = vmatpush1.bf16.msra.mxu0 %v2651
    %3749 = vmatprep.subr.bf16.mxu0 %v2654
    %3750 = vmatpush1.bf16.msra.mxu0 %v2653
    %3751 = vmatprep.subr.bf16.mxu0 %v2656
    %3752 = vmatpush1.bf16.msra.mxu0 %v2655
    %3753 = vmatprep.mubr.bf16.mxu0 %v740
    %3754 = vmatmul.mubr.bf16.gmra.mrb[0].mxu0 %v726
    %v3755 = vpop.f32.mrb[0].mxu0
    %v3756 = vadd.f32 %v3715, %v3755
    %v3757 = vpop.f32.mrb[0].mxu0
    %v3758 = vadd.f32 %v3717, %v3757
    %v3759 = vpop.f32.mrb[0].mxu0
    %v3760 = vpop.f32.mrb[0].mxu0
    %3761 = vdwg.mxu0
    %3762 = vmatprep.subr.bf16.mxu0 %v2658
    %3763 = vmatpush1.bf16.msra.mxu0 %v2657
    %3764 = vmatprep.subr.bf16.mxu0 %v2660
    %3765 = vmatpush1.bf16.msra.mxu0 %v2659
    %3766 = vmatprep.subr.bf16.mxu0 %v2662
    %3767 = vmatpush1.bf16.msra.mxu0 %v2661
    %3768 = vmatprep.subr.bf16.mxu0 %v2664
    %3769 = vmatpush1.bf16.msra.mxu0 %v2663
    %3770 = vmatprep.subr.bf16.mxu0 %v2666
    %3771 = vmatpush1.bf16.msra.mxu0 %v2665
    %3772 = vmatprep.subr.bf16.mxu0 %v2668
    %3773 = vmatpush1.bf16.msra.mxu0 %v2667
    %3774 = vmatprep.subr.bf16.mxu0 %v2670
    %3775 = vmatpush1.bf16.msra.mxu0 %v2669
    %3776 = vmatprep.subr.bf16.mxu0 %v2672
    %3777 = vmatpush1.bf16.msra.mxu0 %v2671
    %3778 = vmatprep.subr.bf16.mxu0 %v2674
    %3779 = vmatpush1.bf16.msra.mxu0 %v2673
    %3780 = vmatprep.subr.bf16.mxu0 %v2676
    %3781 = vmatpush1.bf16.msra.mxu0 %v2675
    %3782 = vmatprep.subr.bf16.mxu0 %v2678
    %3783 = vmatpush1.bf16.msra.mxu0 %v2677
    %3784 = vmatprep.subr.bf16.mxu0 %v2680
    %3785 = vmatpush1.bf16.msra.mxu0 %v2679
    %3786 = vmatprep.subr.bf16.mxu0 %v2682
    %3787 = vmatpush1.bf16.msra.mxu0 %v2681
    %3788 = vmatprep.subr.bf16.mxu0 %v2684
    %3789 = vmatpush1.bf16.msra.mxu0 %v2683
    %3790 = vmatprep.subr.bf16.mxu0 %v2686
    %3791 = vmatpush1.bf16.msra.mxu0 %v2685
    %3792 = vmatprep.subr.bf16.mxu0 %v2688
    %3793 = vmatpush1.bf16.msra.mxu0 %v2687
    %3794 = vmatprep.mubr.bf16.mxu0 %v750
    %3795 = vmatmul.mubr.bf16.gmra.mrb[0].mxu0 %v748
    %v3796 = vpop.f32.mrb[0].mxu0
    %v3797 = vadd.f32 %v3756, %v3796
    %v3798 = vpop.f32.mrb[0].mxu0
    %v3799 = vadd.f32 %v3758, %v3798
    %v3800 = vpop.f32.mrb[0].mxu0
    %v3801 = vpop.f32.mrb[0].mxu0
    %3802 = vdwg.mxu0
    %3803 = vmatprep.subr.bf16.mxu0 %v2690
    %3804 = vmatpush1.bf16.msra.mxu0 %v2689
    %3805 = vmatprep.subr.bf16.mxu0 %v2692
    %3806 = vmatpush1.bf16.msra.mxu0 %v2691
    %3807 = vmatprep.subr.bf16.mxu0 %v2694
    %3808 = vmatpush1.bf16.msra.mxu0 %v2693
    %3809 = vmatprep.subr.bf16.mxu0 %v2696
    %3810 = vmatpush1.bf16.msra.mxu0 %v2695
    %3811 = vmatprep.subr.bf16.mxu0 %v2698
    %3812 = vmatpush1.bf16.msra.mxu0 %v2697
    %3813 = vmatprep.subr.bf16.mxu0 %v2700
    %3814 = vmatpush1.bf16.msra.mxu0 %v2699
    %3815 = vmatprep.subr.bf16.mxu0 %v2702
    %3816 = vmatpush1.bf16.msra.mxu0 %v2701
    %3817 = vmatprep.subr.bf16.mxu0 %v2704
    %3818 = vmatpush1.bf16.msra.mxu0 %v2703
    %3819 = vmatprep.subr.bf16.mxu0 %v2706
    %3820 = vmatpush1.bf16.msra.mxu0 %v2705
    %3821 = vmatprep.subr.bf16.mxu0 %v2708
    %3822 = vmatpush1.bf16.msra.mxu0 %v2707
    %3823 = vmatprep.subr.bf16.mxu0 %v2710
    %3824 = vmatpush1.bf16.msra.mxu0 %v2709
    %3825 = vmatprep.subr.bf16.mxu0 %v2712
    %3826 = vmatpush1.bf16.msra.mxu0 %v2711
    %3827 = vmatprep.subr.bf16.mxu0 %v2714
    %3828 = vmatpush1.bf16.msra.mxu0 %v2713
    %3829 = vmatprep.subr.bf16.mxu0 %v2716
    %3830 = vmatpush1.bf16.msra.mxu0 %v2715
    %3831 = vmatprep.subr.bf16.mxu0 %v2718
    %3832 = vmatpush1.bf16.msra.mxu0 %v2717
    %3833 = vmatprep.subr.bf16.mxu0 %v2720
    %3834 = vmatpush1.bf16.msra.mxu0 %v2719
    %3835 = vmatprep.mubr.bf16.mxu0 %v747
    %3836 = vmatmul.mubr.bf16.gmra.mrb[0].mxu0 %v733
    %v3837 = vpop.f32.mrb[0].mxu0
    %v3838 = vadd.f32 %v3797, %v3837
    %v3839 = vpop.f32.mrb[0].mxu0
    %v3840 = vadd.f32 %v3799, %v3839
    %v3841 = vpop.f32.mrb[0].mxu0
    %v3842 = vpop.f32.mrb[0].mxu0
    %3843 = vdwg.mxu0
    %3844 = vmatprep.subr.bf16.mxu0 %v2722
    %3845 = vmatpush1.bf16.msra.mxu0 %v2721
    %3846 = vmatprep.subr.bf16.mxu0 %v2724
    %3847 = vmatpush1.bf16.msra.mxu0 %v2723
    %3848 = vmatprep.subr.bf16.mxu0 %v2726
    %3849 = vmatpush1.bf16.msra.mxu0 %v2725
    %3850 = vmatprep.subr.bf16.mxu0 %v2728
    %3851 = vmatpush1.bf16.msra.mxu0 %v2727
    %3852 = vmatprep.subr.bf16.mxu0 %v2730
    %3853 = vmatpush1.bf16.msra.mxu0 %v2729
    %3854 = vmatprep.subr.bf16.mxu0 %v2732
    %3855 = vmatpush1.bf16.msra.mxu0 %v2731
    %3856 = vmatprep.subr.bf16.mxu0 %v2734
    %3857 = vmatpush1.bf16.msra.mxu0 %v2733
    %3858 = vmatprep.subr.bf16.mxu0 %v2736
    %3859 = vmatpush1.bf16.msra.mxu0 %v2735
    %3860 = vmatprep.subr.bf16.mxu0 %v2738
    %3861 = vmatpush1.bf16.msra.mxu0 %v2737
    %3862 = vmatprep.subr.bf16.mxu0 %v2740
    %3863 = vmatpush1.bf16.msra.mxu0 %v2739
    %3864 = vmatprep.subr.bf16.mxu0 %v2742
    %3865 = vmatpush1.bf16.msra.mxu0 %v2741
    %3866 = vmatprep.subr.bf16.mxu0 %v2744
    %3867 = vmatpush1.bf16.msra.mxu0 %v2743
    %3868 = vmatprep.subr.bf16.mxu0 %v2746
    %3869 = vmatpush1.bf16.msra.mxu0 %v2745
    %3870 = vmatprep.subr.bf16.mxu0 %v2748
    %3871 = vmatpush1.bf16.msra.mxu0 %v2747
    %3872 = vmatprep.subr.bf16.mxu0 %v2750
    %3873 = vmatpush1.bf16.msra.mxu0 %v2749
    %3874 = vmatprep.subr.bf16.mxu0 %v2752
    %3875 = vmatpush1.bf16.msra.mxu0 %v2751
    %3876 = vmatprep.mubr.bf16.mxu0 %v751
    %3877 = vmatmul.mubr.bf16.gmra.mrb[0].mxu0 %v749
    %v3878 = vpop.f32.mrb[0].mxu0
    %v3879 = vadd.f32 %v3838, %v3878
    %v3880 = vpop.f32.mrb[0].mxu0
    %v3881 = vadd.f32 %v3840, %v3880
    %v3882 = vpop.f32.mrb[0].mxu0
    %v3883 = vpop.f32.mrb[0].mxu0
    %3884 = vdwg.mxu0
    %3885 = vmatprep.subr.bf16.mxu0 %v2754
    %3886 = vmatpush1.bf16.msra.mxu0 %v2753
    %3887 = vmatprep.subr.bf16.mxu0 %v2756
    %3888 = vmatpush1.bf16.msra.mxu0 %v2755
    %3889 = vmatprep.subr.bf16.mxu0 %v2758
    %3890 = vmatpush1.bf16.msra.mxu0 %v2757
    %3891 = vmatprep.subr.bf16.mxu0 %v2760
    %3892 = vmatpush1.bf16.msra.mxu0 %v2759
    %3893 = vmatprep.subr.bf16.mxu0 %v2762
    %3894 = vmatpush1.bf16.msra.mxu0 %v2761
    %3895 = vmatprep.subr.bf16.mxu0 %v2764
    %3896 = vmatpush1.bf16.msra.mxu0 %v2763
    %3897 = vmatprep.subr.bf16.mxu0 %v2766
    %3898 = vmatpush1.bf16.msra.mxu0 %v2765
    %3899 = vmatprep.subr.bf16.mxu0 %v2768
    %3900 = vmatpush1.bf16.msra.mxu0 %v2767
    %3901 = vmatprep.subr.bf16.mxu0 %v2770
    %3902 = vmatpush1.bf16.msra.mxu0 %v2769
    %3903 = vmatprep.subr.bf16.mxu0 %v2772
    %3904 = vmatpush1.bf16.msra.mxu0 %v2771
    %3905 = vmatprep.subr.bf16.mxu0 %v2774
    %3906 = vmatpush1.bf16.msra.mxu0 %v2773
    %3907 = vmatprep.subr.bf16.mxu0 %v2776
    %3908 = vmatpush1.bf16.msra.mxu0 %v2775
    %3909 = vmatprep.subr.bf16.mxu0 %v2778
    %3910 = vmatpush1.bf16.msra.mxu0 %v2777
    %3911 = vmatprep.subr.bf16.mxu0 %v2780
    %3912 = vmatpush1.bf16.msra.mxu0 %v2779
    %3913 = vmatprep.subr.bf16.mxu0 %v2782
    %3914 = vmatpush1.bf16.msra.mxu0 %v2781
    %3915 = vmatprep.subr.bf16.mxu0 %v2784
    %3916 = vmatpush1.bf16.msra.mxu0 %v2783
    %3917 = vmatprep.mubr.bf16.mxu0 %v789
    %3918 = vmatmul.mubr.bf16.gmra.mrb[0].mxu0 %v775
    %v3919 = vpop.f32.mrb[0].mxu0
    %v3920 = vadd.f32 %v3879, %v3919
    %v3921 = vpop.f32.mrb[0].mxu0
    %v3922 = vadd.f32 %v3881, %v3921
    %v3923 = vpop.f32.mrb[0].mxu0
    %v3924 = vpop.f32.mrb[0].mxu0
    %3925 = vdwg.mxu0
    %3926 = vmatprep.subr.bf16.mxu0 %v2786
    %3927 = vmatpush1.bf16.msra.mxu0 %v2785
    %3928 = vmatprep.subr.bf16.mxu0 %v2788
    %3929 = vmatpush1.bf16.msra.mxu0 %v2787
    %3930 = vmatprep.subr.bf16.mxu0 %v2790
    %3931 = vmatpush1.bf16.msra.mxu0 %v2789
    %3932 = vmatprep.subr.bf16.mxu0 %v2792
    %3933 = vmatpush1.bf16.msra.mxu0 %v2791
    %3934 = vmatprep.subr.bf16.mxu0 %v2794
    %3935 = vmatpush1.bf16.msra.mxu0 %v2793
    %3936 = vmatprep.subr.bf16.mxu0 %v2796
    %3937 = vmatpush1.bf16.msra.mxu0 %v2795
    %3938 = vmatprep.subr.bf16.mxu0 %v2798
    %3939 = vmatpush1.bf16.msra.mxu0 %v2797
    %3940 = vmatprep.subr.bf16.mxu0 %v2800
    %3941 = vmatpush1.bf16.msra.mxu0 %v2799
    %3942 = vmatprep.subr.bf16.mxu0 %v2802
    %3943 = vmatpush1.bf16.msra.mxu0 %v2801
    %3944 = vmatprep.subr.bf16.mxu0 %v2804
    %3945 = vmatpush1.bf16.msra.mxu0 %v2803
    %3946 = vmatprep.subr.bf16.mxu0 %v2806
    %3947 = vmatpush1.bf16.msra.mxu0 %v2805
    %3948 = vmatprep.subr.bf16.mxu0 %v2808
    %3949 = vmatpush1.bf16.msra.mxu0 %v2807
    %3950 = vmatprep.subr.bf16.mxu0 %v2810
    %3951 = vmatpush1.bf16.msra.mxu0 %v2809
    %3952 = vmatprep.subr.bf16.mxu0 %v2812
    %3953 = vmatpush1.bf16.msra.mxu0 %v2811
    %3954 = vmatprep.subr.bf16.mxu0 %v2814
    %3955 = vmatpush1.bf16.msra.mxu0 %v2813
    %3956 = vmatprep.subr.bf16.mxu0 %v2816
    %3957 = vmatpush1.bf16.msra.mxu0 %v2815
    %3958 = vmatprep.mubr.bf16.mxu0 %v799
    %3959 = vmatmul.mubr.bf16.gmra.mrb[0].mxu0 %v797
    %v3960 = vpop.f32.mrb[0].mxu0
    %v3961 = vadd.f32 %v3920, %v3960
    %v3962 = vpop.f32.mrb[0].mxu0
    %v3963 = vadd.f32 %v3922, %v3962
    %v3964 = vpop.f32.mrb[0].mxu0
    %v3965 = vpop.f32.mrb[0].mxu0
    %3966 = vdwg.mxu0
    %3967 = vmatprep.subr.bf16.mxu0 %v2818
    %3968 = vmatpush1.bf16.msra.mxu0 %v2817
    %3969 = vmatprep.subr.bf16.mxu0 %v2820
    %3970 = vmatpush1.bf16.msra.mxu0 %v2819
    %3971 = vmatprep.subr.bf16.mxu0 %v2822
    %3972 = vmatpush1.bf16.msra.mxu0 %v2821
    %3973 = vmatprep.subr.bf16.mxu0 %v2824
    %3974 = vmatpush1.bf16.msra.mxu0 %v2823
    %3975 = vmatprep.subr.bf16.mxu0 %v2826
    %3976 = vmatpush1.bf16.msra.mxu0 %v2825
    %3977 = vmatprep.subr.bf16.mxu0 %v2828
    %3978 = vmatpush1.bf16.msra.mxu0 %v2827
    %3979 = vmatprep.subr.bf16.mxu0 %v2830
    %3980 = vmatpush1.bf16.msra.mxu0 %v2829
    %3981 = vmatprep.subr.bf16.mxu0 %v2832
    %3982 = vmatpush1.bf16.msra.mxu0 %v2831
    %3983 = vmatprep.subr.bf16.mxu0 %v2834
    %3984 = vmatpush1.bf16.msra.mxu0 %v2833
    %3985 = vmatprep.subr.bf16.mxu0 %v2836
    %3986 = vmatpush1.bf16.msra.mxu0 %v2835
    %3987 = vmatprep.subr.bf16.mxu0 %v2838
    %3988 = vmatpush1.bf16.msra.mxu0 %v2837
    %3989 = vmatprep.subr.bf16.mxu0 %v2840
    %3990 = vmatpush1.bf16.msra.mxu0 %v2839
    %3991 = vmatprep.subr.bf16.mxu0 %v2842
    %3992 = vmatpush1.bf16.msra.mxu0 %v2841
    %3993 = vmatprep.subr.bf16.mxu0 %v2844
    %3994 = vmatpush1.bf16.msra.mxu0 %v2843
    %3995 = vmatprep.subr.bf16.mxu0 %v2846
    %3996 = vmatpush1.bf16.msra.mxu0 %v2845
    %3997 = vmatprep.subr.bf16.mxu0 %v2848
    %3998 = vmatpush1.bf16.msra.mxu0 %v2847
    %3999 = vmatprep.mubr.bf16.mxu0 %v796
    %4000 = vmatmul.mubr.bf16.gmra.mrb[0].mxu0 %v782
    %v4001 = vpop.f32.mrb[0].mxu0
    %v4002 = vadd.f32 %v3961, %v4001
    %v4003 = vpop.f32.mrb[0].mxu0
    %v4004 = vadd.f32 %v3963, %v4003
    %v4005 = vpop.f32.mrb[0].mxu0
    %v4006 = vpop.f32.mrb[0].mxu0
    %4007 = vdwg.mxu0
    %4008 = vmatprep.subr.bf16.mxu0 %v2850
    %4009 = vmatpush1.bf16.msra.mxu0 %v2849
    %4010 = vmatprep.subr.bf16.mxu0 %v2852
    %4011 = vmatpush1.bf16.msra.mxu0 %v2851
    %4012 = vmatprep.subr.bf16.mxu0 %v2854
    %4013 = vmatpush1.bf16.msra.mxu0 %v2853
    %4014 = vmatprep.subr.bf16.mxu0 %v2856
    %4015 = vmatpush1.bf16.msra.mxu0 %v2855
    %4016 = vmatprep.subr.bf16.mxu0 %v2858
    %4017 = vmatpush1.bf16.msra.mxu0 %v2857
    %4018 = vmatprep.subr.bf16.mxu0 %v2860
    %4019 = vmatpush1.bf16.msra.mxu0 %v2859
    %4020 = vmatprep.subr.bf16.mxu0 %v2862
    %4021 = vmatpush1.bf16.msra.mxu0 %v2861
    %4022 = vmatprep.subr.bf16.mxu0 %v2864
    %4023 = vmatpush1.bf16.msra.mxu0 %v2863
    %4024 = vmatprep.subr.bf16.mxu0 %v2866
    %4025 = vmatpush1.bf16.msra.mxu0 %v2865
    %4026 = vmatprep.subr.bf16.mxu0 %v2868
    %4027 = vmatpush1.bf16.msra.mxu0 %v2867
    %4028 = vmatprep.subr.bf16.mxu0 %v2870
    %4029 = vmatpush1.bf16.msra.mxu0 %v2869
    %4030 = vmatprep.subr.bf16.mxu0 %v2872
    %4031 = vmatpush1.bf16.msra.mxu0 %v2871
    %4032 = vmatprep.subr.bf16.mxu0 %v2874
    %4033 = vmatpush1.bf16.msra.mxu0 %v2873
    %4034 = vmatprep.subr.bf16.mxu0 %v2876
    %4035 = vmatpush1.bf16.msra.mxu0 %v2875
    %4036 = vmatprep.subr.bf16.mxu0 %v2878
    %4037 = vmatpush1.bf16.msra.mxu0 %v2877
    %4038 = vmatprep.subr.bf16.mxu0 %v2880
    %4039 = vmatpush1.bf16.msra.mxu0 %v2879
    %4040 = vmatprep.mubr.bf16.mxu0 %v800
    %4041 = vmatmul.mubr.bf16.gmra.mrb[0].mxu0 %v798
    %v4042 = vpop.f32.mrb[0].mxu0
    %v4043 = vadd.f32 %v4002, %v4042
    %v4044 = vpop.f32.mrb[0].mxu0
    %v4045 = vadd.f32 %v4004, %v4044
    %v4046 = vpop.f32.mrb[0].mxu0
    %v4047 = vpop.f32.mrb[0].mxu0
    %4048 = vdwg.mxu0
    %v4049 = vmax.f32 %v4043, 0.0
    %v4050 = vmax.f32 %v4045, 0.0
    %v4051 = vpack.c.bf16 %v4049, %v4049
    %v4052 = vpack.c.bf16 %v4050, %v4050
    %v4053 = vld [vmem:[#allocation7] sm:$0xf]
    %v4054 = vld [vmem:[#allocation7 + $0x4] sm:$0xf]
    %v4055 = vld [vmem:[#allocation7 + $0x8] sm:$0xf]
    %v4056 = vld [vmem:[#allocation7 + $0xc] sm:$0xf]
    %v4057 = vld [vmem:[#allocation7 + $0x10] sm:$0xf]
    %v4058 = vld [vmem:[#allocation7 + $0x14] sm:$0xf]
    %v4059 = vld [vmem:[#allocation7 + $0x18] sm:$0xf]
    %v4060 = vld [vmem:[#allocation7 + $0x1c] sm:$0xf]
    %v4061 = vld [vmem:[#allocation7 + $0x20] sm:$0xf]
    %v4062 = vld [vmem:[#allocation7 + $0x24] sm:$0xf]
    %v4063 = vld [vmem:[#allocation7 + $0x28] sm:$0xf]
    %v4064 = vld [vmem:[#allocation7 + $0x2c] sm:$0xf]
    %v4065 = vld [vmem:[#allocation7 + $0x30] sm:$0xf]
    %v4066 = vld [vmem:[#allocation7 + $0x34] sm:$0xf]
    %v4067 = vld [vmem:[#allocation7 + $0x38] sm:$0xf]
    %v4068 = vld [vmem:[#allocation7 + $0x3c] sm:$0xf]
    %v4069 = vld [vmem:[#allocation7 + $0x40] sm:$0xf]
    %v4070 = vld [vmem:[#allocation7 + $0x44] sm:$0xf]
    %v4071 = vld [vmem:[#allocation7 + $0x48] sm:$0xf]
    %v4072 = vld [vmem:[#allocation7 + $0x4c] sm:$0xf]
    %v4073 = vld [vmem:[#allocation7 + $0x50] sm:$0xf]
    %v4074 = vld [vmem:[#allocation7 + $0x54] sm:$0xf]
    %v4075 = vld [vmem:[#allocation7 + $0x58] sm:$0xf]
    %v4076 = vld [vmem:[#allocation7 + $0x5c] sm:$0xf]
    %v4077 = vld [vmem:[#allocation7 + $0x60] sm:$0xf]
    %v4078 = vld [vmem:[#allocation7 + $0x64] sm:$0xf]
    %v4079 = vld [vmem:[#allocation7 + $0x68] sm:$0xf]
    %v4080 = vld [vmem:[#allocation7 + $0x6c] sm:$0xf]
    %v4081 = vld [vmem:[#allocation7 + $0x70] sm:$0xf]
    %v4082 = vld [vmem:[#allocation7 + $0x74] sm:$0xf]
    %v4083 = vld [vmem:[#allocation7 + $0x78] sm:$0xf]
    %v4084 = vld [vmem:[#allocation7 + $0x7c] sm:$0xf]
    %v4085 = vld [vmem:[#allocation8] sm:$0x1]
    %v4087 = vlaneseq
    %v4088 = vshrl.u32 %v4087, 7
    %v4089 = vsub.s32 0, %v4088
    %v4090 = vrot.slane %v4085, %v4089
    %v4124 = vunpack.c.l.b16 %v4053
    %v4125 = vunpack.c.l.b16 %v4054
    %v4126 = vunpack.c.l.b16 %v4055
    %v4127 = vunpack.c.l.b16 %v4056
    %v4128 = vunpack.c.l.b16 %v4057
    %v4129 = vunpack.c.l.b16 %v4058
    %v4130 = vunpack.c.l.b16 %v4059
    %v4131 = vunpack.c.l.b16 %v4060
    %v4132 = vunpack.c.l.b16 %v4061
    %v4133 = vunpack.c.l.b16 %v4062
    %v4134 = vunpack.c.l.b16 %v4063
    %v4135 = vunpack.c.l.b16 %v4064
    %v4136 = vunpack.c.l.b16 %v4065
    %v4137 = vunpack.c.l.b16 %v4066
    %v4138 = vunpack.c.l.b16 %v4067
    %v4139 = vunpack.c.l.b16 %v4068
    %v4140 = vunpack.c.l.b16 %v4069
    %v4141 = vunpack.c.l.b16 %v4070
    %v4142 = vunpack.c.l.b16 %v4071
    %v4143 = vunpack.c.l.b16 %v4072
    %v4144 = vunpack.c.l.b16 %v4073
    %v4145 = vunpack.c.l.b16 %v4074
    %v4146 = vunpack.c.l.b16 %v4075
    %v4147 = vunpack.c.l.b16 %v4076
    %v4148 = vunpack.c.l.b16 %v4077
    %v4149 = vunpack.c.l.b16 %v4078
    %v4150 = vunpack.c.l.b16 %v4079
    %v4151 = vunpack.c.l.b16 %v4080
    %v4152 = vunpack.c.l.b16 %v4081
    %v4153 = vunpack.c.l.b16 %v4082
    %v4154 = vunpack.c.l.b16 %v4083
    %v4155 = vunpack.c.l.b16 %v4084
    %v4156 = vpack.c.b16 %v4125, %v4124
    %v4157 = vpack.c.b16 %v4127, %v4126
    %v4158 = vpack.c.b16 %v4129, %v4128
    %v4159 = vpack.c.b16 %v4131, %v4130
    %v4160 = vpack.c.b16 %v4133, %v4132
    %v4161 = vpack.c.b16 %v4135, %v4134
    %v4162 = vpack.c.b16 %v4137, %v4136
    %v4163 = vpack.c.b16 %v4139, %v4138
    %v4164 = vpack.c.b16 %v4141, %v4140
    %v4165 = vpack.c.b16 %v4143, %v4142
    %v4166 = vpack.c.b16 %v4145, %v4144
    %v4167 = vpack.c.b16 %v4147, %v4146
    %v4168 = vpack.c.b16 %v4149, %v4148
    %v4169 = vpack.c.b16 %v4151, %v4150
    %v4170 = vpack.c.b16 %v4153, %v4152
    %v4171 = vpack.c.b16 %v4155, %v4154
    %4188 = vmatprep.subr.bf16.mxu0 0
    %4189 = vmatpush1.bf16.msra.mxu0 %v4156
    %4190 = vmatprep.subr.bf16.mxu0 0
    %4191 = vmatpush1.bf16.msra.mxu0 %v4157
    %4192 = vmatprep.subr.bf16.mxu0 0
    %4193 = vmatpush1.bf16.msra.mxu0 %v4158
    %4194 = vmatprep.subr.bf16.mxu0 0
    %4195 = vmatpush1.bf16.msra.mxu0 %v4159
    %4196 = vmatprep.subr.bf16.mxu0 0
    %4197 = vmatpush1.bf16.msra.mxu0 %v4160
    %4198 = vmatprep.subr.bf16.mxu0 0
    %4199 = vmatpush1.bf16.msra.mxu0 %v4161
    %4200 = vmatprep.subr.bf16.mxu0 0
    %4201 = vmatpush1.bf16.msra.mxu0 %v4162
    %4202 = vmatprep.subr.bf16.mxu0 0
    %4203 = vmatpush1.bf16.msra.mxu0 %v4163
    %4204 = vmatprep.subr.bf16.mxu0 0
    %4205 = vmatpush1.bf16.msra.mxu0 %v4164
    %4206 = vmatprep.subr.bf16.mxu0 0
    %4207 = vmatpush1.bf16.msra.mxu0 %v4165
    %4208 = vmatprep.subr.bf16.mxu0 0
    %4209 = vmatpush1.bf16.msra.mxu0 %v4166
    %4210 = vmatprep.subr.bf16.mxu0 0
    %4211 = vmatpush1.bf16.msra.mxu0 %v4167
    %4212 = vmatprep.subr.bf16.mxu0 0
    %4213 = vmatpush1.bf16.msra.mxu0 %v4168
    %4214 = vmatprep.subr.bf16.mxu0 0
    %4215 = vmatpush1.bf16.msra.mxu0 %v4169
    %4216 = vmatprep.subr.bf16.mxu0 0
    %4217 = vmatpush1.bf16.msra.mxu0 %v4170
    %4218 = vmatprep.subr.bf16.mxu0 0
    %4219 = vmatpush1.bf16.msra.mxu0 %v4171
    %4220 = vmatprep.mubr.bf16.mxu0 %v4052
    %4221 = vmatmul.mubr.bf16.gmra.mrb[0].mxu0 %v4051
    %v4222 = vpop.f32.mrb[0].mxu0
    %v4223 = vadd.f32 %v4090, %v4222
    %v4224 = vpop.f32.mrb[0].mxu0
    %v4225 = vpop.f32.mrb[0].mxu0
    %v4226 = vpop.f32.mrb[0].mxu0
    %4227 = vdwg.mxu0
    %vm4228 = vcmask 1041408
    %v4229 = vsel %vm4228, %v4223, -inf
    %4230 = vmax.xlane.f32.xlu0 %v4229
    %v4231 = vpop.xlane.xlu0 %4230
    %v4232 = vsub.f32 %v4223, %v4231
    %v4233 = vmul.f32 %v4232, 1.442695
    %v4234 = vpow.pop %v4233
    %v4235 = vsel %vm4228, %v4234, 0.0
    %4236 = vadd.xlane.f32.xlu0 %v4235
    %v4237 = vpop.xlane.xlu0 %4236
    %v4238 = vrcp.pop %v4237
    %v4239 = vmul.f32 %v4234, %v4238
    %4240 = vst [vmem:[#allocation10] sm:$0x3] %v4239
    // Predicated region
    $region38: #{actor_forward.3} parent=1 // pred_check
      _
    $region39: #{actor_forward.3} parent=1 // pred_check_branch
      %4242 = sbr.rel (0) target = $region41
    $region40: #{actor_forward.3} parent=1 // pred_region
      %s4244 = ssub.s32 32, 32
      %4245 = vsyncadd [#allocation4], %s4244
      %s4247 = sshll.u32 [#allocation10], 4
      %s4248 = int_to_ptr.vmem [resolvable:$true] %s4247
      %4250 = dma.vmem_to_hbm [thread:$0]  %s4248, 32, %s5, [#allocation4]
    $region41: #{actor_forward.3} parent=1 // pred_fallthru
      _
    // Predicated region
    $region42: #{actor_forward.3} parent=1 // pred_check
      _
    $region43: #{actor_forward.3} parent=1 // pred_check_branch
      %4252 = sbr.rel (0) target = $region45
    $region44: #{actor_forward.3} parent=1 // pred_region
      %4253 = dma.done [#allocation4], 32
    $region45: #{actor_forward.3} parent=1 // pred_fallthru
      _
    %4254 = vsyncpa [#allocation3], 1
    %4255 = vsyncpa [#allocation6], 1
    %4256 = vsyncpa [#allocation9], 1
    %4257 = vsyncpa [#allocation4], 1

</llo_original>
